<compile_context>
chip_gen: v6e
topology: v6e:2x2x1
jax: 0.10.0
libtpu: 0.0.40
codegen_flags: <defaults>
</compile_context>

<pallas_src>
import functools

import jax
import jax.numpy as jnp
from jax.experimental import pallas as pl
from jax.experimental.pallas import tpu as pltpu


# (in_features, out_features) of layer1..layer12
LAYER_DIMS = [
    (3, 768), (768, 384), (384, 192), (192, 96), (96, 48), (48, 2),
    (2, 48), (48, 96), (96, 192), (192, 384), (384, 768), (768, 3),
]

# 0-based indices of layers whose pre-ReLU sign pattern is recorded.
SIGN_LAYERS = (0, 1, 2, 3, 4, 6, 7, 8, 9, 10)
NEURAL_COUNT = sum(LAYER_DIMS[i][1] for i in SIGN_LAYERS)          # 2976

# Layers with tiny contraction depth (K<=4): broadcast-FMA on the VPU instead
# of paying an MXU push/pop round trip.
VPU_LAYERS = tuple(i for i, (k, _) in enumerate(LAYER_DIMS) if k <= 4)   # (0, 6)


def _round_up(n, m):
    return (n + m - 1) // m * m


# Sign slab layout: every per-layer block starts at a 128-aligned lane offset
# (per-layer widths rounded up to 128 multiples for layout only).  Pad lanes
# are write-only and are dropped in the wrapper.
SIGN_OFFSETS = {}
_off = 0
for _i in SIGN_LAYERS:
    SIGN_OFFSETS[_i] = _off
    _off += _round_up(LAYER_DIMS[_i][1], 128)
SIGN_PAD_WIDTH = _off                                               # 3328
del _off, _i


def _ae_kernel(x_ref, *refs):
    """refs = (w1, b1, ..., w12, b12, x_out_ref, z_out_ref, sign_out_ref)."""
    params = refs[:24]
    xo_ref, z_ref, s_ref = refs[24], refs[25], refs[26]

    h = x_ref[...]                                   # [TB, 3] f32
    for i in range(12):
        w = params[2 * i][...]                       # [in_i, out_i]
        b = params[2 * i + 1][...]                   # [1, out_i] f32

        if i in VPU_LAYERS:
            # K = 2 or 3: broadcast-FMA on the VPU (f32 weights/activations).
            k_in = LAYER_DIMS[i][0]
            out = h[:, 0:1] * w[0:1, :] + b
            for k in range(1, k_in):
                out = out + h[:, k:k + 1] * w[k:k + 1, :]
            h = out
        else:
            # MXU: bf16 operands, f32 accumulation.  h already arrives as bf16
            # when it came out of a previous sign/ReLU epilogue.
            lhs = h if h.dtype == jnp.bfloat16 else h.astype(jnp.bfloat16)
            h = jnp.dot(lhs, w, preferred_element_type=jnp.float32) + b

        if i == 5:                                   # latent z (no ReLU)
            z_ref[...] = h

        if i in SIGN_LAYERS:
            mask = h >= 0.0                          # == bool(sign(h)+1) exactly
            off = SIGN_OFFSETS[i]
            width = LAYER_DIMS[i][1]
            # 128-aligned lane offset -> plain (masked-tail) int8 store.
            s_ref[:, off:off + width] = mask.astype(jnp.int8)
            # ReLU reusing the sign mask; carry ONE bf16 activation to the next
            # MXU layer (identical numerics to casting at the next dot).
            h = jnp.where(mask, h, 0.0).astype(jnp.bfloat16)

    xo_ref[...] = h                                  # layer12 output (f32)


def _pick_block_b(batch):
    """Batch tile: <= 512 rows, multiple of 32 (int8 (32,128) tiles), and at
    most ceil(batch/2) so the grid has >= 2 steps whenever batch > 32 (keeps
    both v7x TensorCores busy via the "parallel" batch axis)."""
    half = -(-batch // 2)
    return max(32, min(512, _round_up(half, 32)))


@functools.partial(jax.jit, static_argnames=("block_b",))
def autoencoder_forward(x, params, *, block_b=None):
    """x: [B, 3] f32.  params: list of 12 (W_t [in, out], b [1, out]) pairs.

    Returns (x_out [B,3] f32, z [B,2] f32, ss [B,2976] bool).  The MXU layers
    run in bf16 with f32 accumulation, so a vanishing fraction of sign bits for
    pre-activations ~0 may differ from a pure-f32 reference.
    """
    B = x.shape[0]
    if block_b is None:
        block_b = _pick_block_b(B)
    block_b = max(32, _round_up(block_b, 32))
    b_pad = _round_up(B, block_b)
    if b_pad != B:
        x = jnp.pad(x, ((0, b_pad - B), (0, 0)))

    flat = []
    in_specs = [pl.BlockSpec((block_b, 3), lambda i: (i, 0))]
    for li, (w, b) in enumerate(params):
        if li not in VPU_LAYERS:
            w = w.astype(jnp.bfloat16)   # bf16 MXU operands, halves weight VMEM
        flat.extend([w, b])
        # Full-array blocks + constant index maps: weights/biases are DMA'd
        # once and stay VMEM-resident across all batch grid steps.
        in_specs.append(pl.BlockSpec(w.shape, lambda i: (0, 0)))
        in_specs.append(pl.BlockSpec(b.shape, lambda i: (0, 0)))

    grid = (b_pad // block_b,)
    out_shape = (
        jax.ShapeDtypeStruct((b_pad, 3), jnp.float32),               # x_out
        jax.ShapeDtypeStruct((b_pad, 2), jnp.float32),               # z
        jax.ShapeDtypeStruct((b_pad, SIGN_PAD_WIDTH), jnp.int8),     # sign slab
    )
    out_specs = (
        pl.BlockSpec((block_b, 3), lambda i: (i, 0)),
        pl.BlockSpec((block_b, 2), lambda i: (i, 0)),
        pl.BlockSpec((block_b, SIGN_PAD_WIDTH), lambda i: (i, 0)),
    )

    x_out_p, z_p, s_pad = pl.pallas_call(
        _ae_kernel,
        out_shape=out_shape,
        grid=grid,
        in_specs=in_specs,
        out_specs=out_specs,
        compiler_params=pltpu.CompilerParams(
            dimension_semantics=("parallel",),        # megacore batch sharding
            vmem_limit_bytes=48 * 1024 * 1024,        # fits v5e/v6e/v7x
        ),
    )(x, *flat)

    x_out = x_out_p[:B]
    z = z_p[:B]
    # Repack the aligned slab into the torch column order + bool.  Consumers
    # that want to skip this extra HBM pass can take (s_pad, SIGN_OFFSETS).
    ss = jnp.concatenate(
        [s_pad[:B, SIGN_OFFSETS[i]:SIGN_OFFSETS[i] + LAYER_DIMS[i][1]]
         for i in SIGN_LAYERS], axis=1).astype(jnp.bool_)
    return x_out, z, ss


def init_params(key):
    """Deterministic PyTorch-style Linear init: U(-1/sqrt(in), 1/sqrt(in))."""
    params = []
    for (fan_in, fan_out) in LAYER_DIMS:
        key, kw, kb = jax.random.split(key, 3)
        bound = 1.0 / (fan_in ** 0.5)
        w_t = jax.random.uniform(kw, (fan_in, fan_out), jnp.float32,
                                 minval=-bound, maxval=bound)   # stored [in, out]
        b = jax.random.uniform(kb, (1, fan_out), jnp.float32,
                               minval=-bound, maxval=bound)
        params.append((w_t, b))
    return params


def _reference(x, params):
    """Plain-JAX mirror of the kernel's numerics (bf16 MXU dots, f32 rest)."""
    h = x
    signs = []
    z = None
    for i, (w, b) in enumerate(params):
        if i in VPU_LAYERS:
            k_in = LAYER_DIMS[i][0]
            out = h[:, 0:1] * w[0:1, :] + b
            for k in range(1, k_in):
                out = out + h[:, k:k + 1] * w[k:k + 1, :]
            h = out
        else:
            h = jnp.dot(h.astype(jnp.bfloat16), w.astype(jnp.bfloat16),
                        preferred_element_type=jnp.float32) + b
        if i == 5:
            z = h
        if i in SIGN_LAYERS:
            m = h >= 0.0
            signs.append(m)
            h = jnp.where(m, h, 0.0)
    return h, z, jnp.concatenate(signs, axis=1)


if __name__ == "__main__":
    key = jax.random.PRNGKey(0)
    key, kx = jax.random.split(key)

    B = 50                                    # small; not a multiple of the tile
    x = jax.random.normal(kx, (B, 3), jnp.float32)
    params = init_params(key)

    # Default tile selection -> block_b=32, batch padded to 64, grid=(2,):
    # exercises padding, the >=2-step grid and weight residency across steps.
    x_out, z, ss = autoencoder_forward(x, params)
    jax.block_until_ready((x_out, z, ss))

    x_ref, z_ref, ss_ref = _reference(x, params)

    assert x_out.shape == (B, 3) and z.shape == (B, 2)
    assert ss.shape == (B, NEURAL_COUNT) and ss.dtype == jnp.bool_
    assert jnp.allclose(x_out, x_ref, atol=5e-3, rtol=5e-2), \
        float(jnp.max(jnp.abs(x_out - x_ref)))
    assert jnp.allclose(z, z_ref, atol=5e-3, rtol=5e-2), \
        float(jnp.max(jnp.abs(z - z_ref)))
    # Pre-ReLU signs: allow a vanishing fraction of flips from f32-accumulation
    # order differences between the Pallas MXU dots and the XLA reference dots.
    mismatch = float(jnp.mean((ss != ss_ref).astype(jnp.float32)))
    assert mismatch < 2e-3, mismatch

    print("KERNEL_OK")
</pallas_src>

<mosaic_0001>
module attributes {stable_mosaic.version = 11 : i64} {
  func.func @_ae_kernel(%arg0: i32, %arg1: memref<32x3xf32, #tpu.memory_space<vmem>>, %arg2: memref<3x768xf32, #tpu.memory_space<vmem>>, %arg3: memref<1x768xf32, #tpu.memory_space<vmem>>, %arg4: memref<768x384xbf16, #tpu.memory_space<vmem>>, %arg5: memref<1x384xf32, #tpu.memory_space<vmem>>, %arg6: memref<384x192xbf16, #tpu.memory_space<vmem>>, %arg7: memref<1x192xf32, #tpu.memory_space<vmem>>, %arg8: memref<192x96xbf16, #tpu.memory_space<vmem>>, %arg9: memref<1x96xf32, #tpu.memory_space<vmem>>, %arg10: memref<96x48xbf16, #tpu.memory_space<vmem>>, %arg11: memref<1x48xf32, #tpu.memory_space<vmem>>, %arg12: memref<48x2xbf16, #tpu.memory_space<vmem>>, %arg13: memref<1x2xf32, #tpu.memory_space<vmem>>, %arg14: memref<2x48xf32, #tpu.memory_space<vmem>>, %arg15: memref<1x48xf32, #tpu.memory_space<vmem>>, %arg16: memref<48x96xbf16, #tpu.memory_space<vmem>>, %arg17: memref<1x96xf32, #tpu.memory_space<vmem>>, %arg18: memref<96x192xbf16, #tpu.memory_space<vmem>>, %arg19: memref<1x192xf32, #tpu.memory_space<vmem>>, %arg20: memref<192x384xbf16, #tpu.memory_space<vmem>>, %arg21: memref<1x384xf32, #tpu.memory_space<vmem>>, %arg22: memref<384x768xbf16, #tpu.memory_space<vmem>>, %arg23: memref<1x768xf32, #tpu.memory_space<vmem>>, %arg24: memref<768x3xbf16, #tpu.memory_space<vmem>>, %arg25: memref<1x3xf32, #tpu.memory_space<vmem>>, %arg26: memref<32x3xf32, #tpu.memory_space<vmem>>, %arg27: memref<32x2xf32, #tpu.memory_space<vmem>>, %arg28: memref<32x3328xi8, #tpu.memory_space<vmem>>) attributes {dimension_semantics = [#tpu.dimension_semantics<parallel>], iteration_bounds = array<i64: 2>, scalar_prefetch = 0 : i64, scratch_operands = 0 : i64, tpu.core_type = #tpu.core_type<tc>, window_params = [{transform_indices = @transform_0, window_bounds = array<i64: 32, 3>}, {pipeline_mode = #tpu.pipeline_mode<synchronous>, transform_indices = @transform_1, window_bounds = array<i64: 3, 768>}, {pipeline_mode = #tpu.pipeline_mode<synchronous>, transform_indices = @transform_2, window_bounds = array<i64: 1, 768>}, {pipeline_mode = #tpu.pipeline_mode<synchronous>, transform_indices = @transform_3, window_bounds = array<i64: 768, 384>}, {pipeline_mode = #tpu.pipeline_mode<synchronous>, transform_indices = @transform_4, window_bounds = array<i64: 1, 384>}, {pipeline_mode = #tpu.pipeline_mode<synchronous>, transform_indices = @transform_5, window_bounds = array<i64: 384, 192>}, {pipeline_mode = #tpu.pipeline_mode<synchronous>, transform_indices = @transform_6, window_bounds = array<i64: 1, 192>}, {pipeline_mode = #tpu.pipeline_mode<synchronous>, transform_indices = @transform_7, window_bounds = array<i64: 192, 96>}, {pipeline_mode = #tpu.pipeline_mode<synchronous>, transform_indices = @transform_8, window_bounds = array<i64: 1, 96>}, {pipeline_mode = #tpu.pipeline_mode<synchronous>, transform_indices = @transform_9, window_bounds = array<i64: 96, 48>}, {pipeline_mode = #tpu.pipeline_mode<synchronous>, transform_indices = @transform_10, window_bounds = array<i64: 1, 48>}, {pipeline_mode = #tpu.pipeline_mode<synchronous>, transform_indices = @transform_11, window_bounds = array<i64: 48, 2>}, {pipeline_mode = #tpu.pipeline_mode<synchronous>, transform_indices = @transform_12, window_bounds = array<i64: 1, 2>}, {pipeline_mode = #tpu.pipeline_mode<synchronous>, transform_indices = @transform_13, window_bounds = array<i64: 2, 48>}, {pipeline_mode = #tpu.pipeline_mode<synchronous>, transform_indices = @transform_14, window_bounds = array<i64: 1, 48>}, {pipeline_mode = #tpu.pipeline_mode<synchronous>, transform_indices = @transform_15, window_bounds = array<i64: 48, 96>}, {pipeline_mode = #tpu.pipeline_mode<synchronous>, transform_indices = @transform_16, window_bounds = array<i64: 1, 96>}, {pipeline_mode = #tpu.pipeline_mode<synchronous>, transform_indices = @transform_17, window_bounds = array<i64: 96, 192>}, {pipeline_mode = #tpu.pipeline_mode<synchronous>, transform_indices = @transform_18, window_bounds = array<i64: 1, 192>}, {pipeline_mode = #tpu.pipeline_mode<synchronous>, transform_indices = @transform_19, window_bounds = array<i64: 192, 384>}, {pipeline_mode = #tpu.pipeline_mode<synchronous>, transform_indices = @transform_20, window_bounds = array<i64: 1, 384>}, {pipeline_mode = #tpu.pipeline_mode<synchronous>, transform_indices = @transform_21, window_bounds = array<i64: 384, 768>}, {pipeline_mode = #tpu.pipeline_mode<synchronous>, transform_indices = @transform_22, window_bounds = array<i64: 1, 768>}, {pipeline_mode = #tpu.pipeline_mode<synchronous>, transform_indices = @transform_23, window_bounds = array<i64: 768, 3>}, {pipeline_mode = #tpu.pipeline_mode<synchronous>, transform_indices = @transform_24, window_bounds = array<i64: 1, 3>}, {transform_indices = @transform_25, window_bounds = array<i64: 32, 3>}, {transform_indices = @transform_26, window_bounds = array<i64: 32, 2>}, {transform_indices = @transform_27, window_bounds = array<i64: 32, 3328>}]} {
    %c0 = arith.constant 0 : index
    %c0_0 = arith.constant 0 : index
    %0 = vector.load %arg1[%c0, %c0_0] : memref<32x3xf32, #tpu.memory_space<vmem>>, vector<32x3xf32>
    %c0_1 = arith.constant 0 : index
    %c0_2 = arith.constant 0 : index
    %1 = vector.load %arg2[%c0_1, %c0_2] : memref<3x768xf32, #tpu.memory_space<vmem>>, vector<3x768xf32>
    %c0_3 = arith.constant 0 : index
    %c0_4 = arith.constant 0 : index
    %2 = vector.load %arg3[%c0_3, %c0_4] : memref<1x768xf32, #tpu.memory_space<vmem>>, vector<1x768xf32>
    %3 = vector.extract_strided_slice %0 {offsets = [0, 0], sizes = [32, 1], strides = [1, 1]} : vector<32x3xf32> to vector<32x1xf32>
    %4 = vector.extract_strided_slice %1 {offsets = [0, 0], sizes = [1, 768], strides = [1, 1]} : vector<3x768xf32> to vector<1x768xf32>
    %5 = vector.broadcast %3 : vector<32x1xf32> to vector<32x768xf32>
    %6 = vector.broadcast %4 : vector<1x768xf32> to vector<32x768xf32>
    %7 = arith.mulf %5, %6 : vector<32x768xf32>
    %8 = vector.broadcast %2 : vector<1x768xf32> to vector<32x768xf32>
    %9 = arith.addf %7, %8 : vector<32x768xf32>
    %10 = vector.extract_strided_slice %0 {offsets = [0, 1], sizes = [32, 1], strides = [1, 1]} : vector<32x3xf32> to vector<32x1xf32>
    %11 = vector.extract_strided_slice %1 {offsets = [1, 0], sizes = [1, 768], strides = [1, 1]} : vector<3x768xf32> to vector<1x768xf32>
    %12 = vector.broadcast %10 : vector<32x1xf32> to vector<32x768xf32>
    %13 = vector.broadcast %11 : vector<1x768xf32> to vector<32x768xf32>
    %14 = arith.mulf %12, %13 : vector<32x768xf32>
    %15 = arith.addf %9, %14 : vector<32x768xf32>
    %16 = vector.extract_strided_slice %0 {offsets = [0, 2], sizes = [32, 1], strides = [1, 1]} : vector<32x3xf32> to vector<32x1xf32>
    %17 = vector.extract_strided_slice %1 {offsets = [2, 0], sizes = [1, 768], strides = [1, 1]} : vector<3x768xf32> to vector<1x768xf32>
    %18 = vector.broadcast %16 : vector<32x1xf32> to vector<32x768xf32>
    %19 = vector.broadcast %17 : vector<1x768xf32> to vector<32x768xf32>
    %20 = arith.mulf %18, %19 : vector<32x768xf32>
    %21 = arith.addf %15, %20 : vector<32x768xf32>
    %cst = arith.constant 0.000000e+00 : f32
    %22 = vector.broadcast %cst : f32 to vector<32x768xf32>
    %23 = arith.cmpf oge, %21, %22 : vector<32x768xf32>
    %24 = arith.extui %23 : vector<32x768xi1> to vector<32x768xi8>
    %c0_5 = arith.constant 0 : index
    %c0_6 = arith.constant 0 : index
    %25 = vector.load %arg28[%c0_5, %c0_6] : memref<32x3328xi8, #tpu.memory_space<vmem>>, vector<32x768xi8>
    tpu.vector_store %arg28[%c0_5, %c0_6], %24 {strides = array<i32>} : memref<32x3328xi8, #tpu.memory_space<vmem>>, vector<32x768xi8>,
    %cst_7 = arith.constant 0.000000e+00 : f32
    %26 = vector.broadcast %cst_7 : f32 to vector<32x768xf32>
    %27 = arith.select %23, %21, %26 : vector<32x768xi1>, vector<32x768xf32>
    %28 = arith.truncf %27 : vector<32x768xf32> to vector<32x768xbf16>
    %c0_8 = arith.constant 0 : index
    %c0_9 = arith.constant 0 : index
    %29 = vector.load %arg4[%c0_8, %c0_9] : memref<768x384xbf16, #tpu.memory_space<vmem>>, vector<768x384xbf16>
    %c0_10 = arith.constant 0 : index
    %c0_11 = arith.constant 0 : index
    %30 = vector.load %arg5[%c0_10, %c0_11] : memref<1x384xf32, #tpu.memory_space<vmem>>, vector<1x384xf32>
    %cst_12 = arith.constant dense<0.000000e+00> : vector<32x384xf32>
    %31 = tpu.matmul %28, %29, %cst_12 {dimension_numbers = #tpu.dot_dimension_numbers<[1], [0], [0], [1], [0, 0, 1, 1], [], []>} : vector<32x768xbf16>, vector<768x384xbf16>, vector<32x384xf32> -> vector<32x384xf32>
    %32 = vector.broadcast %30 : vector<1x384xf32> to vector<32x384xf32>
    %33 = arith.addf %31, %32 : vector<32x384xf32>
    %cst_13 = arith.constant 0.000000e+00 : f32
    %34 = vector.broadcast %cst_13 : f32 to vector<32x384xf32>
    %35 = arith.cmpf oge, %33, %34 : vector<32x384xf32>
    %36 = arith.extui %35 : vector<32x384xi1> to vector<32x384xi8>
    %c0_14 = arith.constant 0 : index
    %c768 = arith.constant 768 : index
    %37 = vector.load %arg28[%c0_14, %c768] : memref<32x3328xi8, #tpu.memory_space<vmem>>, vector<32x384xi8>
    tpu.vector_store %arg28[%c0_14, %c768], %36 {strides = array<i32>} : memref<32x3328xi8, #tpu.memory_space<vmem>>, vector<32x384xi8>,
    %cst_15 = arith.constant 0.000000e+00 : f32
    %38 = vector.broadcast %cst_15 : f32 to vector<32x384xf32>
    %39 = arith.select %35, %33, %38 : vector<32x384xi1>, vector<32x384xf32>
    %40 = arith.truncf %39 : vector<32x384xf32> to vector<32x384xbf16>
    %c0_16 = arith.constant 0 : index
    %c0_17 = arith.constant 0 : index
    %41 = vector.load %arg6[%c0_16, %c0_17] : memref<384x192xbf16, #tpu.memory_space<vmem>>, vector<384x192xbf16>
    %c0_18 = arith.constant 0 : index
    %c0_19 = arith.constant 0 : index
    %42 = vector.load %arg7[%c0_18, %c0_19] : memref<1x192xf32, #tpu.memory_space<vmem>>, vector<1x192xf32>
    %cst_20 = arith.constant dense<0.000000e+00> : vector<32x192xf32>
    %43 = tpu.matmul %40, %41, %cst_20 {dimension_numbers = #tpu.dot_dimension_numbers<[1], [0], [0], [1], [0, 0, 1, 1], [], []>} : vector<32x384xbf16>, vector<384x192xbf16>, vector<32x192xf32> -> vector<32x192xf32>
    %44 = vector.broadcast %42 : vector<1x192xf32> to vector<32x192xf32>
    %45 = arith.addf %43, %44 : vector<32x192xf32>
    %cst_21 = arith.constant 0.000000e+00 : f32
    %46 = vector.broadcast %cst_21 : f32 to vector<32x192xf32>
    %47 = arith.cmpf oge, %45, %46 : vector<32x192xf32>
    %48 = arith.extui %47 : vector<32x192xi1> to vector<32x192xi8>
    %c0_22 = arith.constant 0 : index
    %c1152 = arith.constant 1152 : index
    %49 = vector.load %arg28[%c0_22, %c1152] : memref<32x3328xi8, #tpu.memory_space<vmem>>, vector<32x192xi8>
    tpu.vector_store %arg28[%c0_22, %c1152], %48 {strides = array<i32>} : memref<32x3328xi8, #tpu.memory_space<vmem>>, vector<32x192xi8>,
    %cst_23 = arith.constant 0.000000e+00 : f32
    %50 = vector.broadcast %cst_23 : f32 to vector<32x192xf32>
    %51 = arith.select %47, %45, %50 : vector<32x192xi1>, vector<32x192xf32>
    %52 = arith.truncf %51 : vector<32x192xf32> to vector<32x192xbf16>
    %c0_24 = arith.constant 0 : index
    %c0_25 = arith.constant 0 : index
    %53 = vector.load %arg8[%c0_24, %c0_25] : memref<192x96xbf16, #tpu.memory_space<vmem>>, vector<192x96xbf16>
    %c0_26 = arith.constant 0 : index
    %c0_27 = arith.constant 0 : index
    %54 = vector.load %arg9[%c0_26, %c0_27] : memref<1x96xf32, #tpu.memory_space<vmem>>, vector<1x96xf32>
    %cst_28 = arith.constant dense<0.000000e+00> : vector<32x96xf32>
    %55 = tpu.matmul %52, %53, %cst_28 {dimension_numbers = #tpu.dot_dimension_numbers<[1], [0], [0], [1], [0, 0, 1, 1], [], []>} : vector<32x192xbf16>, vector<192x96xbf16>, vector<32x96xf32> -> vector<32x96xf32>
    %56 = vector.broadcast %54 : vector<1x96xf32> to vector<32x96xf32>
    %57 = arith.addf %55, %56 : vector<32x96xf32>
    %cst_29 = arith.constant 0.000000e+00 : f32
    %58 = vector.broadcast %cst_29 : f32 to vector<32x96xf32>
    %59 = arith.cmpf oge, %57, %58 : vector<32x96xf32>
    %60 = arith.extui %59 : vector<32x96xi1> to vector<32x96xi8>
    %c0_30 = arith.constant 0 : index
    %c1408 = arith.constant 1408 : index
    %61 = vector.load %arg28[%c0_30, %c1408] : memref<32x3328xi8, #tpu.memory_space<vmem>>, vector<32x96xi8>
    tpu.vector_store %arg28[%c0_30, %c1408], %60 {strides = array<i32>} : memref<32x3328xi8, #tpu.memory_space<vmem>>, vector<32x96xi8>,
    %cst_31 = arith.constant 0.000000e+00 : f32
    %62 = vector.broadcast %cst_31 : f32 to vector<32x96xf32>
    %63 = arith.select %59, %57, %62 : vector<32x96xi1>, vector<32x96xf32>
    %64 = arith.truncf %63 : vector<32x96xf32> to vector<32x96xbf16>
    %c0_32 = arith.constant 0 : index
    %c0_33 = arith.constant 0 : index
    %65 = vector.load %arg10[%c0_32, %c0_33] : memref<96x48xbf16, #tpu.memory_space<vmem>>, vector<96x48xbf16>
    %c0_34 = arith.constant 0 : index
    %c0_35 = arith.constant 0 : index
    %66 = vector.load %arg11[%c0_34, %c0_35] : memref<1x48xf32, #tpu.memory_space<vmem>>, vector<1x48xf32>
    %cst_36 = arith.constant dense<0.000000e+00> : vector<32x48xf32>
    %67 = tpu.matmul %64, %65, %cst_36 {dimension_numbers = #tpu.dot_dimension_numbers<[1], [0], [0], [1], [0, 0, 1, 1], [], []>} : vector<32x96xbf16>, vector<96x48xbf16>, vector<32x48xf32> -> vector<32x48xf32>
    %68 = vector.broadcast %66 : vector<1x48xf32> to vector<32x48xf32>
    %69 = arith.addf %67, %68 : vector<32x48xf32>
    %cst_37 = arith.constant 0.000000e+00 : f32
    %70 = vector.broadcast %cst_37 : f32 to vector<32x48xf32>
    %71 = arith.cmpf oge, %69, %70 : vector<32x48xf32>
    %72 = arith.extui %71 : vector<32x48xi1> to vector<32x48xi8>
    %c0_38 = arith.constant 0 : index
    %c1536 = arith.constant 1536 : index
    %73 = vector.load %arg28[%c0_38, %c1536] : memref<32x3328xi8, #tpu.memory_space<vmem>>, vector<32x48xi8>
    tpu.vector_store %arg28[%c0_38, %c1536], %72 {strides = array<i32>} : memref<32x3328xi8, #tpu.memory_space<vmem>>, vector<32x48xi8>,
    %cst_39 = arith.constant 0.000000e+00 : f32
    %74 = vector.broadcast %cst_39 : f32 to vector<32x48xf32>
    %75 = arith.select %71, %69, %74 : vector<32x48xi1>, vector<32x48xf32>
    %76 = arith.truncf %75 : vector<32x48xf32> to vector<32x48xbf16>
    %c0_40 = arith.constant 0 : index
    %c0_41 = arith.constant 0 : index
    %77 = vector.load %arg12[%c0_40, %c0_41] : memref<48x2xbf16, #tpu.memory_space<vmem>>, vector<48x2xbf16>
    %c0_42 = arith.constant 0 : index
    %c0_43 = arith.constant 0 : index
    %78 = vector.load %arg13[%c0_42, %c0_43] : memref<1x2xf32, #tpu.memory_space<vmem>>, vector<1x2xf32>
    %cst_44 = arith.constant dense<0.000000e+00> : vector<32x2xf32>
    %79 = tpu.matmul %76, %77, %cst_44 {dimension_numbers = #tpu.dot_dimension_numbers<[1], [0], [0], [1], [0, 0, 1, 1], [], []>} : vector<32x48xbf16>, vector<48x2xbf16>, vector<32x2xf32> -> vector<32x2xf32>
    %80 = vector.broadcast %78 : vector<1x2xf32> to vector<32x2xf32>
    %81 = arith.addf %79, %80 : vector<32x2xf32>
    %c0_45 = arith.constant 0 : index
    %c0_46 = arith.constant 0 : index
    %82 = vector.load %arg27[%c0_45, %c0_46] : memref<32x2xf32, #tpu.memory_space<vmem>>, vector<32x2xf32>
    tpu.vector_store %arg27[%c0_45, %c0_46], %81 {strides = array<i32>} : memref<32x2xf32, #tpu.memory_space<vmem>>, vector<32x2xf32>,
    %c0_47 = arith.constant 0 : index
    %c0_48 = arith.constant 0 : index
    %83 = vector.load %arg14[%c0_47, %c0_48] : memref<2x48xf32, #tpu.memory_space<vmem>>, vector<2x48xf32>
    %c0_49 = arith.constant 0 : index
    %c0_50 = arith.constant 0 : index
    %84 = vector.load %arg15[%c0_49, %c0_50] : memref<1x48xf32, #tpu.memory_space<vmem>>, vector<1x48xf32>
    %85 = vector.extract_strided_slice %81 {offsets = [0, 0], sizes = [32, 1], strides = [1, 1]} : vector<32x2xf32> to vector<32x1xf32>
    %86 = vector.extract_strided_slice %83 {offsets = [0, 0], sizes = [1, 48], strides = [1, 1]} : vector<2x48xf32> to vector<1x48xf32>
    %87 = vector.broadcast %85 : vector<32x1xf32> to vector<32x48xf32>
    %88 = vector.broadcast %86 : vector<1x48xf32> to vector<32x48xf32>
    %89 = arith.mulf %87, %88 : vector<32x48xf32>
    %90 = vector.broadcast %84 : vector<1x48xf32> to vector<32x48xf32>
    %91 = arith.addf %89, %90 : vector<32x48xf32>
    %92 = vector.extract_strided_slice %81 {offsets = [0, 1], sizes = [32, 1], strides = [1, 1]} : vector<32x2xf32> to vector<32x1xf32>
    %93 = vector.extract_strided_slice %83 {offsets = [1, 0], sizes = [1, 48], strides = [1, 1]} : vector<2x48xf32> to vector<1x48xf32>
    %94 = vector.broadcast %92 : vector<32x1xf32> to vector<32x48xf32>
    %95 = vector.broadcast %93 : vector<1x48xf32> to vector<32x48xf32>
    %96 = arith.mulf %94, %95 : vector<32x48xf32>
    %97 = arith.addf %91, %96 : vector<32x48xf32>
    %cst_51 = arith.constant 0.000000e+00 : f32
    %98 = vector.broadcast %cst_51 : f32 to vector<32x48xf32>
    %99 = arith.cmpf oge, %97, %98 : vector<32x48xf32>
    %100 = arith.extui %99 : vector<32x48xi1> to vector<32x48xi8>
    %c0_52 = arith.constant 0 : index
    %c1664 = arith.constant 1664 : index
    %101 = vector.load %arg28[%c0_52, %c1664] : memref<32x3328xi8, #tpu.memory_space<vmem>>, vector<32x48xi8>
    tpu.vector_store %arg28[%c0_52, %c1664], %100 {strides = array<i32>} : memref<32x3328xi8, #tpu.memory_space<vmem>>, vector<32x48xi8>,
    %cst_53 = arith.constant 0.000000e+00 : f32
    %102 = vector.broadcast %cst_53 : f32 to vector<32x48xf32>
    %103 = arith.select %99, %97, %102 : vector<32x48xi1>, vector<32x48xf32>
    %104 = arith.truncf %103 : vector<32x48xf32> to vector<32x48xbf16>
    %c0_54 = arith.constant 0 : index
    %c0_55 = arith.constant 0 : index
    %105 = vector.load %arg16[%c0_54, %c0_55] : memref<48x96xbf16, #tpu.memory_space<vmem>>, vector<48x96xbf16>
    %c0_56 = arith.constant 0 : index
    %c0_57 = arith.constant 0 : index
    %106 = vector.load %arg17[%c0_56, %c0_57] : memref<1x96xf32, #tpu.memory_space<vmem>>, vector<1x96xf32>
    %cst_58 = arith.constant dense<0.000000e+00> : vector<32x96xf32>
    %107 = tpu.matmul %104, %105, %cst_58 {dimension_numbers = #tpu.dot_dimension_numbers<[1], [0], [0], [1], [0, 0, 1, 1], [], []>} : vector<32x48xbf16>, vector<48x96xbf16>, vector<32x96xf32> -> vector<32x96xf32>
    %108 = vector.broadcast %106 : vector<1x96xf32> to vector<32x96xf32>
    %109 = arith.addf %107, %108 : vector<32x96xf32>
    %cst_59 = arith.constant 0.000000e+00 : f32
    %110 = vector.broadcast %cst_59 : f32 to vector<32x96xf32>
    %111 = arith.cmpf oge, %109, %110 : vector<32x96xf32>
    %112 = arith.extui %111 : vector<32x96xi1> to vector<32x96xi8>
    %c0_60 = arith.constant 0 : index
    %c1792 = arith.constant 1792 : index
    %113 = vector.load %arg28[%c0_60, %c1792] : memref<32x3328xi8, #tpu.memory_space<vmem>>, vector<32x96xi8>
    tpu.vector_store %arg28[%c0_60, %c1792], %112 {strides = array<i32>} : memref<32x3328xi8, #tpu.memory_space<vmem>>, vector<32x96xi8>,
    %cst_61 = arith.constant 0.000000e+00 : f32
    %114 = vector.broadcast %cst_61 : f32 to vector<32x96xf32>
    %115 = arith.select %111, %109, %114 : vector<32x96xi1>, vector<32x96xf32>
    %116 = arith.truncf %115 : vector<32x96xf32> to vector<32x96xbf16>
    %c0_62 = arith.constant 0 : index
    %c0_63 = arith.constant 0 : index
    %117 = vector.load %arg18[%c0_62, %c0_63] : memref<96x192xbf16, #tpu.memory_space<vmem>>, vector<96x192xbf16>
    %c0_64 = arith.constant 0 : index
    %c0_65 = arith.constant 0 : index
    %118 = vector.load %arg19[%c0_64, %c0_65] : memref<1x192xf32, #tpu.memory_space<vmem>>, vector<1x192xf32>
    %cst_66 = arith.constant dense<0.000000e+00> : vector<32x192xf32>
    %119 = tpu.matmul %116, %117, %cst_66 {dimension_numbers = #tpu.dot_dimension_numbers<[1], [0], [0], [1], [0, 0, 1, 1], [], []>} : vector<32x96xbf16>, vector<96x192xbf16>, vector<32x192xf32> -> vector<32x192xf32>
    %120 = vector.broadcast %118 : vector<1x192xf32> to vector<32x192xf32>
    %121 = arith.addf %119, %120 : vector<32x192xf32>
    %cst_67 = arith.constant 0.000000e+00 : f32
    %122 = vector.broadcast %cst_67 : f32 to vector<32x192xf32>
    %123 = arith.cmpf oge, %121, %122 : vector<32x192xf32>
    %124 = arith.extui %123 : vector<32x192xi1> to vector<32x192xi8>
    %c0_68 = arith.constant 0 : index
    %c1920 = arith.constant 1920 : index
    %125 = vector.load %arg28[%c0_68, %c1920] : memref<32x3328xi8, #tpu.memory_space<vmem>>, vector<32x192xi8>
    tpu.vector_store %arg28[%c0_68, %c1920], %124 {strides = array<i32>} : memref<32x3328xi8, #tpu.memory_space<vmem>>, vector<32x192xi8>,
    %cst_69 = arith.constant 0.000000e+00 : f32
    %126 = vector.broadcast %cst_69 : f32 to vector<32x192xf32>
    %127 = arith.select %123, %121, %126 : vector<32x192xi1>, vector<32x192xf32>
    %128 = arith.truncf %127 : vector<32x192xf32> to vector<32x192xbf16>
    %c0_70 = arith.constant 0 : index
    %c0_71 = arith.constant 0 : index
    %129 = vector.load %arg20[%c0_70, %c0_71] : memref<192x384xbf16, #tpu.memory_space<vmem>>, vector<192x384xbf16>
    %c0_72 = arith.constant 0 : index
    %c0_73 = arith.constant 0 : index
    %130 = vector.load %arg21[%c0_72, %c0_73] : memref<1x384xf32, #tpu.memory_space<vmem>>, vector<1x384xf32>
    %cst_74 = arith.constant dense<0.000000e+00> : vector<32x384xf32>
    %131 = tpu.matmul %128, %129, %cst_74 {dimension_numbers = #tpu.dot_dimension_numbers<[1], [0], [0], [1], [0, 0, 1, 1], [], []>} : vector<32x192xbf16>, vector<192x384xbf16>, vector<32x384xf32> -> vector<32x384xf32>
    %132 = vector.broadcast %130 : vector<1x384xf32> to vector<32x384xf32>
    %133 = arith.addf %131, %132 : vector<32x384xf32>
    %cst_75 = arith.constant 0.000000e+00 : f32
    %134 = vector.broadcast %cst_75 : f32 to vector<32x384xf32>
    %135 = arith.cmpf oge, %133, %134 : vector<32x384xf32>
    %136 = arith.extui %135 : vector<32x384xi1> to vector<32x384xi8>
    %c0_76 = arith.constant 0 : index
    %c2176 = arith.constant 2176 : index
    %137 = vector.load %arg28[%c0_76, %c2176] : memref<32x3328xi8, #tpu.memory_space<vmem>>, vector<32x384xi8>
    tpu.vector_store %arg28[%c0_76, %c2176], %136 {strides = array<i32>} : memref<32x3328xi8, #tpu.memory_space<vmem>>, vector<32x384xi8>,
    %cst_77 = arith.constant 0.000000e+00 : f32
    %138 = vector.broadcast %cst_77 : f32 to vector<32x384xf32>
    %139 = arith.select %135, %133, %138 : vector<32x384xi1>, vector<32x384xf32>
    %140 = arith.truncf %139 : vector<32x384xf32> to vector<32x384xbf16>
    %c0_78 = arith.constant 0 : index
    %c0_79 = arith.constant 0 : index
    %141 = vector.load %arg22[%c0_78, %c0_79] : memref<384x768xbf16, #tpu.memory_space<vmem>>, vector<384x768xbf16>
    %c0_80 = arith.constant 0 : index
    %c0_81 = arith.constant 0 : index
    %142 = vector.load %arg23[%c0_80, %c0_81] : memref<1x768xf32, #tpu.memory_space<vmem>>, vector<1x768xf32>
    %cst_82 = arith.constant dense<0.000000e+00> : vector<32x768xf32>
    %143 = tpu.matmul %140, %141, %cst_82 {dimension_numbers = #tpu.dot_dimension_numbers<[1], [0], [0], [1], [0, 0, 1, 1], [], []>} : vector<32x384xbf16>, vector<384x768xbf16>, vector<32x768xf32> -> vector<32x768xf32>
    %144 = vector.broadcast %142 : vector<1x768xf32> to vector<32x768xf32>
    %145 = arith.addf %143, %144 : vector<32x768xf32>
    %cst_83 = arith.constant 0.000000e+00 : f32
    %146 = vector.broadcast %cst_83 : f32 to vector<32x768xf32>
    %147 = arith.cmpf oge, %145, %146 : vector<32x768xf32>
    %148 = arith.extui %147 : vector<32x768xi1> to vector<32x768xi8>
    %c0_84 = arith.constant 0 : index
    %c2560 = arith.constant 2560 : index
    %149 = vector.load %arg28[%c0_84, %c2560] : memref<32x3328xi8, #tpu.memory_space<vmem>>, vector<32x768xi8>
    tpu.vector_store %arg28[%c0_84, %c2560], %148 {strides = array<i32>} : memref<32x3328xi8, #tpu.memory_space<vmem>>, vector<32x768xi8>,
    %cst_85 = arith.constant 0.000000e+00 : f32
    %150 = vector.broadcast %cst_85 : f32 to vector<32x768xf32>
    %151 = arith.select %147, %145, %150 : vector<32x768xi1>, vector<32x768xf32>
    %152 = arith.truncf %151 : vector<32x768xf32> to vector<32x768xbf16>
    %c0_86 = arith.constant 0 : index
    %c0_87 = arith.constant 0 : index
    %153 = vector.load %arg24[%c0_86, %c0_87] : memref<768x3xbf16, #tpu.memory_space<vmem>>, vector<768x3xbf16>
    %c0_88 = arith.constant 0 : index
    %c0_89 = arith.constant 0 : index
    %154 = vector.load %arg25[%c0_88, %c0_89] : memref<1x3xf32, #tpu.memory_space<vmem>>, vector<1x3xf32>
    %cst_90 = arith.constant dense<0.000000e+00> : vector<32x3xf32>
    %155 = tpu.matmul %152, %153, %cst_90 {dimension_numbers = #tpu.dot_dimension_numbers<[1], [0], [0], [1], [0, 0, 1, 1], [], []>} : vector<32x768xbf16>, vector<768x3xbf16>, vector<32x3xf32> -> vector<32x3xf32>
    %156 = vector.broadcast %154 : vector<1x3xf32> to vector<32x3xf32>
    %157 = arith.addf %155, %156 : vector<32x3xf32>
    %c0_91 = arith.constant 0 : index
    %c0_92 = arith.constant 0 : index
    %158 = vector.load %arg26[%c0_91, %c0_92] : memref<32x3xf32, #tpu.memory_space<vmem>>, vector<32x3xf32>
    tpu.vector_store %arg26[%c0_91, %c0_92], %157 {strides = array<i32>} : memref<32x3xf32, #tpu.memory_space<vmem>>, vector<32x3xf32>,
    return
  }
  func.func @transform_0(%arg0: i32) -> (i32, i32) {
    %c0_i32 = arith.constant 0 : i32
    %c0_i32_0 = arith.constant 0 : i32
    return %arg0, %c0_i32 : i32, i32
  }
  func.func @transform_1(%arg0: i32) -> (i32, i32) {
    %c0_i32 = arith.constant 0 : i32
    %c0_i32_0 = arith.constant 0 : i32
    %c0_i32_1 = arith.constant 0 : i32
    return %c0_i32, %c0_i32_0 : i32, i32
  }
  func.func @transform_2(%arg0: i32) -> (i32, i32) {
    %c0_i32 = arith.constant 0 : i32
    %c0_i32_0 = arith.constant 0 : i32
    %c0_i32_1 = arith.constant 0 : i32
    return %c0_i32, %c0_i32_0 : i32, i32
  }
  func.func @transform_3(%arg0: i32) -> (i32, i32) {
    %c0_i32 = arith.constant 0 : i32
    %c0_i32_0 = arith.constant 0 : i32
    %c0_i32_1 = arith.constant 0 : i32
    return %c0_i32, %c0_i32_0 : i32, i32
  }
  func.func @transform_4(%arg0: i32) -> (i32, i32) {
    %c0_i32 = arith.constant 0 : i32
    %c0_i32_0 = arith.constant 0 : i32
    %c0_i32_1 = arith.constant 0 : i32
    return %c0_i32, %c0_i32_0 : i32, i32
  }
  func.func @transform_5(%arg0: i32) -> (i32, i32) {
    %c0_i32 = arith.constant 0 : i32
    %c0_i32_0 = arith.constant 0 : i32
    %c0_i32_1 = arith.constant 0 : i32
    return %c0_i32, %c0_i32_0 : i32, i32
  }
  func.func @transform_6(%arg0: i32) -> (i32, i32) {
    %c0_i32 = arith.constant 0 : i32
    %c0_i32_0 = arith.constant 0 : i32
    %c0_i32_1 = arith.constant 0 : i32
    return %c0_i32, %c0_i32_0 : i32, i32
  }
  func.func @transform_7(%arg0: i32) -> (i32, i32) {
    %c0_i32 = arith.constant 0 : i32
    %c0_i32_0 = arith.constant 0 : i32
    %c0_i32_1 = arith.constant 0 : i32
    return %c0_i32, %c0_i32_0 : i32, i32
  }
  func.func @transform_8(%arg0: i32) -> (i32, i32) {
    %c0_i32 = arith.constant 0 : i32
    %c0_i32_0 = arith.constant 0 : i32
    %c0_i32_1 = arith.constant 0 : i32
    return %c0_i32, %c0_i32_0 : i32, i32
  }
  func.func @transform_9(%arg0: i32) -> (i32, i32) {
    %c0_i32 = arith.constant 0 : i32
    %c0_i32_0 = arith.constant 0 : i32
    %c0_i32_1 = arith.constant 0 : i32
    return %c0_i32, %c0_i32_0 : i32, i32
  }
  func.func @transform_10(%arg0: i32) -> (i32, i32) {
    %c0_i32 = arith.constant 0 : i32
    %c0_i32_0 = arith.constant 0 : i32
    %c0_i32_1 = arith.constant 0 : i32
    return %c0_i32, %c0_i32_0 : i32, i32
  }
  func.func @transform_11(%arg0: i32) -> (i32, i32) {
    %c0_i32 = arith.constant 0 : i32
    %c0_i32_0 = arith.constant 0 : i32
    %c0_i32_1 = arith.constant 0 : i32
    return %c0_i32, %c0_i32_0 : i32, i32
  }
  func.func @transform_12(%arg0: i32) -> (i32, i32) {
    %c0_i32 = arith.constant 0 : i32
    %c0_i32_0 = arith.constant 0 : i32
    %c0_i32_1 = arith.constant 0 : i32
    return %c0_i32, %c0_i32_0 : i32, i32
  }
  func.func @transform_13(%arg0: i32) -> (i32, i32) {
    %c0_i32 = arith.constant 0 : i32
    %c0_i32_0 = arith.constant 0 : i32
    %c0_i32_1 = arith.constant 0 : i32
    return %c0_i32, %c0_i32_0 : i32, i32
  }
  func.func @transform_14(%arg0: i32) -> (i32, i32) {
    %c0_i32 = arith.constant 0 : i32
    %c0_i32_0 = arith.constant 0 : i32
    %c0_i32_1 = arith.constant 0 : i32
    return %c0_i32, %c0_i32_0 : i32, i32
  }
  func.func @transform_15(%arg0: i32) -> (i32, i32) {
    %c0_i32 = arith.constant 0 : i32
    %c0_i32_0 = arith.constant 0 : i32
    %c0_i32_1 = arith.constant 0 : i32
    return %c0_i32, %c0_i32_0 : i32, i32
  }
  func.func @transform_16(%arg0: i32) -> (i32, i32) {
    %c0_i32 = arith.constant 0 : i32
    %c0_i32_0 = arith.constant 0 : i32
    %c0_i32_1 = arith.constant 0 : i32
    return %c0_i32, %c0_i32_0 : i32, i32
  }
  func.func @transform_17(%arg0: i32) -> (i32, i32) {
    %c0_i32 = arith.constant 0 : i32
    %c0_i32_0 = arith.constant 0 : i32
    %c0_i32_1 = arith.constant 0 : i32
    return %c0_i32, %c0_i32_0 : i32, i32
  }
  func.func @transform_18(%arg0: i32) -> (i32, i32) {
    %c0_i32 = arith.constant 0 : i32
    %c0_i32_0 = arith.constant 0 : i32
    %c0_i32_1 = arith.constant 0 : i32
    return %c0_i32, %c0_i32_0 : i32, i32
  }
  func.func @transform_19(%arg0: i32) -> (i32, i32) {
    %c0_i32 = arith.constant 0 : i32
    %c0_i32_0 = arith.constant 0 : i32
    %c0_i32_1 = arith.constant 0 : i32
    return %c0_i32, %c0_i32_0 : i32, i32
  }
  func.func @transform_20(%arg0: i32) -> (i32, i32) {
    %c0_i32 = arith.constant 0 : i32
    %c0_i32_0 = arith.constant 0 : i32
    %c0_i32_1 = arith.constant 0 : i32
    return %c0_i32, %c0_i32_0 : i32, i32
  }
  func.func @transform_21(%arg0: i32) -> (i32, i32) {
    %c0_i32 = arith.constant 0 : i32
    %c0_i32_0 = arith.constant 0 : i32
    %c0_i32_1 = arith.constant 0 : i32
    return %c0_i32, %c0_i32_0 : i32, i32
  }
  func.func @transform_22(%arg0: i32) -> (i32, i32) {
    %c0_i32 = arith.constant 0 : i32
    %c0_i32_0 = arith.constant 0 : i32
    %c0_i32_1 = arith.constant 0 : i32
    return %c0_i32, %c0_i32_0 : i32, i32
  }
  func.func @transform_23(%arg0: i32) -> (i32, i32) {
    %c0_i32 = arith.constant 0 : i32
    %c0_i32_0 = arith.constant 0 : i32
    %c0_i32_1 = arith.constant 0 : i32
    return %c0_i32, %c0_i32_0 : i32, i32
  }
  func.func @transform_24(%arg0: i32) -> (i32, i32) {
    %c0_i32 = arith.constant 0 : i32
    %c0_i32_0 = arith.constant 0 : i32
    %c0_i32_1 = arith.constant 0 : i32
    return %c0_i32, %c0_i32_0 : i32, i32
  }
  func.func @transform_25(%arg0: i32) -> (i32, i32) {
    %c0_i32 = arith.constant 0 : i32
    %c0_i32_0 = arith.constant 0 : i32
    return %arg0, %c0_i32 : i32, i32
  }
  func.func @transform_26(%arg0: i32) -> (i32, i32) {
    %c0_i32 = arith.constant 0 : i32
    %c0_i32_0 = arith.constant 0 : i32
    return %arg0, %c0_i32 : i32, i32
  }
  func.func @transform_27(%arg0: i32) -> (i32, i32) {
    %c0_i32 = arith.constant 0 : i32
    %c0_i32_0 = arith.constant 0 : i32
    return %arg0, %c0_i32 : i32, i32
  }
}

</mosaic_0001>

<llo_original>
// kernel: autoencoder_forward.1
$region0: #{autoencoder_forward.1}
  #allocation0 [shape = 'u32[]', space=smem, size = 0x4, offset = 0x4, fixed_abs, tag = 'smem constant byte address 0x4 - core index']
  #allocation1 [shape = 'u32[144,128]{1,0:T(1,128)}', space=vmem, size = 0x12000, scoped, tag = 'internal scratch']
  %s0 = inlined_call_operand.vmem [shape: f32[64,3], index: 0, kind: input, shape index: {}]
  %s1 = inlined_call_operand.vmem [shape: f32[3,768], index: 1, kind: input, shape index: {}]
  %s2 = inlined_call_operand.vmem [shape: f32[1,768], index: 2, kind: input, shape index: {}]
  %s3 = inlined_call_operand.vmem [shape: bf16[768,384], index: 3, kind: input, shape index: {}]
  %s4 = inlined_call_operand.vmem [shape: f32[1,384], index: 4, kind: input, shape index: {}]
  %s5 = inlined_call_operand.vmem [shape: bf16[384,192], index: 5, kind: input, shape index: {}]
  %s6 = inlined_call_operand.vmem [shape: f32[1,192], index: 6, kind: input, shape index: {}]
  %s7 = inlined_call_operand.vmem [shape: bf16[192,96], index: 7, kind: input, shape index: {}]
  %s8 = inlined_call_operand.vmem [shape: f32[1,96], index: 8, kind: input, shape index: {}]
  %s9 = inlined_call_operand.vmem [shape: bf16[96,48], index: 9, kind: input, shape index: {}]
  %s10 = inlined_call_operand.vmem [shape: f32[1,48], index: 10, kind: input, shape index: {}]
  %s11 = inlined_call_operand.vmem [shape: bf16[48,2], index: 11, kind: input, shape index: {}]
  %s12 = inlined_call_operand.vmem [shape: f32[1,2], index: 12, kind: input, shape index: {}]
  %s13 = inlined_call_operand.vmem [shape: f32[2,48], index: 13, kind: input, shape index: {}]
  %s14 = inlined_call_operand.vmem [shape: f32[1,48], index: 14, kind: input, shape index: {}]
  %s15 = inlined_call_operand.vmem [shape: bf16[48,96], index: 15, kind: input, shape index: {}]
  %s16 = inlined_call_operand.vmem [shape: f32[1,96], index: 16, kind: input, shape index: {}]
  %s17 = inlined_call_operand.vmem [shape: bf16[96,192], index: 17, kind: input, shape index: {}]
  %s18 = inlined_call_operand.vmem [shape: f32[1,192], index: 18, kind: input, shape index: {}]
  %s19 = inlined_call_operand.vmem [shape: bf16[192,384], index: 19, kind: input, shape index: {}]
  %s20 = inlined_call_operand.vmem [shape: f32[1,384], index: 20, kind: input, shape index: {}]
  %s21 = inlined_call_operand.vmem [shape: bf16[384,768], index: 21, kind: input, shape index: {}]
  %s22 = inlined_call_operand.vmem [shape: f32[1,768], index: 22, kind: input, shape index: {}]
  %s23 = inlined_call_operand.vmem [shape: bf16[768,3], index: 23, kind: input, shape index: {}]
  %s24 = inlined_call_operand.vmem [shape: f32[1,3], index: 24, kind: input, shape index: {}]
  %s25 = inlined_call_operand.vmem [shape: f32[64,3], index: 25, kind: output, shape index: {0}]
  %s26 = inlined_call_operand.vmem [shape: f32[64,2], index: 26, kind: output, shape index: {1}]
  %s27 = inlined_call_operand.vmem [shape: s8[64,3328], index: 27, kind: output, shape index: {2}]
  %28 = xla_tuple %s25, %s26, %s27
  %s29 = sld [smem:[#allocation0]]
  $region149: #{autoencoder_forward.1} parent=0
    _
  %s31 = ssub.s32 1, %s29
  %s32 = scalar_select 0, %s31, %s29
  loop: start=0, step=1, limit=4
  $region2: #{autoencoder_forward.1} parent=0 // loop_pre_header
    _
  $region3: #{autoencoder_forward.1} parent=0 // loop_header
    %s34 = sphi 0, %s38
    %p35 = scmp.ge.s32.totalorder %s34, 4
    %s44 = sphi 0, %s46
    %s47 = sphi 0, %s44
    %s48 = sphi 0, %s47
    %s64 = sphi 0, %s48
    %s68 = sphi 0, %s68
    %s70 = sphi 0, %s68
    %s71 = sphi 0, %s70
    %s85 = sphi 0, %s71
    %s89 = sphi 0, %s89
    %s91 = sphi 0, %s89
    %s92 = sphi 0, %s91
    %s106 = sphi 0, %s92
    %s110 = sphi 0, %s110
    %s112 = sphi 0, %s110
    %s113 = sphi 0, %s112
    %s127 = sphi 0, %s113
    %s131 = sphi 0, %s131
    %s133 = sphi 0, %s131
    %s134 = sphi 0, %s133
    %s148 = sphi 0, %s134
    %s152 = sphi 0, %s152
    %s154 = sphi 0, %s152
    %s155 = sphi 0, %s154
    %s169 = sphi 0, %s155
    %s173 = sphi 0, %s173
    %s175 = sphi 0, %s173
    %s176 = sphi 0, %s175
    %s190 = sphi 0, %s176
    %s194 = sphi 0, %s194
    %s196 = sphi 0, %s194
    %s197 = sphi 0, %s196
    %s211 = sphi 0, %s197
    %s215 = sphi 0, %s215
    %s217 = sphi 0, %s215
    %s218 = sphi 0, %s217
    %s232 = sphi 0, %s218
    %s236 = sphi 0, %s236
    %s238 = sphi 0, %s236
    %s239 = sphi 0, %s238
    %s253 = sphi 0, %s239
    %s257 = sphi 0, %s257
    %s259 = sphi 0, %s257
    %s260 = sphi 0, %s259
    %s274 = sphi 0, %s260
    %s278 = sphi 0, %s278
    %s280 = sphi 0, %s278
    %s281 = sphi 0, %s280
    %s295 = sphi 0, %s281
    %s299 = sphi 0, %s299
    %s301 = sphi 0, %s299
    %s302 = sphi 0, %s301
    %s316 = sphi 0, %s302
    %s320 = sphi 0, %s320
    %s322 = sphi 0, %s320
    %s323 = sphi 0, %s322
    %s337 = sphi 0, %s323
    %s341 = sphi 0, %s341
    %s343 = sphi 0, %s341
    %s344 = sphi 0, %s343
    %s358 = sphi 0, %s344
    %s362 = sphi 0, %s362
    %s364 = sphi 0, %s362
    %s365 = sphi 0, %s364
    %s379 = sphi 0, %s365
    %s383 = sphi 0, %s383
    %s385 = sphi 0, %s383
    %s386 = sphi 0, %s385
    %s400 = sphi 0, %s386
    %s404 = sphi 0, %s404
    %s406 = sphi 0, %s404
    %s407 = sphi 0, %s406
    %s421 = sphi 0, %s407
    %s425 = sphi 0, %s425
    %s427 = sphi 0, %s425
    %s428 = sphi 0, %s427
    %s442 = sphi 0, %s428
    %s446 = sphi 0, %s446
    %s448 = sphi 0, %s446
    %s449 = sphi 0, %s448
    %s463 = sphi 0, %s449
    %s467 = sphi 0, %s467
    %s469 = sphi 0, %s467
    %s470 = sphi 0, %s469
    %s484 = sphi 0, %s470
    %s488 = sphi 0, %s488
    %s490 = sphi 0, %s488
    %s491 = sphi 0, %s490
    %s505 = sphi 0, %s491
    %s509 = sphi 0, %s509
    %s511 = sphi 0, %s509
    %s512 = sphi 0, %s511
    %s526 = sphi 0, %s512
    %s530 = sphi 0, %s530
    %s532 = sphi 0, %s530
    %s533 = sphi 0, %s532
    %s547 = sphi 0, %s533
    %s551 = sphi 0, %s551
    %s553 = sphi 0, %s551
    %s554 = sphi 0, %s553
    %s568 = sphi 0, %s554
    %s574 = sphi 0, %s576
    %s577 = sphi 0, %s574
    %s578 = sphi 0, %s577
    %s594 = sphi 0, %s578
    %s600 = sphi 0, %s602
    %s603 = sphi 0, %s600
    %s604 = sphi 0, %s603
    %s620 = sphi 0, %s604
    %s626 = sphi 0, %s628
    %s629 = sphi 0, %s626
    %s630 = sphi 0, %s629
    %s646 = sphi 0, %s630
  $region4: #{autoencoder_forward.1} parent=0 // loop_header_branch
    %37 = sbr.rel (%p35) target = $region8
  $region5: #{autoencoder_forward.1} parent=0 // loop_body
    %s39 = ssub.s32 %s34, 1
    %s40 = ssub.s32 %s34, 2
    %s41 = sadd.s32 %s34, 1
    %s42 = ssub.s32 %s34, %s41
    %p43 = scmp.eq.s32.totalorder %s42, 0
    %s45 = sadd.s32 %s44, 1
    %s46 = scalar_select %p43, %s44, %s45
    %p49 = pneg %p43
    %p50 = scmp.eq.s32.totalorder %s34, 1
    %p51 = por %p49, %p50
    %p52 = scmp.ne.s32.totalorder %s44, %s47
    %p53 = scmp.eq.s32.totalorder %s34, 0
    %p54 = por %p52, %p53
    %p55 = scmp.ne.s32.totalorder %s44, %s47
    %p56 = scmp.eq.s32.totalorder %s39, 1
    %p57 = por %p55, %p56
    %p58 = scmp.ne.s32.totalorder %s47, %s48
    %p59 = scmp.eq.s32.totalorder %s39, 0
    %p60 = por %p58, %p59
    %p61 = scmp.ne.s32.totalorder %s47, %s48
    %p62 = scmp.eq.s32.totalorder %s40, 1
    %p63 = por %p61, %p62
    %p65 = scmp.ne.s32.totalorder %s48, %s64
    %p66 = scmp.eq.s32.totalorder %s40, 0
    %p67 = por %p65, %p66
    %s69 = sadd.s32 %s68, 1
    %p72 = scmp.eq.s32.totalorder %s34, 1
    %p73 = scmp.ne.s32.totalorder %s68, %s70
    %p74 = scmp.eq.s32.totalorder %s34, 0
    %p75 = por %p73, %p74
    %p76 = scmp.ne.s32.totalorder %s68, %s70
    %p77 = scmp.eq.s32.totalorder %s39, 1
    %p78 = por %p76, %p77
    %p79 = scmp.ne.s32.totalorder %s70, %s71
    %p80 = scmp.eq.s32.totalorder %s39, 0
    %p81 = por %p79, %p80
    %p82 = scmp.ne.s32.totalorder %s70, %s71
    %p83 = scmp.eq.s32.totalorder %s40, 1
    %p84 = por %p82, %p83
    %p86 = scmp.ne.s32.totalorder %s71, %s85
    %p87 = scmp.eq.s32.totalorder %s40, 0
    %p88 = por %p86, %p87
    %s90 = sadd.s32 %s89, 1
    %p93 = scmp.eq.s32.totalorder %s34, 1
    %p94 = scmp.ne.s32.totalorder %s89, %s91
    %p95 = scmp.eq.s32.totalorder %s34, 0
    %p96 = por %p94, %p95
    %p97 = scmp.ne.s32.totalorder %s89, %s91
    %p98 = scmp.eq.s32.totalorder %s39, 1
    %p99 = por %p97, %p98
    %p100 = scmp.ne.s32.totalorder %s91, %s92
    %p101 = scmp.eq.s32.totalorder %s39, 0
    %p102 = por %p100, %p101
    %p103 = scmp.ne.s32.totalorder %s91, %s92
    %p104 = scmp.eq.s32.totalorder %s40, 1
    %p105 = por %p103, %p104
    %p107 = scmp.ne.s32.totalorder %s92, %s106
    %p108 = scmp.eq.s32.totalorder %s40, 0
    %p109 = por %p107, %p108
    %s111 = sadd.s32 %s110, 1
    %p114 = scmp.eq.s32.totalorder %s34, 1
    %p115 = scmp.ne.s32.totalorder %s110, %s112
    %p116 = scmp.eq.s32.totalorder %s34, 0
    %p117 = por %p115, %p116
    %p118 = scmp.ne.s32.totalorder %s110, %s112
    %p119 = scmp.eq.s32.totalorder %s39, 1
    %p120 = por %p118, %p119
    %p121 = scmp.ne.s32.totalorder %s112, %s113
    %p122 = scmp.eq.s32.totalorder %s39, 0
    %p123 = por %p121, %p122
    %p124 = scmp.ne.s32.totalorder %s112, %s113
    %p125 = scmp.eq.s32.totalorder %s40, 1
    %p126 = por %p124, %p125
    %p128 = scmp.ne.s32.totalorder %s113, %s127
    %p129 = scmp.eq.s32.totalorder %s40, 0
    %p130 = por %p128, %p129
    %s132 = sadd.s32 %s131, 1
    %p135 = scmp.eq.s32.totalorder %s34, 1
    %p136 = scmp.ne.s32.totalorder %s131, %s133
    %p137 = scmp.eq.s32.totalorder %s34, 0
    %p138 = por %p136, %p137
    %p139 = scmp.ne.s32.totalorder %s131, %s133
    %p140 = scmp.eq.s32.totalorder %s39, 1
    %p141 = por %p139, %p140
    %p142 = scmp.ne.s32.totalorder %s133, %s134
    %p143 = scmp.eq.s32.totalorder %s39, 0
    %p144 = por %p142, %p143
    %p145 = scmp.ne.s32.totalorder %s133, %s134
    %p146 = scmp.eq.s32.totalorder %s40, 1
    %p147 = por %p145, %p146
    %p149 = scmp.ne.s32.totalorder %s134, %s148
    %p150 = scmp.eq.s32.totalorder %s40, 0
    %p151 = por %p149, %p150
    %s153 = sadd.s32 %s152, 1
    %p156 = scmp.eq.s32.totalorder %s34, 1
    %p157 = scmp.ne.s32.totalorder %s152, %s154
    %p158 = scmp.eq.s32.totalorder %s34, 0
    %p159 = por %p157, %p158
    %p160 = scmp.ne.s32.totalorder %s152, %s154
    %p161 = scmp.eq.s32.totalorder %s39, 1
    %p162 = por %p160, %p161
    %p163 = scmp.ne.s32.totalorder %s154, %s155
    %p164 = scmp.eq.s32.totalorder %s39, 0
    %p165 = por %p163, %p164
    %p166 = scmp.ne.s32.totalorder %s154, %s155
    %p167 = scmp.eq.s32.totalorder %s40, 1
    %p168 = por %p166, %p167
    %p170 = scmp.ne.s32.totalorder %s155, %s169
    %p171 = scmp.eq.s32.totalorder %s40, 0
    %p172 = por %p170, %p171
    %s174 = sadd.s32 %s173, 1
    %p177 = scmp.eq.s32.totalorder %s34, 1
    %p178 = scmp.ne.s32.totalorder %s173, %s175
    %p179 = scmp.eq.s32.totalorder %s34, 0
    %p180 = por %p178, %p179
    %p181 = scmp.ne.s32.totalorder %s173, %s175
    %p182 = scmp.eq.s32.totalorder %s39, 1
    %p183 = por %p181, %p182
    %p184 = scmp.ne.s32.totalorder %s175, %s176
    %p185 = scmp.eq.s32.totalorder %s39, 0
    %p186 = por %p184, %p185
    %p187 = scmp.ne.s32.totalorder %s175, %s176
    %p188 = scmp.eq.s32.totalorder %s40, 1
    %p189 = por %p187, %p188
    %p191 = scmp.ne.s32.totalorder %s176, %s190
    %p192 = scmp.eq.s32.totalorder %s40, 0
    %p193 = por %p191, %p192
    %s195 = sadd.s32 %s194, 1
    %p198 = scmp.eq.s32.totalorder %s34, 1
    %p199 = scmp.ne.s32.totalorder %s194, %s196
    %p200 = scmp.eq.s32.totalorder %s34, 0
    %p201 = por %p199, %p200
    %p202 = scmp.ne.s32.totalorder %s194, %s196
    %p203 = scmp.eq.s32.totalorder %s39, 1
    %p204 = por %p202, %p203
    %p205 = scmp.ne.s32.totalorder %s196, %s197
    %p206 = scmp.eq.s32.totalorder %s39, 0
    %p207 = por %p205, %p206
    %p208 = scmp.ne.s32.totalorder %s196, %s197
    %p209 = scmp.eq.s32.totalorder %s40, 1
    %p210 = por %p208, %p209
    %p212 = scmp.ne.s32.totalorder %s197, %s211
    %p213 = scmp.eq.s32.totalorder %s40, 0
    %p214 = por %p212, %p213
    %s216 = sadd.s32 %s215, 1
    %p219 = scmp.eq.s32.totalorder %s34, 1
    %p220 = scmp.ne.s32.totalorder %s215, %s217
    %p221 = scmp.eq.s32.totalorder %s34, 0
    %p222 = por %p220, %p221
    %p223 = scmp.ne.s32.totalorder %s215, %s217
    %p224 = scmp.eq.s32.totalorder %s39, 1
    %p225 = por %p223, %p224
    %p226 = scmp.ne.s32.totalorder %s217, %s218
    %p227 = scmp.eq.s32.totalorder %s39, 0
    %p228 = por %p226, %p227
    %p229 = scmp.ne.s32.totalorder %s217, %s218
    %p230 = scmp.eq.s32.totalorder %s40, 1
    %p231 = por %p229, %p230
    %p233 = scmp.ne.s32.totalorder %s218, %s232
    %p234 = scmp.eq.s32.totalorder %s40, 0
    %p235 = por %p233, %p234
    %s237 = sadd.s32 %s236, 1
    %p240 = scmp.eq.s32.totalorder %s34, 1
    %p241 = scmp.ne.s32.totalorder %s236, %s238
    %p242 = scmp.eq.s32.totalorder %s34, 0
    %p243 = por %p241, %p242
    %p244 = scmp.ne.s32.totalorder %s236, %s238
    %p245 = scmp.eq.s32.totalorder %s39, 1
    %p246 = por %p244, %p245
    %p247 = scmp.ne.s32.totalorder %s238, %s239
    %p248 = scmp.eq.s32.totalorder %s39, 0
    %p249 = por %p247, %p248
    %p250 = scmp.ne.s32.totalorder %s238, %s239
    %p251 = scmp.eq.s32.totalorder %s40, 1
    %p252 = por %p250, %p251
    %p254 = scmp.ne.s32.totalorder %s239, %s253
    %p255 = scmp.eq.s32.totalorder %s40, 0
    %p256 = por %p254, %p255
    %s258 = sadd.s32 %s257, 1
    %p261 = scmp.eq.s32.totalorder %s34, 1
    %p262 = scmp.ne.s32.totalorder %s257, %s259
    %p263 = scmp.eq.s32.totalorder %s34, 0
    %p264 = por %p262, %p263
    %p265 = scmp.ne.s32.totalorder %s257, %s259
    %p266 = scmp.eq.s32.totalorder %s39, 1
    %p267 = por %p265, %p266
    %p268 = scmp.ne.s32.totalorder %s259, %s260
    %p269 = scmp.eq.s32.totalorder %s39, 0
    %p270 = por %p268, %p269
    %p271 = scmp.ne.s32.totalorder %s259, %s260
    %p272 = scmp.eq.s32.totalorder %s40, 1
    %p273 = por %p271, %p272
    %p275 = scmp.ne.s32.totalorder %s260, %s274
    %p276 = scmp.eq.s32.totalorder %s40, 0
    %p277 = por %p275, %p276
    %s279 = sadd.s32 %s278, 1
    %p282 = scmp.eq.s32.totalorder %s34, 1
    %p283 = scmp.ne.s32.totalorder %s278, %s280
    %p284 = scmp.eq.s32.totalorder %s34, 0
    %p285 = por %p283, %p284
    %p286 = scmp.ne.s32.totalorder %s278, %s280
    %p287 = scmp.eq.s32.totalorder %s39, 1
    %p288 = por %p286, %p287
    %p289 = scmp.ne.s32.totalorder %s280, %s281
    %p290 = scmp.eq.s32.totalorder %s39, 0
    %p291 = por %p289, %p290
    %p292 = scmp.ne.s32.totalorder %s280, %s281
    %p293 = scmp.eq.s32.totalorder %s40, 1
    %p294 = por %p292, %p293
    %p296 = scmp.ne.s32.totalorder %s281, %s295
    %p297 = scmp.eq.s32.totalorder %s40, 0
    %p298 = por %p296, %p297
    %s300 = sadd.s32 %s299, 1
    %p303 = scmp.eq.s32.totalorder %s34, 1
    %p304 = scmp.ne.s32.totalorder %s299, %s301
    %p305 = scmp.eq.s32.totalorder %s34, 0
    %p306 = por %p304, %p305
    %p307 = scmp.ne.s32.totalorder %s299, %s301
    %p308 = scmp.eq.s32.totalorder %s39, 1
    %p309 = por %p307, %p308
    %p310 = scmp.ne.s32.totalorder %s301, %s302
    %p311 = scmp.eq.s32.totalorder %s39, 0
    %p312 = por %p310, %p311
    %p313 = scmp.ne.s32.totalorder %s301, %s302
    %p314 = scmp.eq.s32.totalorder %s40, 1
    %p315 = por %p313, %p314
    %p317 = scmp.ne.s32.totalorder %s302, %s316
    %p318 = scmp.eq.s32.totalorder %s40, 0
    %p319 = por %p317, %p318
    %s321 = sadd.s32 %s320, 1
    %p324 = scmp.eq.s32.totalorder %s34, 1
    %p325 = scmp.ne.s32.totalorder %s320, %s322
    %p326 = scmp.eq.s32.totalorder %s34, 0
    %p327 = por %p325, %p326
    %p328 = scmp.ne.s32.totalorder %s320, %s322
    %p329 = scmp.eq.s32.totalorder %s39, 1
    %p330 = por %p328, %p329
    %p331 = scmp.ne.s32.totalorder %s322, %s323
    %p332 = scmp.eq.s32.totalorder %s39, 0
    %p333 = por %p331, %p332
    %p334 = scmp.ne.s32.totalorder %s322, %s323
    %p335 = scmp.eq.s32.totalorder %s40, 1
    %p336 = por %p334, %p335
    %p338 = scmp.ne.s32.totalorder %s323, %s337
    %p339 = scmp.eq.s32.totalorder %s40, 0
    %p340 = por %p338, %p339
    %s342 = sadd.s32 %s341, 1
    %p345 = scmp.eq.s32.totalorder %s34, 1
    %p346 = scmp.ne.s32.totalorder %s341, %s343
    %p347 = scmp.eq.s32.totalorder %s34, 0
    %p348 = por %p346, %p347
    %p349 = scmp.ne.s32.totalorder %s341, %s343
    %p350 = scmp.eq.s32.totalorder %s39, 1
    %p351 = por %p349, %p350
    %p352 = scmp.ne.s32.totalorder %s343, %s344
    %p353 = scmp.eq.s32.totalorder %s39, 0
    %p354 = por %p352, %p353
    %p355 = scmp.ne.s32.totalorder %s343, %s344
    %p356 = scmp.eq.s32.totalorder %s40, 1
    %p357 = por %p355, %p356
    %p359 = scmp.ne.s32.totalorder %s344, %s358
    %p360 = scmp.eq.s32.totalorder %s40, 0
    %p361 = por %p359, %p360
    %s363 = sadd.s32 %s362, 1
    %p366 = scmp.eq.s32.totalorder %s34, 1
    %p367 = scmp.ne.s32.totalorder %s362, %s364
    %p368 = scmp.eq.s32.totalorder %s34, 0
    %p369 = por %p367, %p368
    %p370 = scmp.ne.s32.totalorder %s362, %s364
    %p371 = scmp.eq.s32.totalorder %s39, 1
    %p372 = por %p370, %p371
    %p373 = scmp.ne.s32.totalorder %s364, %s365
    %p374 = scmp.eq.s32.totalorder %s39, 0
    %p375 = por %p373, %p374
    %p376 = scmp.ne.s32.totalorder %s364, %s365
    %p377 = scmp.eq.s32.totalorder %s40, 1
    %p378 = por %p376, %p377
    %p380 = scmp.ne.s32.totalorder %s365, %s379
    %p381 = scmp.eq.s32.totalorder %s40, 0
    %p382 = por %p380, %p381
    %s384 = sadd.s32 %s383, 1
    %p387 = scmp.eq.s32.totalorder %s34, 1
    %p388 = scmp.ne.s32.totalorder %s383, %s385
    %p389 = scmp.eq.s32.totalorder %s34, 0
    %p390 = por %p388, %p389
    %p391 = scmp.ne.s32.totalorder %s383, %s385
    %p392 = scmp.eq.s32.totalorder %s39, 1
    %p393 = por %p391, %p392
    %p394 = scmp.ne.s32.totalorder %s385, %s386
    %p395 = scmp.eq.s32.totalorder %s39, 0
    %p396 = por %p394, %p395
    %p397 = scmp.ne.s32.totalorder %s385, %s386
    %p398 = scmp.eq.s32.totalorder %s40, 1
    %p399 = por %p397, %p398
    %p401 = scmp.ne.s32.totalorder %s386, %s400
    %p402 = scmp.eq.s32.totalorder %s40, 0
    %p403 = por %p401, %p402
    %s405 = sadd.s32 %s404, 1
    %p408 = scmp.eq.s32.totalorder %s34, 1
    %p409 = scmp.ne.s32.totalorder %s404, %s406
    %p410 = scmp.eq.s32.totalorder %s34, 0
    %p411 = por %p409, %p410
    %p412 = scmp.ne.s32.totalorder %s404, %s406
    %p413 = scmp.eq.s32.totalorder %s39, 1
    %p414 = por %p412, %p413
    %p415 = scmp.ne.s32.totalorder %s406, %s407
    %p416 = scmp.eq.s32.totalorder %s39, 0
    %p417 = por %p415, %p416
    %p418 = scmp.ne.s32.totalorder %s406, %s407
    %p419 = scmp.eq.s32.totalorder %s40, 1
    %p420 = por %p418, %p419
    %p422 = scmp.ne.s32.totalorder %s407, %s421
    %p423 = scmp.eq.s32.totalorder %s40, 0
    %p424 = por %p422, %p423
    %s426 = sadd.s32 %s425, 1
    %p429 = scmp.eq.s32.totalorder %s34, 1
    %p430 = scmp.ne.s32.totalorder %s425, %s427
    %p431 = scmp.eq.s32.totalorder %s34, 0
    %p432 = por %p430, %p431
    %p433 = scmp.ne.s32.totalorder %s425, %s427
    %p434 = scmp.eq.s32.totalorder %s39, 1
    %p435 = por %p433, %p434
    %p436 = scmp.ne.s32.totalorder %s427, %s428
    %p437 = scmp.eq.s32.totalorder %s39, 0
    %p438 = por %p436, %p437
    %p439 = scmp.ne.s32.totalorder %s427, %s428
    %p440 = scmp.eq.s32.totalorder %s40, 1
    %p441 = por %p439, %p440
    %p443 = scmp.ne.s32.totalorder %s428, %s442
    %p444 = scmp.eq.s32.totalorder %s40, 0
    %p445 = por %p443, %p444
    %s447 = sadd.s32 %s446, 1
    %p450 = scmp.eq.s32.totalorder %s34, 1
    %p451 = scmp.ne.s32.totalorder %s446, %s448
    %p452 = scmp.eq.s32.totalorder %s34, 0
    %p453 = por %p451, %p452
    %p454 = scmp.ne.s32.totalorder %s446, %s448
    %p455 = scmp.eq.s32.totalorder %s39, 1
    %p456 = por %p454, %p455
    %p457 = scmp.ne.s32.totalorder %s448, %s449
    %p458 = scmp.eq.s32.totalorder %s39, 0
    %p459 = por %p457, %p458
    %p460 = scmp.ne.s32.totalorder %s448, %s449
    %p461 = scmp.eq.s32.totalorder %s40, 1
    %p462 = por %p460, %p461
    %p464 = scmp.ne.s32.totalorder %s449, %s463
    %p465 = scmp.eq.s32.totalorder %s40, 0
    %p466 = por %p464, %p465
    %s468 = sadd.s32 %s467, 1
    %p471 = scmp.eq.s32.totalorder %s34, 1
    %p472 = scmp.ne.s32.totalorder %s467, %s469
    %p473 = scmp.eq.s32.totalorder %s34, 0
    %p474 = por %p472, %p473
    %p475 = scmp.ne.s32.totalorder %s467, %s469
    %p476 = scmp.eq.s32.totalorder %s39, 1
    %p477 = por %p475, %p476
    %p478 = scmp.ne.s32.totalorder %s469, %s470
    %p479 = scmp.eq.s32.totalorder %s39, 0
    %p480 = por %p478, %p479
    %p481 = scmp.ne.s32.totalorder %s469, %s470
    %p482 = scmp.eq.s32.totalorder %s40, 1
    %p483 = por %p481, %p482
    %p485 = scmp.ne.s32.totalorder %s470, %s484
    %p486 = scmp.eq.s32.totalorder %s40, 0
    %p487 = por %p485, %p486
    %s489 = sadd.s32 %s488, 1
    %p492 = scmp.eq.s32.totalorder %s34, 1
    %p493 = scmp.ne.s32.totalorder %s488, %s490
    %p494 = scmp.eq.s32.totalorder %s34, 0
    %p495 = por %p493, %p494
    %p496 = scmp.ne.s32.totalorder %s488, %s490
    %p497 = scmp.eq.s32.totalorder %s39, 1
    %p498 = por %p496, %p497
    %p499 = scmp.ne.s32.totalorder %s490, %s491
    %p500 = scmp.eq.s32.totalorder %s39, 0
    %p501 = por %p499, %p500
    %p502 = scmp.ne.s32.totalorder %s490, %s491
    %p503 = scmp.eq.s32.totalorder %s40, 1
    %p504 = por %p502, %p503
    %p506 = scmp.ne.s32.totalorder %s491, %s505
    %p507 = scmp.eq.s32.totalorder %s40, 0
    %p508 = por %p506, %p507
    %s510 = sadd.s32 %s509, 1
    %p513 = scmp.eq.s32.totalorder %s34, 1
    %p514 = scmp.ne.s32.totalorder %s509, %s511
    %p515 = scmp.eq.s32.totalorder %s34, 0
    %p516 = por %p514, %p515
    %p517 = scmp.ne.s32.totalorder %s509, %s511
    %p518 = scmp.eq.s32.totalorder %s39, 1
    %p519 = por %p517, %p518
    %p520 = scmp.ne.s32.totalorder %s511, %s512
    %p521 = scmp.eq.s32.totalorder %s39, 0
    %p522 = por %p520, %p521
    %p523 = scmp.ne.s32.totalorder %s511, %s512
    %p524 = scmp.eq.s32.totalorder %s40, 1
    %p525 = por %p523, %p524
    %p527 = scmp.ne.s32.totalorder %s512, %s526
    %p528 = scmp.eq.s32.totalorder %s40, 0
    %p529 = por %p527, %p528
    %s531 = sadd.s32 %s530, 1
    %p534 = scmp.eq.s32.totalorder %s34, 1
    %p535 = scmp.ne.s32.totalorder %s530, %s532
    %p536 = scmp.eq.s32.totalorder %s34, 0
    %p537 = por %p535, %p536
    %p538 = scmp.ne.s32.totalorder %s530, %s532
    %p539 = scmp.eq.s32.totalorder %s39, 1
    %p540 = por %p538, %p539
    %p541 = scmp.ne.s32.totalorder %s532, %s533
    %p542 = scmp.eq.s32.totalorder %s39, 0
    %p543 = por %p541, %p542
    %p544 = scmp.ne.s32.totalorder %s532, %s533
    %p545 = scmp.eq.s32.totalorder %s40, 1
    %p546 = por %p544, %p545
    %p548 = scmp.ne.s32.totalorder %s533, %s547
    %p549 = scmp.eq.s32.totalorder %s40, 0
    %p550 = por %p548, %p549
    %s552 = sadd.s32 %s551, 1
    %p555 = scmp.eq.s32.totalorder %s34, 1
    %p556 = scmp.ne.s32.totalorder %s551, %s553
    %p557 = scmp.eq.s32.totalorder %s34, 0
    %p558 = por %p556, %p557
    %p559 = scmp.ne.s32.totalorder %s551, %s553
    %p560 = scmp.eq.s32.totalorder %s39, 1
    %p561 = por %p559, %p560
    %p562 = scmp.ne.s32.totalorder %s553, %s554
    %p563 = scmp.eq.s32.totalorder %s39, 0
    %p564 = por %p562, %p563
    %p565 = scmp.ne.s32.totalorder %s553, %s554
    %p566 = scmp.eq.s32.totalorder %s40, 1
    %p567 = por %p565, %p566
    %p569 = scmp.ne.s32.totalorder %s554, %s568
    %p570 = scmp.eq.s32.totalorder %s40, 0
    %p571 = por %p569, %p570
    %s572 = ssub.s32 %s34, %s41
    %p573 = scmp.eq.s32.totalorder %s572, 0
    %s575 = sadd.s32 %s574, 1
    %s576 = scalar_select %p573, %s574, %s575
    %p579 = pneg %p573
    %p580 = scmp.eq.s32.totalorder %s34, 1
    %p581 = por %p579, %p580
    %p582 = scmp.ne.s32.totalorder %s574, %s577
    %p583 = scmp.eq.s32.totalorder %s34, 0
    %p584 = por %p582, %p583
    %p585 = scmp.ne.s32.totalorder %s574, %s577
    %p586 = scmp.eq.s32.totalorder %s39, 1
    %p587 = por %p585, %p586
    %p588 = scmp.ne.s32.totalorder %s577, %s578
    %p589 = scmp.eq.s32.totalorder %s39, 0
    %p590 = por %p588, %p589
    %p591 = scmp.ne.s32.totalorder %s577, %s578
    %p592 = scmp.eq.s32.totalorder %s40, 1
    %p593 = por %p591, %p592
    %p595 = scmp.ne.s32.totalorder %s578, %s594
    %p596 = scmp.eq.s32.totalorder %s40, 0
    %p597 = por %p595, %p596
    %s598 = ssub.s32 %s34, %s41
    %p599 = scmp.eq.s32.totalorder %s598, 0
    %s601 = sadd.s32 %s600, 1
    %s602 = scalar_select %p599, %s600, %s601
    %p605 = pneg %p599
    %p606 = scmp.eq.s32.totalorder %s34, 1
    %p607 = por %p605, %p606
    %p608 = scmp.ne.s32.totalorder %s600, %s603
    %p609 = scmp.eq.s32.totalorder %s34, 0
    %p610 = por %p608, %p609
    %p611 = scmp.ne.s32.totalorder %s600, %s603
    %p612 = scmp.eq.s32.totalorder %s39, 1
    %p613 = por %p611, %p612
    %p614 = scmp.ne.s32.totalorder %s603, %s604
    %p615 = scmp.eq.s32.totalorder %s39, 0
    %p616 = por %p614, %p615
    %p617 = scmp.ne.s32.totalorder %s603, %s604
    %p618 = scmp.eq.s32.totalorder %s40, 1
    %p619 = por %p617, %p618
    %p621 = scmp.ne.s32.totalorder %s604, %s620
    %p622 = scmp.eq.s32.totalorder %s40, 0
    %p623 = por %p621, %p622
    %s624 = ssub.s32 %s34, %s41
    %p625 = scmp.eq.s32.totalorder %s624, 0
    %s627 = sadd.s32 %s626, 1
    %s628 = scalar_select %p625, %s626, %s627
    %p631 = pneg %p625
    %p632 = scmp.eq.s32.totalorder %s34, 1
    %p633 = por %p631, %p632
    %p634 = scmp.ne.s32.totalorder %s626, %s629
    %p635 = scmp.eq.s32.totalorder %s34, 0
    %p636 = por %p634, %p635
    %p637 = scmp.ne.s32.totalorder %s626, %s629
    %p638 = scmp.eq.s32.totalorder %s39, 1
    %p639 = por %p637, %p638
    %p640 = scmp.ne.s32.totalorder %s629, %s630
    %p641 = scmp.eq.s32.totalorder %s39, 0
    %p642 = por %p640, %p641
    %p643 = scmp.ne.s32.totalorder %s629, %s630
    %p644 = scmp.eq.s32.totalorder %s40, 1
    %p645 = por %p643, %p644
    %p647 = scmp.ne.s32.totalorder %s630, %s646
    %p648 = scmp.eq.s32.totalorder %s40, 0
    %p649 = por %p647, %p648
    %p650 = scmp.le.s32.totalorder 1, %s34
    %p651 = scmp.lt.s32.totalorder %s34, 3
    %p652 = pnand %p650, %p651
    %p653 = pneg %p652
    // Predicated region
    $region9: #{autoencoder_forward.1} parent=5 // pred_check
      _
    $region10: #{autoencoder_forward.1} parent=5 // pred_check_branch
      %655 = sbr.rel (%p652) target = $region12
    $region11: #{autoencoder_forward.1} parent=5 // pred_region
      %s656 = ssub.s32 %s34, 1
      // Predicated region
      $region13: #{autoencoder_forward.1} parent=11 // pred_check
        %p657 = pneg %p81
      $region14: #{autoencoder_forward.1} parent=11 // pred_check_branch
        %659 = sbr.rel (%p657) target = $region16
      $region15: #{autoencoder_forward.1} parent=11 // pred_region
        _
      $region16: #{autoencoder_forward.1} parent=11 // pred_fallthru
        _
      // Predicated region
      $region17: #{autoencoder_forward.1} parent=11 // pred_check
        %p660 = pneg %p102
      $region18: #{autoencoder_forward.1} parent=11 // pred_check_branch
        %662 = sbr.rel (%p660) target = $region20
      $region19: #{autoencoder_forward.1} parent=11 // pred_region
        _
      $region20: #{autoencoder_forward.1} parent=11 // pred_fallthru
        _
      // Predicated region
      $region21: #{autoencoder_forward.1} parent=11 // pred_check
        %p663 = pneg %p123
      $region22: #{autoencoder_forward.1} parent=11 // pred_check_branch
        %665 = sbr.rel (%p663) target = $region24
      $region23: #{autoencoder_forward.1} parent=11 // pred_region
        _
      $region24: #{autoencoder_forward.1} parent=11 // pred_fallthru
        _
      // Predicated region
      $region25: #{autoencoder_forward.1} parent=11 // pred_check
        %p666 = pneg %p144
      $region26: #{autoencoder_forward.1} parent=11 // pred_check_branch
        %668 = sbr.rel (%p666) target = $region28
      $region27: #{autoencoder_forward.1} parent=11 // pred_region
        _
      $region28: #{autoencoder_forward.1} parent=11 // pred_fallthru
        _
      // Predicated region
      $region29: #{autoencoder_forward.1} parent=11 // pred_check
        %p669 = pneg %p165
      $region30: #{autoencoder_forward.1} parent=11 // pred_check_branch
        %671 = sbr.rel (%p669) target = $region32
      $region31: #{autoencoder_forward.1} parent=11 // pred_region
        _
      $region32: #{autoencoder_forward.1} parent=11 // pred_fallthru
        _
      // Predicated region
      $region33: #{autoencoder_forward.1} parent=11 // pred_check
        %p672 = pneg %p186
      $region34: #{autoencoder_forward.1} parent=11 // pred_check_branch
        %674 = sbr.rel (%p672) target = $region36
      $region35: #{autoencoder_forward.1} parent=11 // pred_region
        _
      $region36: #{autoencoder_forward.1} parent=11 // pred_fallthru
        _
      // Predicated region
      $region37: #{autoencoder_forward.1} parent=11 // pred_check
        %p675 = pneg %p207
      $region38: #{autoencoder_forward.1} parent=11 // pred_check_branch
        %677 = sbr.rel (%p675) target = $region40
      $region39: #{autoencoder_forward.1} parent=11 // pred_region
        _
      $region40: #{autoencoder_forward.1} parent=11 // pred_fallthru
        _
      // Predicated region
      $region41: #{autoencoder_forward.1} parent=11 // pred_check
        %p678 = pneg %p228
      $region42: #{autoencoder_forward.1} parent=11 // pred_check_branch
        %680 = sbr.rel (%p678) target = $region44
      $region43: #{autoencoder_forward.1} parent=11 // pred_region
        _
      $region44: #{autoencoder_forward.1} parent=11 // pred_fallthru
        _
      // Predicated region
      $region45: #{autoencoder_forward.1} parent=11 // pred_check
        %p681 = pneg %p249
      $region46: #{autoencoder_forward.1} parent=11 // pred_check_branch
        %683 = sbr.rel (%p681) target = $region48
      $region47: #{autoencoder_forward.1} parent=11 // pred_region
        _
      $region48: #{autoencoder_forward.1} parent=11 // pred_fallthru
        _
      // Predicated region
      $region49: #{autoencoder_forward.1} parent=11 // pred_check
        %p684 = pneg %p270
      $region50: #{autoencoder_forward.1} parent=11 // pred_check_branch
        %686 = sbr.rel (%p684) target = $region52
      $region51: #{autoencoder_forward.1} parent=11 // pred_region
        _
      $region52: #{autoencoder_forward.1} parent=11 // pred_fallthru
        _
      // Predicated region
      $region53: #{autoencoder_forward.1} parent=11 // pred_check
        %p687 = pneg %p291
      $region54: #{autoencoder_forward.1} parent=11 // pred_check_branch
        %689 = sbr.rel (%p687) target = $region56
      $region55: #{autoencoder_forward.1} parent=11 // pred_region
        _
      $region56: #{autoencoder_forward.1} parent=11 // pred_fallthru
        _
      // Predicated region
      $region57: #{autoencoder_forward.1} parent=11 // pred_check
        %p690 = pneg %p312
      $region58: #{autoencoder_forward.1} parent=11 // pred_check_branch
        %692 = sbr.rel (%p690) target = $region60
      $region59: #{autoencoder_forward.1} parent=11 // pred_region
        _
      $region60: #{autoencoder_forward.1} parent=11 // pred_fallthru
        _
      // Predicated region
      $region61: #{autoencoder_forward.1} parent=11 // pred_check
        %p693 = pneg %p333
      $region62: #{autoencoder_forward.1} parent=11 // pred_check_branch
        %695 = sbr.rel (%p693) target = $region64
      $region63: #{autoencoder_forward.1} parent=11 // pred_region
        _
      $region64: #{autoencoder_forward.1} parent=11 // pred_fallthru
        _
      // Predicated region
      $region65: #{autoencoder_forward.1} parent=11 // pred_check
        %p696 = pneg %p354
      $region66: #{autoencoder_forward.1} parent=11 // pred_check_branch
        %698 = sbr.rel (%p696) target = $region68
      $region67: #{autoencoder_forward.1} parent=11 // pred_region
        _
      $region68: #{autoencoder_forward.1} parent=11 // pred_fallthru
        _
      // Predicated region
      $region69: #{autoencoder_forward.1} parent=11 // pred_check
        %p699 = pneg %p375
      $region70: #{autoencoder_forward.1} parent=11 // pred_check_branch
        %701 = sbr.rel (%p699) target = $region72
      $region71: #{autoencoder_forward.1} parent=11 // pred_region
        _
      $region72: #{autoencoder_forward.1} parent=11 // pred_fallthru
        _
      // Predicated region
      $region73: #{autoencoder_forward.1} parent=11 // pred_check
        %p702 = pneg %p396
      $region74: #{autoencoder_forward.1} parent=11 // pred_check_branch
        %704 = sbr.rel (%p702) target = $region76
      $region75: #{autoencoder_forward.1} parent=11 // pred_region
        _
      $region76: #{autoencoder_forward.1} parent=11 // pred_fallthru
        _
      // Predicated region
      $region77: #{autoencoder_forward.1} parent=11 // pred_check
        %p705 = pneg %p417
      $region78: #{autoencoder_forward.1} parent=11 // pred_check_branch
        %707 = sbr.rel (%p705) target = $region80
      $region79: #{autoencoder_forward.1} parent=11 // pred_region
        _
      $region80: #{autoencoder_forward.1} parent=11 // pred_fallthru
        _
      // Predicated region
      $region81: #{autoencoder_forward.1} parent=11 // pred_check
        %p708 = pneg %p438
      $region82: #{autoencoder_forward.1} parent=11 // pred_check_branch
        %710 = sbr.rel (%p708) target = $region84
      $region83: #{autoencoder_forward.1} parent=11 // pred_region
        _
      $region84: #{autoencoder_forward.1} parent=11 // pred_fallthru
        _
      // Predicated region
      $region85: #{autoencoder_forward.1} parent=11 // pred_check
        %p711 = pneg %p459
      $region86: #{autoencoder_forward.1} parent=11 // pred_check_branch
        %713 = sbr.rel (%p711) target = $region88
      $region87: #{autoencoder_forward.1} parent=11 // pred_region
        _
      $region88: #{autoencoder_forward.1} parent=11 // pred_fallthru
        _
      // Predicated region
      $region89: #{autoencoder_forward.1} parent=11 // pred_check
        %p714 = pneg %p480
      $region90: #{autoencoder_forward.1} parent=11 // pred_check_branch
        %716 = sbr.rel (%p714) target = $region92
      $region91: #{autoencoder_forward.1} parent=11 // pred_region
        _
      $region92: #{autoencoder_forward.1} parent=11 // pred_fallthru
        _
      // Predicated region
      $region93: #{autoencoder_forward.1} parent=11 // pred_check
        %p717 = pneg %p501
      $region94: #{autoencoder_forward.1} parent=11 // pred_check_branch
        %719 = sbr.rel (%p717) target = $region96
      $region95: #{autoencoder_forward.1} parent=11 // pred_region
        _
      $region96: #{autoencoder_forward.1} parent=11 // pred_fallthru
        _
      // Predicated region
      $region97: #{autoencoder_forward.1} parent=11 // pred_check
        %p720 = pneg %p522
      $region98: #{autoencoder_forward.1} parent=11 // pred_check_branch
        %722 = sbr.rel (%p720) target = $region100
      $region99: #{autoencoder_forward.1} parent=11 // pred_region
        _
      $region100: #{autoencoder_forward.1} parent=11 // pred_fallthru
        _
      // Predicated region
      $region101: #{autoencoder_forward.1} parent=11 // pred_check
        %p723 = pneg %p543
      $region102: #{autoencoder_forward.1} parent=11 // pred_check_branch
        %725 = sbr.rel (%p723) target = $region104
      $region103: #{autoencoder_forward.1} parent=11 // pred_region
        _
      $region104: #{autoencoder_forward.1} parent=11 // pred_fallthru
        _
      // Predicated region
      $region105: #{autoencoder_forward.1} parent=11 // pred_check
        %p726 = pneg %p564
      $region106: #{autoencoder_forward.1} parent=11 // pred_check_branch
        %728 = sbr.rel (%p726) target = $region108
      $region107: #{autoencoder_forward.1} parent=11 // pred_region
        _
      $region108: #{autoencoder_forward.1} parent=11 // pred_fallthru
        _
    $region12: #{autoencoder_forward.1} parent=5 // pred_fallthru
      _
    %p729 = scmp.lt.s32.totalorder %s34, 2
    // Predicated region
    $region109: #{autoencoder_forward.1} parent=5 // pred_check
      %p730 = pneg %p729
    $region110: #{autoencoder_forward.1} parent=5 // pred_check_branch
      %732 = sbr.rel (%p730) target = $region112
    $region111: #{autoencoder_forward.1} parent=5 // pred_region
      // Predicated region
      $region113: #{autoencoder_forward.1} parent=111 // pred_check
        %p733 = pneg %p54
      $region114: #{autoencoder_forward.1} parent=111 // pred_check_branch
        %735 = sbr.rel (%p733) target = $region116
      $region115: #{autoencoder_forward.1} parent=111 // pred_region
        %s736 = smul.u32 4, %s34
        %p737 = scmp.lt.s32.totalorder %s736, 7
        %s738 = scalar_select %p737, %s736, 7
        %s739 = smul.addr %s738, 8
        %s740 = scalar_lea.vmem %s0, %s739
        %s741 = smul.u32 4, %s34
      $region116: #{autoencoder_forward.1} parent=111 // pred_fallthru
        _
    $region112: #{autoencoder_forward.1} parent=5 // pred_fallthru
      _
    %p742 = scmp.le.s32.totalorder 1, %s34
    %p743 = scmp.lt.s32.totalorder %s34, 3
    %p744 = pnand %p742, %p743
    %p745 = pneg %p744
    // Predicated region
    $region117: #{autoencoder_forward.1} parent=5 // pred_check
      _
    $region118: #{autoencoder_forward.1} parent=5 // pred_check_branch
      %747 = sbr.rel (%p744) target = $region120
    $region119: #{autoencoder_forward.1} parent=5 // pred_region
      %s748 = ssub.s32 %s34, 1
      %s749 = smul.u32 4, %s39
      %p750 = scmp.lt.s32.totalorder %s749, 7
      %s751 = scalar_select %p750, %s749, 7
      %s752 = smul.addr %s751, 8
      %s753 = scalar_lea.vmem %s0, %s752
      %p754 = pneg %p60
      %p755 = pneg %p57
      %p756 = pneg %p81
      %p757 = pneg %p78
      %p758 = pneg %p102
      %p759 = pneg %p99
      %p760 = pneg %p123
      %p761 = pneg %p120
      %p762 = pneg %p144
      %p763 = pneg %p141
      %p764 = pneg %p165
      %p765 = pneg %p162
      %p766 = pneg %p186
      %p767 = pneg %p183
      %p768 = pneg %p207
      %p769 = pneg %p204
      %p770 = pneg %p228
      %p771 = pneg %p225
      %p772 = pneg %p249
      %p773 = pneg %p246
      %p774 = pneg %p270
      %p775 = pneg %p267
      %p776 = pneg %p291
      %p777 = pneg %p288
      %p778 = pneg %p312
      %p779 = pneg %p309
      %p780 = pneg %p333
      %p781 = pneg %p330
      %p782 = pneg %p354
      %p783 = pneg %p351
      %p784 = pneg %p375
      %p785 = pneg %p372
      %p786 = pneg %p396
      %p787 = pneg %p393
      %p788 = pneg %p417
      %p789 = pneg %p414
      %p790 = pneg %p438
      %p791 = pneg %p435
      %p792 = pneg %p459
      %p793 = pneg %p456
      %p794 = pneg %p480
      %p795 = pneg %p477
      %p796 = pneg %p501
      %p797 = pneg %p498
      %p798 = pneg %p522
      %p799 = pneg %p519
      %p800 = pneg %p543
      %p801 = pneg %p540
      %p802 = pneg %p564
      %p803 = pneg %p561
      %p804 = pneg %p590
      %p805 = pneg %p587
      %s806 = smul.u32 4, %s39
      %p807 = scmp.lt.s32.totalorder %s806, 7
      %s808 = scalar_select %p807, %s806, 7
      %s809 = smul.addr %s808, 8
      %s810 = scalar_lea.vmem %s25, %s809
      %p811 = pneg %p616
      %p812 = pneg %p613
      %s813 = smul.u32 4, %s39
      %p814 = scmp.lt.s32.totalorder %s813, 7
      %s815 = scalar_select %p814, %s813, 7
      %s816 = smul.addr %s815, 8
      %s817 = scalar_lea.vmem %s26, %s816
      %p818 = pneg %p642
      %p819 = pneg %p639
      %s820 = smul.u32 4, %s39
      %p821 = scmp.lt.s32.totalorder %s820, 7
      %s822 = scalar_select %p821, %s820, 7
      %s823 = smul.addr %s822, 26
      %s824 = smul.addr %s823, 2
      %s825 = scalar_lea.vmem %s27, %s824
      %s826 = smul.u32 4, %s39
      %p827 = scmp.lt.s32.totalorder %s826, 7
      %s828 = scalar_select %p827, %s826, 7
      %s829 = smul.addr %s828, 8
      %s830 = scalar_lea.vmem %s0, %s829
      %s831 = smul.u32 4, %s39
      %s832 = smul.u32 4, %s39
      %p833 = scmp.lt.s32.totalorder %s832, 7
      %s834 = scalar_select %p833, %s832, 7
      %s835 = smul.addr %s834, 8
      %s836 = scalar_lea.vmem %s25, %s835
      %s837 = smul.u32 4, %s39
      %s838 = smul.u32 4, %s39
      %p839 = scmp.lt.s32.totalorder %s838, 7
      %s840 = scalar_select %p839, %s838, 7
      %s841 = smul.addr %s840, 8
      %s842 = scalar_lea.vmem %s26, %s841
      %s843 = smul.u32 4, %s39
      %s844 = smul.u32 4, %s39
      %p845 = scmp.lt.s32.totalorder %s844, 7
      %s846 = scalar_select %p845, %s844, 7
      %s847 = smul.addr %s846, 26
      %s848 = smul.addr %s847, 2
      %s849 = scalar_lea.vmem %s27, %s848
      %s850 = smul.u32 4, %s39
      %v854 = vld [vmem:[%s830] sm:$0xff]
      %v855 = vld [vmem:[%s830 + $0x8] sm:$0xff]
      %v856 = vld [vmem:[%s830 + $0x10] sm:$0xff]
      %v857 = vld [vmem:[%s830 + $0x18] sm:$0xff]
      %v858 = vld [vmem:[%s1] sm:$0x77]
      %v859 = vld [vmem:[%s1 + $0x8] sm:$0x77]
      %v860 = vld [vmem:[%s1 + $0x10] sm:$0x77]
      %v861 = vld [vmem:[%s2] sm:$0x3f]
      %863 = vset.pattern.permute.xlu0 0
      %864 = vperm.xlu0 %863, %v854
      %v865 = vpop.permute.xlu0 %864
      %868 = vset.pattern.permute.xlu0 0
      %869 = vperm.xlu0 %868, %v855
      %v870 = vpop.permute.xlu0 %869
      %873 = vset.pattern.permute.xlu0 0
      %874 = vperm.xlu0 %873, %v856
      %v875 = vpop.permute.xlu0 %874
      %878 = vset.pattern.permute.xlu0 0
      %879 = vperm.xlu0 %878, %v857
      %v880 = vpop.permute.xlu0 %879
      %v885 = vlaneseq
      %v886 = vshrl.u32 %v885, 7
      %v887 = vsub.s32 0, %v886
      %v888 = vrot.slane %v858, %v887
      %v889 = vlaneseq
      %v890 = vshrl.u32 %v889, 7
      %v891 = vsub.s32 4, %v890
      %v892 = vrot.slane %v858, %v891
      %v893 = vlaneseq
      %v894 = vshrl.u32 %v893, 7
      %v895 = vsub.s32 0, %v894
      %v896 = vrot.slane %v859, %v895
      %v897 = vlaneseq
      %v898 = vshrl.u32 %v897, 7
      %v899 = vsub.s32 4, %v898
      %v900 = vrot.slane %v859, %v899
      %v901 = vlaneseq
      %v902 = vshrl.u32 %v901, 7
      %v903 = vsub.s32 0, %v902
      %v904 = vrot.slane %v860, %v903
      %v905 = vlaneseq
      %v906 = vshrl.u32 %v905, 7
      %v907 = vsub.s32 4, %v906
      %v908 = vrot.slane %v860, %v907
      %v915 = vlaneseq
      %v916 = vshrl.u32 %v915, 7
      %v917 = vsub.s32 0, %v916
      %v918 = vrot.slane %v888, %v917
      %v919 = vlaneseq
      %v920 = vshrl.u32 %v919, 7
      %v921 = vsub.s32 0, %v920
      %v922 = vrot.slane %v892, %v921
      %v923 = vlaneseq
      %v924 = vshrl.u32 %v923, 7
      %v925 = vsub.s32 0, %v924
      %v926 = vrot.slane %v896, %v925
      %v927 = vlaneseq
      %v928 = vshrl.u32 %v927, 7
      %v929 = vsub.s32 0, %v928
      %v930 = vrot.slane %v900, %v929
      %v931 = vlaneseq
      %v932 = vshrl.u32 %v931, 7
      %v933 = vsub.s32 0, %v932
      %v934 = vrot.slane %v904, %v933
      %v935 = vlaneseq
      %v936 = vshrl.u32 %v935, 7
      %v937 = vsub.s32 0, %v936
      %v938 = vrot.slane %v908, %v937
      %v939 = vmul.f32 %v865, %v918
      %v940 = vmul.f32 %v865, %v922
      %v941 = vmul.f32 %v865, %v926
      %v942 = vmul.f32 %v865, %v930
      %v943 = vmul.f32 %v865, %v934
      %v944 = vmul.f32 %v865, %v938
      %v945 = vmul.f32 %v870, %v918
      %v946 = vmul.f32 %v870, %v922
      %v947 = vmul.f32 %v870, %v926
      %v948 = vmul.f32 %v870, %v930
      %v949 = vmul.f32 %v870, %v934
      %v950 = vmul.f32 %v870, %v938
      %v951 = vmul.f32 %v875, %v918
      %v952 = vmul.f32 %v875, %v922
      %v953 = vmul.f32 %v875, %v926
      %v954 = vmul.f32 %v875, %v930
      %v955 = vmul.f32 %v875, %v934
      %v956 = vmul.f32 %v875, %v938
      %v957 = vmul.f32 %v880, %v918
      %v958 = vmul.f32 %v880, %v922
      %v959 = vmul.f32 %v880, %v926
      %v960 = vmul.f32 %v880, %v930
      %v961 = vmul.f32 %v880, %v934
      %v962 = vmul.f32 %v880, %v938
      %v964 = vlaneseq
      %v965 = vshrl.u32 %v964, 7
      %v966 = vsub.s32 0, %v965
      %v967 = vrot.slane %v861, %v966
      %v968 = vlaneseq
      %v969 = vshrl.u32 %v968, 7
      %v970 = vsub.s32 1, %v969
      %v971 = vrot.slane %v861, %v970
      %v972 = vlaneseq
      %v973 = vshrl.u32 %v972, 7
      %v974 = vsub.s32 2, %v973
      %v975 = vrot.slane %v861, %v974
      %v976 = vlaneseq
      %v977 = vshrl.u32 %v976, 7
      %v978 = vsub.s32 3, %v977
      %v979 = vrot.slane %v861, %v978
      %v980 = vlaneseq
      %v981 = vshrl.u32 %v980, 7
      %v982 = vsub.s32 4, %v981
      %v983 = vrot.slane %v861, %v982
      %v984 = vlaneseq
      %v985 = vshrl.u32 %v984, 7
      %v986 = vsub.s32 5, %v985
      %v987 = vrot.slane %v861, %v986
      %v994 = vadd.f32 %v939, %v967
      %v995 = vadd.f32 %v940, %v971
      %v996 = vadd.f32 %v941, %v975
      %v997 = vadd.f32 %v942, %v979
      %v998 = vadd.f32 %v943, %v983
      %v999 = vadd.f32 %v944, %v987
      %v1000 = vadd.f32 %v945, %v967
      %v1001 = vadd.f32 %v946, %v971
      %v1002 = vadd.f32 %v947, %v975
      %v1003 = vadd.f32 %v948, %v979
      %v1004 = vadd.f32 %v949, %v983
      %v1005 = vadd.f32 %v950, %v987
      %v1006 = vadd.f32 %v951, %v967
      %v1007 = vadd.f32 %v952, %v971
      %v1008 = vadd.f32 %v953, %v975
      %v1009 = vadd.f32 %v954, %v979
      %v1010 = vadd.f32 %v955, %v983
      %v1011 = vadd.f32 %v956, %v987
      %v1012 = vadd.f32 %v957, %v967
      %v1013 = vadd.f32 %v958, %v971
      %v1014 = vadd.f32 %v959, %v975
      %v1015 = vadd.f32 %v960, %v979
      %v1016 = vadd.f32 %v961, %v983
      %v1017 = vadd.f32 %v962, %v987
      %1018 = vset.pattern.permute.xlu0 1
      %1019 = vperm.xlu0 %1018, %v854
      %v1020 = vpop.permute.xlu0 %1019
      %1022 = vset.pattern.permute.xlu0 1
      %1023 = vperm.xlu0 %1022, %v855
      %v1024 = vpop.permute.xlu0 %1023
      %1026 = vset.pattern.permute.xlu0 1
      %1027 = vperm.xlu0 %1026, %v856
      %v1028 = vpop.permute.xlu0 %1027
      %1030 = vset.pattern.permute.xlu0 1
      %1031 = vperm.xlu0 %1030, %v857
      %v1032 = vpop.permute.xlu0 %1031
      %v1034 = vlaneseq
      %v1035 = vshrl.u32 %v1034, 7
      %v1036 = vsub.s32 1, %v1035
      %v1037 = vrot.slane %v858, %v1036
      %v1038 = vlaneseq
      %v1039 = vshrl.u32 %v1038, 7
      %v1040 = vsub.s32 5, %v1039
      %v1041 = vrot.slane %v858, %v1040
      %v1042 = vlaneseq
      %v1043 = vshrl.u32 %v1042, 7
      %v1044 = vsub.s32 1, %v1043
      %v1045 = vrot.slane %v859, %v1044
      %v1046 = vlaneseq
      %v1047 = vshrl.u32 %v1046, 7
      %v1048 = vsub.s32 5, %v1047
      %v1049 = vrot.slane %v859, %v1048
      %v1050 = vlaneseq
      %v1051 = vshrl.u32 %v1050, 7
      %v1052 = vsub.s32 1, %v1051
      %v1053 = vrot.slane %v860, %v1052
      %v1054 = vlaneseq
      %v1055 = vshrl.u32 %v1054, 7
      %v1056 = vsub.s32 5, %v1055
      %v1057 = vrot.slane %v860, %v1056
      %v1064 = vlaneseq
      %v1065 = vshrl.u32 %v1064, 7
      %v1066 = vsub.s32 1, %v1065
      %v1067 = vrot.slane %v1037, %v1066
      %v1068 = vlaneseq
      %v1069 = vshrl.u32 %v1068, 7
      %v1070 = vsub.s32 1, %v1069
      %v1071 = vrot.slane %v1041, %v1070
      %v1072 = vlaneseq
      %v1073 = vshrl.u32 %v1072, 7
      %v1074 = vsub.s32 1, %v1073
      %v1075 = vrot.slane %v1045, %v1074
      %v1076 = vlaneseq
      %v1077 = vshrl.u32 %v1076, 7
      %v1078 = vsub.s32 1, %v1077
      %v1079 = vrot.slane %v1049, %v1078
      %v1080 = vlaneseq
      %v1081 = vshrl.u32 %v1080, 7
      %v1082 = vsub.s32 1, %v1081
      %v1083 = vrot.slane %v1053, %v1082
      %v1084 = vlaneseq
      %v1085 = vshrl.u32 %v1084, 7
      %v1086 = vsub.s32 1, %v1085
      %v1087 = vrot.slane %v1057, %v1086
      %v1088 = vmul.f32 %v1020, %v1067
      %v1089 = vmul.f32 %v1020, %v1071
      %v1090 = vmul.f32 %v1020, %v1075
      %v1091 = vmul.f32 %v1020, %v1079
      %v1092 = vmul.f32 %v1020, %v1083
      %v1093 = vmul.f32 %v1020, %v1087
      %v1094 = vmul.f32 %v1024, %v1067
      %v1095 = vmul.f32 %v1024, %v1071
      %v1096 = vmul.f32 %v1024, %v1075
      %v1097 = vmul.f32 %v1024, %v1079
      %v1098 = vmul.f32 %v1024, %v1083
      %v1099 = vmul.f32 %v1024, %v1087
      %v1100 = vmul.f32 %v1028, %v1067
      %v1101 = vmul.f32 %v1028, %v1071
      %v1102 = vmul.f32 %v1028, %v1075
      %v1103 = vmul.f32 %v1028, %v1079
      %v1104 = vmul.f32 %v1028, %v1083
      %v1105 = vmul.f32 %v1028, %v1087
      %v1106 = vmul.f32 %v1032, %v1067
      %v1107 = vmul.f32 %v1032, %v1071
      %v1108 = vmul.f32 %v1032, %v1075
      %v1109 = vmul.f32 %v1032, %v1079
      %v1110 = vmul.f32 %v1032, %v1083
      %v1111 = vmul.f32 %v1032, %v1087
      %v1112 = vadd.f32 %v994, %v1088
      %v1113 = vadd.f32 %v995, %v1089
      %v1114 = vadd.f32 %v996, %v1090
      %v1115 = vadd.f32 %v997, %v1091
      %v1116 = vadd.f32 %v998, %v1092
      %v1117 = vadd.f32 %v999, %v1093
      %v1118 = vadd.f32 %v1000, %v1094
      %v1119 = vadd.f32 %v1001, %v1095
      %v1120 = vadd.f32 %v1002, %v1096
      %v1121 = vadd.f32 %v1003, %v1097
      %v1122 = vadd.f32 %v1004, %v1098
      %v1123 = vadd.f32 %v1005, %v1099
      %v1124 = vadd.f32 %v1006, %v1100
      %v1125 = vadd.f32 %v1007, %v1101
      %v1126 = vadd.f32 %v1008, %v1102
      %v1127 = vadd.f32 %v1009, %v1103
      %v1128 = vadd.f32 %v1010, %v1104
      %v1129 = vadd.f32 %v1011, %v1105
      %v1130 = vadd.f32 %v1012, %v1106
      %v1131 = vadd.f32 %v1013, %v1107
      %v1132 = vadd.f32 %v1014, %v1108
      %v1133 = vadd.f32 %v1015, %v1109
      %v1134 = vadd.f32 %v1016, %v1110
      %v1135 = vadd.f32 %v1017, %v1111
      %1136 = vset.pattern.permute.xlu0 2
      %1137 = vperm.xlu0 %1136, %v854
      %v1138 = vpop.permute.xlu0 %1137
      %1140 = vset.pattern.permute.xlu0 2
      %1141 = vperm.xlu0 %1140, %v855
      %v1142 = vpop.permute.xlu0 %1141
      %1144 = vset.pattern.permute.xlu0 2
      %1145 = vperm.xlu0 %1144, %v856
      %v1146 = vpop.permute.xlu0 %1145
      %1148 = vset.pattern.permute.xlu0 2
      %1149 = vperm.xlu0 %1148, %v857
      %v1150 = vpop.permute.xlu0 %1149
      %v1152 = vlaneseq
      %v1153 = vshrl.u32 %v1152, 7
      %v1154 = vsub.s32 2, %v1153
      %v1155 = vrot.slane %v858, %v1154
      %v1156 = vlaneseq
      %v1157 = vshrl.u32 %v1156, 7
      %v1158 = vsub.s32 6, %v1157
      %v1159 = vrot.slane %v858, %v1158
      %v1160 = vlaneseq
      %v1161 = vshrl.u32 %v1160, 7
      %v1162 = vsub.s32 2, %v1161
      %v1163 = vrot.slane %v859, %v1162
      %v1164 = vlaneseq
      %v1165 = vshrl.u32 %v1164, 7
      %v1166 = vsub.s32 6, %v1165
      %v1167 = vrot.slane %v859, %v1166
      %v1168 = vlaneseq
      %v1169 = vshrl.u32 %v1168, 7
      %v1170 = vsub.s32 2, %v1169
      %v1171 = vrot.slane %v860, %v1170
      %v1172 = vlaneseq
      %v1173 = vshrl.u32 %v1172, 7
      %v1174 = vsub.s32 6, %v1173
      %v1175 = vrot.slane %v860, %v1174
      %v1182 = vlaneseq
      %v1183 = vshrl.u32 %v1182, 7
      %v1184 = vsub.s32 2, %v1183
      %v1185 = vrot.slane %v1155, %v1184
      %v1186 = vlaneseq
      %v1187 = vshrl.u32 %v1186, 7
      %v1188 = vsub.s32 2, %v1187
      %v1189 = vrot.slane %v1159, %v1188
      %v1190 = vlaneseq
      %v1191 = vshrl.u32 %v1190, 7
      %v1192 = vsub.s32 2, %v1191
      %v1193 = vrot.slane %v1163, %v1192
      %v1194 = vlaneseq
      %v1195 = vshrl.u32 %v1194, 7
      %v1196 = vsub.s32 2, %v1195
      %v1197 = vrot.slane %v1167, %v1196
      %v1198 = vlaneseq
      %v1199 = vshrl.u32 %v1198, 7
      %v1200 = vsub.s32 2, %v1199
      %v1201 = vrot.slane %v1171, %v1200
      %v1202 = vlaneseq
      %v1203 = vshrl.u32 %v1202, 7
      %v1204 = vsub.s32 2, %v1203
      %v1205 = vrot.slane %v1175, %v1204
      %v1206 = vmul.f32 %v1138, %v1185
      %v1207 = vmul.f32 %v1138, %v1189
      %v1208 = vmul.f32 %v1138, %v1193
      %v1209 = vmul.f32 %v1138, %v1197
      %v1210 = vmul.f32 %v1138, %v1201
      %v1211 = vmul.f32 %v1138, %v1205
      %v1212 = vmul.f32 %v1142, %v1185
      %v1213 = vmul.f32 %v1142, %v1189
      %v1214 = vmul.f32 %v1142, %v1193
      %v1215 = vmul.f32 %v1142, %v1197
      %v1216 = vmul.f32 %v1142, %v1201
      %v1217 = vmul.f32 %v1142, %v1205
      %v1218 = vmul.f32 %v1146, %v1185
      %v1219 = vmul.f32 %v1146, %v1189
      %v1220 = vmul.f32 %v1146, %v1193
      %v1221 = vmul.f32 %v1146, %v1197
      %v1222 = vmul.f32 %v1146, %v1201
      %v1223 = vmul.f32 %v1146, %v1205
      %v1224 = vmul.f32 %v1150, %v1185
      %v1225 = vmul.f32 %v1150, %v1189
      %v1226 = vmul.f32 %v1150, %v1193
      %v1227 = vmul.f32 %v1150, %v1197
      %v1228 = vmul.f32 %v1150, %v1201
      %v1229 = vmul.f32 %v1150, %v1205
      %v1230 = vadd.f32 %v1112, %v1206
      %v1231 = vadd.f32 %v1113, %v1207
      %v1232 = vadd.f32 %v1114, %v1208
      %v1233 = vadd.f32 %v1115, %v1209
      %v1234 = vadd.f32 %v1116, %v1210
      %v1235 = vadd.f32 %v1117, %v1211
      %v1236 = vadd.f32 %v1118, %v1212
      %v1237 = vadd.f32 %v1119, %v1213
      %v1238 = vadd.f32 %v1120, %v1214
      %v1239 = vadd.f32 %v1121, %v1215
      %v1240 = vadd.f32 %v1122, %v1216
      %v1241 = vadd.f32 %v1123, %v1217
      %v1242 = vadd.f32 %v1124, %v1218
      %v1243 = vadd.f32 %v1125, %v1219
      %v1244 = vadd.f32 %v1126, %v1220
      %v1245 = vadd.f32 %v1127, %v1221
      %v1246 = vadd.f32 %v1128, %v1222
      %v1247 = vadd.f32 %v1129, %v1223
      %v1248 = vadd.f32 %v1130, %v1224
      %v1249 = vadd.f32 %v1131, %v1225
      %v1250 = vadd.f32 %v1132, %v1226
      %v1251 = vadd.f32 %v1133, %v1227
      %v1252 = vadd.f32 %v1134, %v1228
      %v1253 = vadd.f32 %v1135, %v1229
      %vm1254 = vcmp.ge.f32.partialorder %v1230, 0.0
      %vm1255 = vcmp.ge.f32.partialorder %v1231, 0.0
      %vm1256 = vcmp.ge.f32.partialorder %v1232, 0.0
      %vm1257 = vcmp.ge.f32.partialorder %v1233, 0.0
      %vm1258 = vcmp.ge.f32.partialorder %v1234, 0.0
      %vm1259 = vcmp.ge.f32.partialorder %v1235, 0.0
      %vm1260 = vcmp.ge.f32.partialorder %v1236, 0.0
      %vm1261 = vcmp.ge.f32.partialorder %v1237, 0.0
      %vm1262 = vcmp.ge.f32.partialorder %v1238, 0.0
      %vm1263 = vcmp.ge.f32.partialorder %v1239, 0.0
      %vm1264 = vcmp.ge.f32.partialorder %v1240, 0.0
      %vm1265 = vcmp.ge.f32.partialorder %v1241, 0.0
      %vm1266 = vcmp.ge.f32.partialorder %v1242, 0.0
      %vm1267 = vcmp.ge.f32.partialorder %v1243, 0.0
      %vm1268 = vcmp.ge.f32.partialorder %v1244, 0.0
      %vm1269 = vcmp.ge.f32.partialorder %v1245, 0.0
      %vm1270 = vcmp.ge.f32.partialorder %v1246, 0.0
      %vm1271 = vcmp.ge.f32.partialorder %v1247, 0.0
      %vm1272 = vcmp.ge.f32.partialorder %v1248, 0.0
      %vm1273 = vcmp.ge.f32.partialorder %v1249, 0.0
      %vm1274 = vcmp.ge.f32.partialorder %v1250, 0.0
      %vm1275 = vcmp.ge.f32.partialorder %v1251, 0.0
      %vm1276 = vcmp.ge.f32.partialorder %v1252, 0.0
      %vm1277 = vcmp.ge.f32.partialorder %v1253, 0.0
      %vm1278 = vmpackc.low %vm1260, %vm1254
      %vm1279 = vmpackc.low %vm1272, %vm1266
      %vm1280 = vmpackc.even %vm1279, %vm1278
      %vm1281 = vmpackc.low %vm1261, %vm1255
      %vm1282 = vmpackc.low %vm1273, %vm1267
      %vm1283 = vmpackc.even %vm1282, %vm1281
      %vm1284 = vmpackc.low %vm1262, %vm1256
      %vm1285 = vmpackc.low %vm1274, %vm1268
      %vm1286 = vmpackc.even %vm1285, %vm1284
      %vm1287 = vmpackc.low %vm1263, %vm1257
      %vm1288 = vmpackc.low %vm1275, %vm1269
      %vm1289 = vmpackc.even %vm1288, %vm1287
      %vm1290 = vmpackc.low %vm1264, %vm1258
      %vm1291 = vmpackc.low %vm1276, %vm1270
      %vm1292 = vmpackc.even %vm1291, %vm1290
      %vm1293 = vmpackc.low %vm1265, %vm1259
      %vm1294 = vmpackc.low %vm1277, %vm1271
      %vm1295 = vmpackc.even %vm1294, %vm1293
      %v1296 = vsel %vm1280, 16843009, 0
      %v1297 = vsel %vm1283, 16843009, 0
      %v1298 = vsel %vm1286, 16843009, 0
      %v1299 = vsel %vm1289, 16843009, 0
      %v1300 = vsel %vm1292, 16843009, 0
      %v1301 = vsel %vm1295, 16843009, 0
      %v1302 = vunpack.c.0.s8 %v1296
      %v1303 = vunpack.c.0.s8 %v1297
      %v1304 = vunpack.c.0.s8 %v1298
      %v1305 = vunpack.c.0.s8 %v1299
      %v1306 = vunpack.c.0.s8 %v1300
      %v1307 = vunpack.c.0.s8 %v1301
      %v1308 = vunpack.c.1.s8 %v1296
      %v1309 = vunpack.c.1.s8 %v1297
      %v1310 = vunpack.c.1.s8 %v1298
      %v1311 = vunpack.c.1.s8 %v1299
      %v1312 = vunpack.c.1.s8 %v1300
      %v1313 = vunpack.c.1.s8 %v1301
      %v1314 = vunpack.c.2.s8 %v1296
      %v1315 = vunpack.c.2.s8 %v1297
      %v1316 = vunpack.c.2.s8 %v1298
      %v1317 = vunpack.c.2.s8 %v1299
      %v1318 = vunpack.c.2.s8 %v1300
      %v1319 = vunpack.c.2.s8 %v1301
      %v1320 = vunpack.c.3.s8 %v1296
      %v1321 = vunpack.c.3.s8 %v1297
      %v1322 = vunpack.c.3.s8 %v1298
      %v1323 = vunpack.c.3.s8 %v1299
      %v1324 = vunpack.c.3.s8 %v1300
      %v1325 = vunpack.c.3.s8 %v1301
      %v1326 = vpack.c.b16 %v1303, %v1302
      %v1327 = vpack.c.b16 %v1305, %v1304
      %v1328 = vpack.c.b8 %v1327, %v1326
      %v1329 = vpack.c.b16 %v1307, %v1306
      %v1330 = vpack.c.b8 %v1329, %v1329
      %v1331 = vpack.c.b16 %v1309, %v1308
      %v1332 = vpack.c.b16 %v1311, %v1310
      %v1333 = vpack.c.b8 %v1332, %v1331
      %v1334 = vpack.c.b16 %v1313, %v1312
      %v1335 = vpack.c.b8 %v1334, %v1334
      %v1336 = vpack.c.b16 %v1315, %v1314
      %v1337 = vpack.c.b16 %v1317, %v1316
      %v1338 = vpack.c.b8 %v1337, %v1336
      %v1339 = vpack.c.b16 %v1319, %v1318
      %v1340 = vpack.c.b8 %v1339, %v1339
      %v1341 = vpack.c.b16 %v1321, %v1320
      %v1342 = vpack.c.b16 %v1323, %v1322
      %v1343 = vpack.c.b8 %v1342, %v1341
      %v1344 = vpack.c.b16 %v1325, %v1324
      %v1345 = vpack.c.b8 %v1344, %v1344
      %1346 = vst [vmem:[%s849] sm:$0xff] %v1328
      %1347 = vst [vmem:[%s849 + $0x8] sm:$0xf] %v1330
      %1348 = vst [vmem:[%s849 + $0x34] sm:$0xff] %v1333
      %1349 = vst [vmem:[%s849 + $0x3c] sm:$0xf] %v1335
      %1350 = vst [vmem:[%s849 + $0x68] sm:$0xff] %v1338
      %1351 = vst [vmem:[%s849 + $0x70] sm:$0xf] %v1340
      %1352 = vst [vmem:[%s849 + $0x9c] sm:$0xff] %v1343
      %1353 = vst [vmem:[%s849 + $0xa4] sm:$0xf] %v1345
      %v1354 = vsel %vm1254, %v1230, 0.0
      %v1355 = vsel %vm1255, %v1231, 0.0
      %v1356 = vsel %vm1256, %v1232, 0.0
      %v1357 = vsel %vm1257, %v1233, 0.0
      %v1358 = vsel %vm1258, %v1234, 0.0
      %v1359 = vsel %vm1259, %v1235, 0.0
      %v1360 = vsel %vm1260, %v1236, 0.0
      %v1361 = vsel %vm1261, %v1237, 0.0
      %v1362 = vsel %vm1262, %v1238, 0.0
      %v1363 = vsel %vm1263, %v1239, 0.0
      %v1364 = vsel %vm1264, %v1240, 0.0
      %v1365 = vsel %vm1265, %v1241, 0.0
      %v1366 = vsel %vm1266, %v1242, 0.0
      %v1367 = vsel %vm1267, %v1243, 0.0
      %v1368 = vsel %vm1268, %v1244, 0.0
      %v1369 = vsel %vm1269, %v1245, 0.0
      %v1370 = vsel %vm1270, %v1246, 0.0
      %v1371 = vsel %vm1271, %v1247, 0.0
      %v1372 = vsel %vm1272, %v1248, 0.0
      %v1373 = vsel %vm1273, %v1249, 0.0
      %v1374 = vsel %vm1274, %v1250, 0.0
      %v1375 = vsel %vm1275, %v1251, 0.0
      %v1376 = vsel %vm1276, %v1252, 0.0
      %v1377 = vsel %vm1277, %v1253, 0.0
      %v1378 = vpack.c.bf16 %v1360, %v1354
      %v1379 = vpack.c.bf16 %v1361, %v1355
      %v1380 = vpack.c.bf16 %v1362, %v1356
      %v1381 = vpack.c.bf16 %v1363, %v1357
      %v1382 = vpack.c.bf16 %v1364, %v1358
      %v1383 = vpack.c.bf16 %v1365, %v1359
      %v1384 = vpack.c.bf16 %v1372, %v1366
      %v1385 = vpack.c.bf16 %v1373, %v1367
      %v1386 = vpack.c.bf16 %v1374, %v1368
      %v1387 = vpack.c.bf16 %v1375, %v1369
      %v1388 = vpack.c.bf16 %v1376, %v1370
      %v1389 = vpack.c.bf16 %v1377, %v1371
      %v1390 = vld [vmem:[%s3] sm:$0xff]
      %v1391 = vld [vmem:[%s3 + $0x8] sm:$0xf]
      %v1392 = vld [vmem:[%s3 + $0xc] sm:$0xff]
      %v1393 = vld [vmem:[%s3 + $0x14] sm:$0xf]
      %v1394 = vld [vmem:[%s3 + $0x18] sm:$0xff]
      %v1395 = vld [vmem:[%s3 + $0x20] sm:$0xf]
      %v1396 = vld [vmem:[%s3 + $0x24] sm:$0xff]
      %v1397 = vld [vmem:[%s3 + $0x2c] sm:$0xf]
      %v1398 = vld [vmem:[%s3 + $0x30] sm:$0xff]
      %v1399 = vld [vmem:[%s3 + $0x38] sm:$0xf]
      %v1400 = vld [vmem:[%s3 + $0x3c] sm:$0xff]
      %v1401 = vld [vmem:[%s3 + $0x44] sm:$0xf]
      %v1402 = vld [vmem:[%s3 + $0x48] sm:$0xff]
      %v1403 = vld [vmem:[%s3 + $0x50] sm:$0xf]
      %v1404 = vld [vmem:[%s3 + $0x54] sm:$0xff]
      %v1405 = vld [vmem:[%s3 + $0x5c] sm:$0xf]
      %v1406 = vld [vmem:[%s3 + $0x60] sm:$0xff]
      %v1407 = vld [vmem:[%s3 + $0x68] sm:$0xf]
      %v1408 = vld [vmem:[%s3 + $0x6c] sm:$0xff]
      %v1409 = vld [vmem:[%s3 + $0x74] sm:$0xf]
      %v1410 = vld [vmem:[%s3 + $0x78] sm:$0xff]
      %v1411 = vld [vmem:[%s3 + $0x80] sm:$0xf]
      %v1412 = vld [vmem:[%s3 + $0x84] sm:$0xff]
      %v1413 = vld [vmem:[%s3 + $0x8c] sm:$0xf]
      %v1414 = vld [vmem:[%s3 + $0x90] sm:$0xff]
      %v1415 = vld [vmem:[%s3 + $0x98] sm:$0xf]
      %v1416 = vld [vmem:[%s3 + $0x9c] sm:$0xff]
      %v1417 = vld [vmem:[%s3 + $0xa4] sm:$0xf]
      %v1418 = vld [vmem:[%s3 + $0xa8] sm:$0xff]
      %v1419 = vld [vmem:[%s3 + $0xb0] sm:$0xf]
      %v1420 = vld [vmem:[%s3 + $0xb4] sm:$0xff]
      %v1421 = vld [vmem:[%s3 + $0xbc] sm:$0xf]
      %v1422 = vld [vmem:[%s3 + $0xc0] sm:$0xff]
      %v1423 = vld [vmem:[%s3 + $0xc8] sm:$0xf]
      %v1424 = vld [vmem:[%s3 + $0xcc] sm:$0xff]
      %v1425 = vld [vmem:[%s3 + $0xd4] sm:$0xf]
      %v1426 = vld [vmem:[%s3 + $0xd8] sm:$0xff]
      %v1427 = vld [vmem:[%s3 + $0xe0] sm:$0xf]
      %v1428 = vld [vmem:[%s3 + $0xe4] sm:$0xff]
      %v1429 = vld [vmem:[%s3 + $0xec] sm:$0xf]
      %v1430 = vld [vmem:[%s3 + $0xf0] sm:$0xff]
      %v1431 = vld [vmem:[%s3 + $0xf8] sm:$0xf]
      %v1432 = vld [vmem:[%s3 + $0xfc] sm:$0xff]
      %v1433 = vld [vmem:[%s3 + $0x104] sm:$0xf]
      %v1434 = vld [vmem:[%s3 + $0x108] sm:$0xff]
      %v1435 = vld [vmem:[%s3 + $0x110] sm:$0xf]
      %v1436 = vld [vmem:[%s3 + $0x114] sm:$0xff]
      %v1437 = vld [vmem:[%s3 + $0x11c] sm:$0xf]
      %v1438 = vld [vmem:[%s3 + $0x120] sm:$0xff]
      %v1439 = vld [vmem:[%s3 + $0x128] sm:$0xf]
      %v1440 = vld [vmem:[%s3 + $0x12c] sm:$0xff]
      %v1441 = vld [vmem:[%s3 + $0x134] sm:$0xf]
      %v1442 = vld [vmem:[%s3 + $0x138] sm:$0xff]
      %v1443 = vld [vmem:[%s3 + $0x140] sm:$0xf]
      %v1444 = vld [vmem:[%s3 + $0x144] sm:$0xff]
      %v1445 = vld [vmem:[%s3 + $0x14c] sm:$0xf]
      %v1446 = vld [vmem:[%s3 + $0x150] sm:$0xff]
      %v1447 = vld [vmem:[%s3 + $0x158] sm:$0xf]
      %v1448 = vld [vmem:[%s3 + $0x15c] sm:$0xff]
      %v1449 = vld [vmem:[%s3 + $0x164] sm:$0xf]
      %v1450 = vld [vmem:[%s3 + $0x168] sm:$0xff]
      %v1451 = vld [vmem:[%s3 + $0x170] sm:$0xf]
      %v1452 = vld [vmem:[%s3 + $0x174] sm:$0xff]
      %v1453 = vld [vmem:[%s3 + $0x17c] sm:$0xf]
      %v1454 = vld [vmem:[%s3 + $0x180] sm:$0xff]
      %v1455 = vld [vmem:[%s3 + $0x188] sm:$0xf]
      %v1456 = vld [vmem:[%s3 + $0x18c] sm:$0xff]
      %v1457 = vld [vmem:[%s3 + $0x194] sm:$0xf]
      %v1458 = vld [vmem:[%s3 + $0x198] sm:$0xff]
      %v1459 = vld [vmem:[%s3 + $0x1a0] sm:$0xf]
      %v1460 = vld [vmem:[%s3 + $0x1a4] sm:$0xff]
      %v1461 = vld [vmem:[%s3 + $0x1ac] sm:$0xf]
      %v1462 = vld [vmem:[%s3 + $0x1b0] sm:$0xff]
      %v1463 = vld [vmem:[%s3 + $0x1b8] sm:$0xf]
      %v1464 = vld [vmem:[%s3 + $0x1bc] sm:$0xff]
      %v1465 = vld [vmem:[%s3 + $0x1c4] sm:$0xf]
      %v1466 = vld [vmem:[%s3 + $0x1c8] sm:$0xff]
      %v1467 = vld [vmem:[%s3 + $0x1d0] sm:$0xf]
      %v1468 = vld [vmem:[%s3 + $0x1d4] sm:$0xff]
      %v1469 = vld [vmem:[%s3 + $0x1dc] sm:$0xf]
      %v1470 = vld [vmem:[%s3 + $0x1e0] sm:$0xff]
      %v1471 = vld [vmem:[%s3 + $0x1e8] sm:$0xf]
      %v1472 = vld [vmem:[%s3 + $0x1ec] sm:$0xff]
      %v1473 = vld [vmem:[%s3 + $0x1f4] sm:$0xf]
      %v1474 = vld [vmem:[%s3 + $0x1f8] sm:$0xff]
      %v1475 = vld [vmem:[%s3 + $0x200] sm:$0xf]
      %v1476 = vld [vmem:[%s3 + $0x204] sm:$0xff]
      %v1477 = vld [vmem:[%s3 + $0x20c] sm:$0xf]
      %v1478 = vld [vmem:[%s3 + $0x210] sm:$0xff]
      %v1479 = vld [vmem:[%s3 + $0x218] sm:$0xf]
      %v1480 = vld [vmem:[%s3 + $0x21c] sm:$0xff]
      %v1481 = vld [vmem:[%s3 + $0x224] sm:$0xf]
      %v1482 = vld [vmem:[%s3 + $0x228] sm:$0xff]
      %v1483 = vld [vmem:[%s3 + $0x230] sm:$0xf]
      %v1484 = vld [vmem:[%s3 + $0x234] sm:$0xff]
      %v1485 = vld [vmem:[%s3 + $0x23c] sm:$0xf]
      %v1486 = vld [vmem:[%s3 + $0x240] sm:$0xff]
      %v1487 = vld [vmem:[%s3 + $0x248] sm:$0xf]
      %v1488 = vld [vmem:[%s3 + $0x24c] sm:$0xff]
      %v1489 = vld [vmem:[%s3 + $0x254] sm:$0xf]
      %v1490 = vld [vmem:[%s3 + $0x258] sm:$0xff]
      %v1491 = vld [vmem:[%s3 + $0x260] sm:$0xf]
      %v1492 = vld [vmem:[%s3 + $0x264] sm:$0xff]
      %v1493 = vld [vmem:[%s3 + $0x26c] sm:$0xf]
      %v1494 = vld [vmem:[%s3 + $0x270] sm:$0xff]
      %v1495 = vld [vmem:[%s3 + $0x278] sm:$0xf]
      %v1496 = vld [vmem:[%s3 + $0x27c] sm:$0xff]
      %v1497 = vld [vmem:[%s3 + $0x284] sm:$0xf]
      %v1498 = vld [vmem:[%s3 + $0x288] sm:$0xff]
      %v1499 = vld [vmem:[%s3 + $0x290] sm:$0xf]
      %v1500 = vld [vmem:[%s3 + $0x294] sm:$0xff]
      %v1501 = vld [vmem:[%s3 + $0x29c] sm:$0xf]
      %v1502 = vld [vmem:[%s3 + $0x2a0] sm:$0xff]
      %v1503 = vld [vmem:[%s3 + $0x2a8] sm:$0xf]
      %v1504 = vld [vmem:[%s3 + $0x2ac] sm:$0xff]
      %v1505 = vld [vmem:[%s3 + $0x2b4] sm:$0xf]
      %v1506 = vld [vmem:[%s3 + $0x2b8] sm:$0xff]
      %v1507 = vld [vmem:[%s3 + $0x2c0] sm:$0xf]
      %v1508 = vld [vmem:[%s3 + $0x2c4] sm:$0xff]
      %v1509 = vld [vmem:[%s3 + $0x2cc] sm:$0xf]
      %v1510 = vld [vmem:[%s3 + $0x2d0] sm:$0xff]
      %v1511 = vld [vmem:[%s3 + $0x2d8] sm:$0xf]
      %v1512 = vld [vmem:[%s3 + $0x2dc] sm:$0xff]
      %v1513 = vld [vmem:[%s3 + $0x2e4] sm:$0xf]
      %v1514 = vld [vmem:[%s3 + $0x2e8] sm:$0xff]
      %v1515 = vld [vmem:[%s3 + $0x2f0] sm:$0xf]
      %v1516 = vld [vmem:[%s3 + $0x2f4] sm:$0xff]
      %v1517 = vld [vmem:[%s3 + $0x2fc] sm:$0xf]
      %v1518 = vld [vmem:[%s3 + $0x300] sm:$0xff]
      %v1519 = vld [vmem:[%s3 + $0x308] sm:$0xf]
      %v1520 = vld [vmem:[%s3 + $0x30c] sm:$0xff]
      %v1521 = vld [vmem:[%s3 + $0x314] sm:$0xf]
      %v1522 = vld [vmem:[%s3 + $0x318] sm:$0xff]
      %v1523 = vld [vmem:[%s3 + $0x320] sm:$0xf]
      %v1524 = vld [vmem:[%s3 + $0x324] sm:$0xff]
      %v1525 = vld [vmem:[%s3 + $0x32c] sm:$0xf]
      %v1526 = vld [vmem:[%s3 + $0x330] sm:$0xff]
      %v1527 = vld [vmem:[%s3 + $0x338] sm:$0xf]
      %v1528 = vld [vmem:[%s3 + $0x33c] sm:$0xff]
      %v1529 = vld [vmem:[%s3 + $0x344] sm:$0xf]
      %v1530 = vld [vmem:[%s3 + $0x348] sm:$0xff]
      %v1531 = vld [vmem:[%s3 + $0x350] sm:$0xf]
      %v1532 = vld [vmem:[%s3 + $0x354] sm:$0xff]
      %v1533 = vld [vmem:[%s3 + $0x35c] sm:$0xf]
      %v1534 = vld [vmem:[%s3 + $0x360] sm:$0xff]
      %v1535 = vld [vmem:[%s3 + $0x368] sm:$0xf]
      %v1536 = vld [vmem:[%s3 + $0x36c] sm:$0xff]
      %v1537 = vld [vmem:[%s3 + $0x374] sm:$0xf]
      %v1538 = vld [vmem:[%s3 + $0x378] sm:$0xff]
      %v1539 = vld [vmem:[%s3 + $0x380] sm:$0xf]
      %v1540 = vld [vmem:[%s3 + $0x384] sm:$0xff]
      %v1541 = vld [vmem:[%s3 + $0x38c] sm:$0xf]
      %v1542 = vld [vmem:[%s3 + $0x390] sm:$0xff]
      %v1543 = vld [vmem:[%s3 + $0x398] sm:$0xf]
      %v1544 = vld [vmem:[%s3 + $0x39c] sm:$0xff]
      %v1545 = vld [vmem:[%s3 + $0x3a4] sm:$0xf]
      %v1546 = vld [vmem:[%s3 + $0x3a8] sm:$0xff]
      %v1547 = vld [vmem:[%s3 + $0x3b0] sm:$0xf]
      %v1548 = vld [vmem:[%s3 + $0x3b4] sm:$0xff]
      %v1549 = vld [vmem:[%s3 + $0x3bc] sm:$0xf]
      %v1550 = vld [vmem:[%s3 + $0x3c0] sm:$0xff]
      %v1551 = vld [vmem:[%s3 + $0x3c8] sm:$0xf]
      %v1552 = vld [vmem:[%s3 + $0x3cc] sm:$0xff]
      %v1553 = vld [vmem:[%s3 + $0x3d4] sm:$0xf]
      %v1554 = vld [vmem:[%s3 + $0x3d8] sm:$0xff]
      %v1555 = vld [vmem:[%s3 + $0x3e0] sm:$0xf]
      %v1556 = vld [vmem:[%s3 + $0x3e4] sm:$0xff]
      %v1557 = vld [vmem:[%s3 + $0x3ec] sm:$0xf]
      %v1558 = vld [vmem:[%s3 + $0x3f0] sm:$0xff]
      %v1559 = vld [vmem:[%s3 + $0x3f8] sm:$0xf]
      %v1560 = vld [vmem:[%s3 + $0x3fc] sm:$0xff]
      %v1561 = vld [vmem:[%s3 + $0x404] sm:$0xf]
      %v1562 = vld [vmem:[%s3 + $0x408] sm:$0xff]
      %v1563 = vld [vmem:[%s3 + $0x410] sm:$0xf]
      %v1564 = vld [vmem:[%s3 + $0x414] sm:$0xff]
      %v1565 = vld [vmem:[%s3 + $0x41c] sm:$0xf]
      %v1566 = vld [vmem:[%s3 + $0x420] sm:$0xff]
      %v1567 = vld [vmem:[%s3 + $0x428] sm:$0xf]
      %v1568 = vld [vmem:[%s3 + $0x42c] sm:$0xff]
      %v1569 = vld [vmem:[%s3 + $0x434] sm:$0xf]
      %v1570 = vld [vmem:[%s3 + $0x438] sm:$0xff]
      %v1571 = vld [vmem:[%s3 + $0x440] sm:$0xf]
      %v1572 = vld [vmem:[%s3 + $0x444] sm:$0xff]
      %v1573 = vld [vmem:[%s3 + $0x44c] sm:$0xf]
      %v1574 = vld [vmem:[%s3 + $0x450] sm:$0xff]
      %v1575 = vld [vmem:[%s3 + $0x458] sm:$0xf]
      %v1576 = vld [vmem:[%s3 + $0x45c] sm:$0xff]
      %v1577 = vld [vmem:[%s3 + $0x464] sm:$0xf]
      %v1578 = vld [vmem:[%s3 + $0x468] sm:$0xff]
      %v1579 = vld [vmem:[%s3 + $0x470] sm:$0xf]
      %v1580 = vld [vmem:[%s3 + $0x474] sm:$0xff]
      %v1581 = vld [vmem:[%s3 + $0x47c] sm:$0xf]
      %v1582 = vld [vmem:[%s4] sm:$0x7]
      %v1584 = vlaneseq
      %v1585 = vshrl.u32 %v1584, 7
      %v1586 = vsub.s32 0, %v1585
      %v1587 = vrot.slane %v1582, %v1586
      %v1588 = vlaneseq
      %v1589 = vshrl.u32 %v1588, 7
      %v1590 = vsub.s32 1, %v1589
      %v1591 = vrot.slane %v1582, %v1590
      %v1592 = vlaneseq
      %v1593 = vshrl.u32 %v1592, 7
      %v1594 = vsub.s32 2, %v1593
      %v1595 = vrot.slane %v1582, %v1594
      %v1791 = vunpack.c.l.b16 %v1390
      %v1792 = vunpack.c.h.b16 %v1390
      %v1793 = vunpack.c.l.b16 %v1391
      %v1794 = vunpack.c.l.b16 %v1392
      %v1795 = vunpack.c.h.b16 %v1392
      %v1796 = vunpack.c.l.b16 %v1393
      %v1797 = vunpack.c.l.b16 %v1394
      %v1798 = vunpack.c.h.b16 %v1394
      %v1799 = vunpack.c.l.b16 %v1395
      %v1800 = vunpack.c.l.b16 %v1396
      %v1801 = vunpack.c.h.b16 %v1396
      %v1802 = vunpack.c.l.b16 %v1397
      %v1803 = vunpack.c.l.b16 %v1398
      %v1804 = vunpack.c.h.b16 %v1398
      %v1805 = vunpack.c.l.b16 %v1399
      %v1806 = vunpack.c.l.b16 %v1400
      %v1807 = vunpack.c.h.b16 %v1400
      %v1808 = vunpack.c.l.b16 %v1401
      %v1809 = vunpack.c.l.b16 %v1402
      %v1810 = vunpack.c.h.b16 %v1402
      %v1811 = vunpack.c.l.b16 %v1403
      %v1812 = vunpack.c.l.b16 %v1404
      %v1813 = vunpack.c.h.b16 %v1404
      %v1814 = vunpack.c.l.b16 %v1405
      %v1815 = vunpack.c.l.b16 %v1406
      %v1816 = vunpack.c.h.b16 %v1406
      %v1817 = vunpack.c.l.b16 %v1407
      %v1818 = vunpack.c.l.b16 %v1408
      %v1819 = vunpack.c.h.b16 %v1408
      %v1820 = vunpack.c.l.b16 %v1409
      %v1821 = vunpack.c.l.b16 %v1410
      %v1822 = vunpack.c.h.b16 %v1410
      %v1823 = vunpack.c.l.b16 %v1411
      %v1824 = vunpack.c.l.b16 %v1412
      %v1825 = vunpack.c.h.b16 %v1412
      %v1826 = vunpack.c.l.b16 %v1413
      %v1827 = vunpack.c.l.b16 %v1414
      %v1828 = vunpack.c.h.b16 %v1414
      %v1829 = vunpack.c.l.b16 %v1415
      %v1830 = vunpack.c.l.b16 %v1416
      %v1831 = vunpack.c.h.b16 %v1416
      %v1832 = vunpack.c.l.b16 %v1417
      %v1833 = vunpack.c.l.b16 %v1418
      %v1834 = vunpack.c.h.b16 %v1418
      %v1835 = vunpack.c.l.b16 %v1419
      %v1836 = vunpack.c.l.b16 %v1420
      %v1837 = vunpack.c.h.b16 %v1420
      %v1838 = vunpack.c.l.b16 %v1421
      %v1839 = vunpack.c.l.b16 %v1422
      %v1840 = vunpack.c.h.b16 %v1422
      %v1841 = vunpack.c.l.b16 %v1423
      %v1842 = vunpack.c.l.b16 %v1424
      %v1843 = vunpack.c.h.b16 %v1424
      %v1844 = vunpack.c.l.b16 %v1425
      %v1845 = vunpack.c.l.b16 %v1426
      %v1846 = vunpack.c.h.b16 %v1426
      %v1847 = vunpack.c.l.b16 %v1427
      %v1848 = vunpack.c.l.b16 %v1428
      %v1849 = vunpack.c.h.b16 %v1428
      %v1850 = vunpack.c.l.b16 %v1429
      %v1851 = vunpack.c.l.b16 %v1430
      %v1852 = vunpack.c.h.b16 %v1430
      %v1853 = vunpack.c.l.b16 %v1431
      %v1854 = vunpack.c.l.b16 %v1432
      %v1855 = vunpack.c.h.b16 %v1432
      %v1856 = vunpack.c.l.b16 %v1433
      %v1857 = vunpack.c.l.b16 %v1434
      %v1858 = vunpack.c.h.b16 %v1434
      %v1859 = vunpack.c.l.b16 %v1435
      %v1860 = vunpack.c.l.b16 %v1436
      %v1861 = vunpack.c.h.b16 %v1436
      %v1862 = vunpack.c.l.b16 %v1437
      %v1863 = vunpack.c.l.b16 %v1438
      %v1864 = vunpack.c.h.b16 %v1438
      %v1865 = vunpack.c.l.b16 %v1439
      %v1866 = vunpack.c.l.b16 %v1440
      %v1867 = vunpack.c.h.b16 %v1440
      %v1868 = vunpack.c.l.b16 %v1441
      %v1869 = vunpack.c.l.b16 %v1442
      %v1870 = vunpack.c.h.b16 %v1442
      %v1871 = vunpack.c.l.b16 %v1443
      %v1872 = vunpack.c.l.b16 %v1444
      %v1873 = vunpack.c.h.b16 %v1444
      %v1874 = vunpack.c.l.b16 %v1445
      %v1875 = vunpack.c.l.b16 %v1446
      %v1876 = vunpack.c.h.b16 %v1446
      %v1877 = vunpack.c.l.b16 %v1447
      %v1878 = vunpack.c.l.b16 %v1448
      %v1879 = vunpack.c.h.b16 %v1448
      %v1880 = vunpack.c.l.b16 %v1449
      %v1881 = vunpack.c.l.b16 %v1450
      %v1882 = vunpack.c.h.b16 %v1450
      %v1883 = vunpack.c.l.b16 %v1451
      %v1884 = vunpack.c.l.b16 %v1452
      %v1885 = vunpack.c.h.b16 %v1452
      %v1886 = vunpack.c.l.b16 %v1453
      %v1887 = vunpack.c.l.b16 %v1454
      %v1888 = vunpack.c.h.b16 %v1454
      %v1889 = vunpack.c.l.b16 %v1455
      %v1890 = vunpack.c.l.b16 %v1456
      %v1891 = vunpack.c.h.b16 %v1456
      %v1892 = vunpack.c.l.b16 %v1457
      %v1893 = vunpack.c.l.b16 %v1458
      %v1894 = vunpack.c.h.b16 %v1458
      %v1895 = vunpack.c.l.b16 %v1459
      %v1896 = vunpack.c.l.b16 %v1460
      %v1897 = vunpack.c.h.b16 %v1460
      %v1898 = vunpack.c.l.b16 %v1461
      %v1899 = vunpack.c.l.b16 %v1462
      %v1900 = vunpack.c.h.b16 %v1462
      %v1901 = vunpack.c.l.b16 %v1463
      %v1902 = vunpack.c.l.b16 %v1464
      %v1903 = vunpack.c.h.b16 %v1464
      %v1904 = vunpack.c.l.b16 %v1465
      %v1905 = vunpack.c.l.b16 %v1466
      %v1906 = vunpack.c.h.b16 %v1466
      %v1907 = vunpack.c.l.b16 %v1467
      %v1908 = vunpack.c.l.b16 %v1468
      %v1909 = vunpack.c.h.b16 %v1468
      %v1910 = vunpack.c.l.b16 %v1469
      %v1911 = vunpack.c.l.b16 %v1470
      %v1912 = vunpack.c.h.b16 %v1470
      %v1913 = vunpack.c.l.b16 %v1471
      %v1914 = vunpack.c.l.b16 %v1472
      %v1915 = vunpack.c.h.b16 %v1472
      %v1916 = vunpack.c.l.b16 %v1473
      %v1917 = vunpack.c.l.b16 %v1474
      %v1918 = vunpack.c.h.b16 %v1474
      %v1919 = vunpack.c.l.b16 %v1475
      %v1920 = vunpack.c.l.b16 %v1476
      %v1921 = vunpack.c.h.b16 %v1476
      %v1922 = vunpack.c.l.b16 %v1477
      %v1923 = vunpack.c.l.b16 %v1478
      %v1924 = vunpack.c.h.b16 %v1478
      %v1925 = vunpack.c.l.b16 %v1479
      %v1926 = vunpack.c.l.b16 %v1480
      %v1927 = vunpack.c.h.b16 %v1480
      %v1928 = vunpack.c.l.b16 %v1481
      %v1929 = vunpack.c.l.b16 %v1482
      %v1930 = vunpack.c.h.b16 %v1482
      %v1931 = vunpack.c.l.b16 %v1483
      %v1932 = vunpack.c.l.b16 %v1484
      %v1933 = vunpack.c.h.b16 %v1484
      %v1934 = vunpack.c.l.b16 %v1485
      %v1935 = vunpack.c.l.b16 %v1486
      %v1936 = vunpack.c.h.b16 %v1486
      %v1937 = vunpack.c.l.b16 %v1487
      %v1938 = vunpack.c.l.b16 %v1488
      %v1939 = vunpack.c.h.b16 %v1488
      %v1940 = vunpack.c.l.b16 %v1489
      %v1941 = vunpack.c.l.b16 %v1490
      %v1942 = vunpack.c.h.b16 %v1490
      %v1943 = vunpack.c.l.b16 %v1491
      %v1944 = vunpack.c.l.b16 %v1492
      %v1945 = vunpack.c.h.b16 %v1492
      %v1946 = vunpack.c.l.b16 %v1493
      %v1947 = vunpack.c.l.b16 %v1494
      %v1948 = vunpack.c.h.b16 %v1494
      %v1949 = vunpack.c.l.b16 %v1495
      %v1950 = vunpack.c.l.b16 %v1496
      %v1951 = vunpack.c.h.b16 %v1496
      %v1952 = vunpack.c.l.b16 %v1497
      %v1953 = vunpack.c.l.b16 %v1498
      %v1954 = vunpack.c.h.b16 %v1498
      %v1955 = vunpack.c.l.b16 %v1499
      %v1956 = vunpack.c.l.b16 %v1500
      %v1957 = vunpack.c.h.b16 %v1500
      %v1958 = vunpack.c.l.b16 %v1501
      %v1959 = vunpack.c.l.b16 %v1502
      %v1960 = vunpack.c.h.b16 %v1502
      %v1961 = vunpack.c.l.b16 %v1503
      %v1962 = vunpack.c.l.b16 %v1504
      %v1963 = vunpack.c.h.b16 %v1504
      %v1964 = vunpack.c.l.b16 %v1505
      %v1965 = vunpack.c.l.b16 %v1506
      %v1966 = vunpack.c.h.b16 %v1506
      %v1967 = vunpack.c.l.b16 %v1507
      %v1968 = vunpack.c.l.b16 %v1508
      %v1969 = vunpack.c.h.b16 %v1508
      %v1970 = vunpack.c.l.b16 %v1509
      %v1971 = vunpack.c.l.b16 %v1510
      %v1972 = vunpack.c.h.b16 %v1510
      %v1973 = vunpack.c.l.b16 %v1511
      %v1974 = vunpack.c.l.b16 %v1512
      %v1975 = vunpack.c.h.b16 %v1512
      %v1976 = vunpack.c.l.b16 %v1513
      %v1977 = vunpack.c.l.b16 %v1514
      %v1978 = vunpack.c.h.b16 %v1514
      %v1979 = vunpack.c.l.b16 %v1515
      %v1980 = vunpack.c.l.b16 %v1516
      %v1981 = vunpack.c.h.b16 %v1516
      %v1982 = vunpack.c.l.b16 %v1517
      %v1983 = vunpack.c.l.b16 %v1518
      %v1984 = vunpack.c.h.b16 %v1518
      %v1985 = vunpack.c.l.b16 %v1519
      %v1986 = vunpack.c.l.b16 %v1520
      %v1987 = vunpack.c.h.b16 %v1520
      %v1988 = vunpack.c.l.b16 %v1521
      %v1989 = vunpack.c.l.b16 %v1522
      %v1990 = vunpack.c.h.b16 %v1522
      %v1991 = vunpack.c.l.b16 %v1523
      %v1992 = vunpack.c.l.b16 %v1524
      %v1993 = vunpack.c.h.b16 %v1524
      %v1994 = vunpack.c.l.b16 %v1525
      %v1995 = vunpack.c.l.b16 %v1526
      %v1996 = vunpack.c.h.b16 %v1526
      %v1997 = vunpack.c.l.b16 %v1527
      %v1998 = vunpack.c.l.b16 %v1528
      %v1999 = vunpack.c.h.b16 %v1528
      %v2000 = vunpack.c.l.b16 %v1529
      %v2001 = vunpack.c.l.b16 %v1530
      %v2002 = vunpack.c.h.b16 %v1530
      %v2003 = vunpack.c.l.b16 %v1531
      %v2004 = vunpack.c.l.b16 %v1532
      %v2005 = vunpack.c.h.b16 %v1532
      %v2006 = vunpack.c.l.b16 %v1533
      %v2007 = vunpack.c.l.b16 %v1534
      %v2008 = vunpack.c.h.b16 %v1534
      %v2009 = vunpack.c.l.b16 %v1535
      %v2010 = vunpack.c.l.b16 %v1536
      %v2011 = vunpack.c.h.b16 %v1536
      %v2012 = vunpack.c.l.b16 %v1537
      %v2013 = vunpack.c.l.b16 %v1538
      %v2014 = vunpack.c.h.b16 %v1538
      %v2015 = vunpack.c.l.b16 %v1539
      %v2016 = vunpack.c.l.b16 %v1540
      %v2017 = vunpack.c.h.b16 %v1540
      %v2018 = vunpack.c.l.b16 %v1541
      %v2019 = vunpack.c.l.b16 %v1542
      %v2020 = vunpack.c.h.b16 %v1542
      %v2021 = vunpack.c.l.b16 %v1543
      %v2022 = vunpack.c.l.b16 %v1544
      %v2023 = vunpack.c.h.b16 %v1544
      %v2024 = vunpack.c.l.b16 %v1545
      %v2025 = vunpack.c.l.b16 %v1546
      %v2026 = vunpack.c.h.b16 %v1546
      %v2027 = vunpack.c.l.b16 %v1547
      %v2028 = vunpack.c.l.b16 %v1548
      %v2029 = vunpack.c.h.b16 %v1548
      %v2030 = vunpack.c.l.b16 %v1549
      %v2031 = vunpack.c.l.b16 %v1550
      %v2032 = vunpack.c.h.b16 %v1550
      %v2033 = vunpack.c.l.b16 %v1551
      %v2034 = vunpack.c.l.b16 %v1552
      %v2035 = vunpack.c.h.b16 %v1552
      %v2036 = vunpack.c.l.b16 %v1553
      %v2037 = vunpack.c.l.b16 %v1554
      %v2038 = vunpack.c.h.b16 %v1554
      %v2039 = vunpack.c.l.b16 %v1555
      %v2040 = vunpack.c.l.b16 %v1556
      %v2041 = vunpack.c.h.b16 %v1556
      %v2042 = vunpack.c.l.b16 %v1557
      %v2043 = vunpack.c.l.b16 %v1558
      %v2044 = vunpack.c.h.b16 %v1558
      %v2045 = vunpack.c.l.b16 %v1559
      %v2046 = vunpack.c.l.b16 %v1560
      %v2047 = vunpack.c.h.b16 %v1560
      %v2048 = vunpack.c.l.b16 %v1561
      %v2049 = vunpack.c.l.b16 %v1562
      %v2050 = vunpack.c.h.b16 %v1562
      %v2051 = vunpack.c.l.b16 %v1563
      %v2052 = vunpack.c.l.b16 %v1564
      %v2053 = vunpack.c.h.b16 %v1564
      %v2054 = vunpack.c.l.b16 %v1565
      %v2055 = vunpack.c.l.b16 %v1566
      %v2056 = vunpack.c.h.b16 %v1566
      %v2057 = vunpack.c.l.b16 %v1567
      %v2058 = vunpack.c.l.b16 %v1568
      %v2059 = vunpack.c.h.b16 %v1568
      %v2060 = vunpack.c.l.b16 %v1569
      %v2061 = vunpack.c.l.b16 %v1570
      %v2062 = vunpack.c.h.b16 %v1570
      %v2063 = vunpack.c.l.b16 %v1571
      %v2064 = vunpack.c.l.b16 %v1572
      %v2065 = vunpack.c.h.b16 %v1572
      %v2066 = vunpack.c.l.b16 %v1573
      %v2067 = vunpack.c.l.b16 %v1574
      %v2068 = vunpack.c.h.b16 %v1574
      %v2069 = vunpack.c.l.b16 %v1575
      %v2070 = vunpack.c.l.b16 %v1576
      %v2071 = vunpack.c.h.b16 %v1576
      %v2072 = vunpack.c.l.b16 %v1577
      %v2073 = vunpack.c.l.b16 %v1578
      %v2074 = vunpack.c.h.b16 %v1578
      %v2075 = vunpack.c.l.b16 %v1579
      %v2076 = vunpack.c.l.b16 %v1580
      %v2077 = vunpack.c.h.b16 %v1580
      %v2078 = vunpack.c.l.b16 %v1581
      %v2079 = vpack.c.b16 %v1794, %v1791
      %v2080 = vpack.c.b16 %v1795, %v1792
      %v2081 = vpack.c.b16 %v1796, %v1793
      %v2082 = vpack.c.b16 %v1800, %v1797
      %v2083 = vpack.c.b16 %v1801, %v1798
      %v2084 = vpack.c.b16 %v1802, %v1799
      %v2085 = vpack.c.b16 %v1806, %v1803
      %v2086 = vpack.c.b16 %v1807, %v1804
      %v2087 = vpack.c.b16 %v1808, %v1805
      %v2088 = vpack.c.b16 %v1812, %v1809
      %v2089 = vpack.c.b16 %v1813, %v1810
      %v2090 = vpack.c.b16 %v1814, %v1811
      %v2091 = vpack.c.b16 %v1818, %v1815
      %v2092 = vpack.c.b16 %v1819, %v1816
      %v2093 = vpack.c.b16 %v1820, %v1817
      %v2094 = vpack.c.b16 %v1824, %v1821
      %v2095 = vpack.c.b16 %v1825, %v1822
      %v2096 = vpack.c.b16 %v1826, %v1823
      %v2097 = vpack.c.b16 %v1830, %v1827
      %v2098 = vpack.c.b16 %v1831, %v1828
      %v2099 = vpack.c.b16 %v1832, %v1829
      %v2100 = vpack.c.b16 %v1836, %v1833
      %v2101 = vpack.c.b16 %v1837, %v1834
      %v2102 = vpack.c.b16 %v1838, %v1835
      %v2103 = vpack.c.b16 %v1842, %v1839
      %v2104 = vpack.c.b16 %v1843, %v1840
      %v2105 = vpack.c.b16 %v1844, %v1841
      %v2106 = vpack.c.b16 %v1848, %v1845
      %v2107 = vpack.c.b16 %v1849, %v1846
      %v2108 = vpack.c.b16 %v1850, %v1847
      %v2109 = vpack.c.b16 %v1854, %v1851
      %v2110 = vpack.c.b16 %v1855, %v1852
      %v2111 = vpack.c.b16 %v1856, %v1853
      %v2112 = vpack.c.b16 %v1860, %v1857
      %v2113 = vpack.c.b16 %v1861, %v1858
      %v2114 = vpack.c.b16 %v1862, %v1859
      %v2115 = vpack.c.b16 %v1866, %v1863
      %v2116 = vpack.c.b16 %v1867, %v1864
      %v2117 = vpack.c.b16 %v1868, %v1865
      %v2118 = vpack.c.b16 %v1872, %v1869
      %v2119 = vpack.c.b16 %v1873, %v1870
      %v2120 = vpack.c.b16 %v1874, %v1871
      %v2121 = vpack.c.b16 %v1878, %v1875
      %v2122 = vpack.c.b16 %v1879, %v1876
      %v2123 = vpack.c.b16 %v1880, %v1877
      %v2124 = vpack.c.b16 %v1884, %v1881
      %v2125 = vpack.c.b16 %v1885, %v1882
      %v2126 = vpack.c.b16 %v1886, %v1883
      %v2127 = vpack.c.b16 %v1890, %v1887
      %v2128 = vpack.c.b16 %v1891, %v1888
      %v2129 = vpack.c.b16 %v1892, %v1889
      %v2130 = vpack.c.b16 %v1896, %v1893
      %v2131 = vpack.c.b16 %v1897, %v1894
      %v2132 = vpack.c.b16 %v1898, %v1895
      %v2133 = vpack.c.b16 %v1902, %v1899
      %v2134 = vpack.c.b16 %v1903, %v1900
      %v2135 = vpack.c.b16 %v1904, %v1901
      %v2136 = vpack.c.b16 %v1908, %v1905
      %v2137 = vpack.c.b16 %v1909, %v1906
      %v2138 = vpack.c.b16 %v1910, %v1907
      %v2139 = vpack.c.b16 %v1914, %v1911
      %v2140 = vpack.c.b16 %v1915, %v1912
      %v2141 = vpack.c.b16 %v1916, %v1913
      %v2142 = vpack.c.b16 %v1920, %v1917
      %v2143 = vpack.c.b16 %v1921, %v1918
      %v2144 = vpack.c.b16 %v1922, %v1919
      %v2145 = vpack.c.b16 %v1926, %v1923
      %v2146 = vpack.c.b16 %v1927, %v1924
      %v2147 = vpack.c.b16 %v1928, %v1925
      %v2148 = vpack.c.b16 %v1932, %v1929
      %v2149 = vpack.c.b16 %v1933, %v1930
      %v2150 = vpack.c.b16 %v1934, %v1931
      %v2151 = vpack.c.b16 %v1938, %v1935
      %v2152 = vpack.c.b16 %v1939, %v1936
      %v2153 = vpack.c.b16 %v1940, %v1937
      %v2154 = vpack.c.b16 %v1944, %v1941
      %v2155 = vpack.c.b16 %v1945, %v1942
      %v2156 = vpack.c.b16 %v1946, %v1943
      %v2157 = vpack.c.b16 %v1950, %v1947
      %v2158 = vpack.c.b16 %v1951, %v1948
      %v2159 = vpack.c.b16 %v1952, %v1949
      %v2160 = vpack.c.b16 %v1956, %v1953
      %v2161 = vpack.c.b16 %v1957, %v1954
      %v2162 = vpack.c.b16 %v1958, %v1955
      %v2163 = vpack.c.b16 %v1962, %v1959
      %v2164 = vpack.c.b16 %v1963, %v1960
      %v2165 = vpack.c.b16 %v1964, %v1961
      %v2166 = vpack.c.b16 %v1968, %v1965
      %v2167 = vpack.c.b16 %v1969, %v1966
      %v2168 = vpack.c.b16 %v1970, %v1967
      %v2169 = vpack.c.b16 %v1974, %v1971
      %v2170 = vpack.c.b16 %v1975, %v1972
      %v2171 = vpack.c.b16 %v1976, %v1973
      %v2172 = vpack.c.b16 %v1980, %v1977
      %v2173 = vpack.c.b16 %v1981, %v1978
      %v2174 = vpack.c.b16 %v1982, %v1979
      %v2175 = vpack.c.b16 %v1986, %v1983
      %v2176 = vpack.c.b16 %v1987, %v1984
      %v2177 = vpack.c.b16 %v1988, %v1985
      %v2178 = vpack.c.b16 %v1992, %v1989
      %v2179 = vpack.c.b16 %v1993, %v1990
      %v2180 = vpack.c.b16 %v1994, %v1991
      %v2181 = vpack.c.b16 %v1998, %v1995
      %v2182 = vpack.c.b16 %v1999, %v1996
      %v2183 = vpack.c.b16 %v2000, %v1997
      %v2184 = vpack.c.b16 %v2004, %v2001
      %v2185 = vpack.c.b16 %v2005, %v2002
      %v2186 = vpack.c.b16 %v2006, %v2003
      %v2187 = vpack.c.b16 %v2010, %v2007
      %v2188 = vpack.c.b16 %v2011, %v2008
      %v2189 = vpack.c.b16 %v2012, %v2009
      %v2190 = vpack.c.b16 %v2016, %v2013
      %v2191 = vpack.c.b16 %v2017, %v2014
      %v2192 = vpack.c.b16 %v2018, %v2015
      %v2193 = vpack.c.b16 %v2022, %v2019
      %v2194 = vpack.c.b16 %v2023, %v2020
      %v2195 = vpack.c.b16 %v2024, %v2021
      %v2196 = vpack.c.b16 %v2028, %v2025
      %v2197 = vpack.c.b16 %v2029, %v2026
      %v2198 = vpack.c.b16 %v2030, %v2027
      %v2199 = vpack.c.b16 %v2034, %v2031
      %v2200 = vpack.c.b16 %v2035, %v2032
      %v2201 = vpack.c.b16 %v2036, %v2033
      %v2202 = vpack.c.b16 %v2040, %v2037
      %v2203 = vpack.c.b16 %v2041, %v2038
      %v2204 = vpack.c.b16 %v2042, %v2039
      %v2205 = vpack.c.b16 %v2046, %v2043
      %v2206 = vpack.c.b16 %v2047, %v2044
      %v2207 = vpack.c.b16 %v2048, %v2045
      %v2208 = vpack.c.b16 %v2052, %v2049
      %v2209 = vpack.c.b16 %v2053, %v2050
      %v2210 = vpack.c.b16 %v2054, %v2051
      %v2211 = vpack.c.b16 %v2058, %v2055
      %v2212 = vpack.c.b16 %v2059, %v2056
      %v2213 = vpack.c.b16 %v2060, %v2057
      %v2214 = vpack.c.b16 %v2064, %v2061
      %v2215 = vpack.c.b16 %v2065, %v2062
      %v2216 = vpack.c.b16 %v2066, %v2063
      %v2217 = vpack.c.b16 %v2070, %v2067
      %v2218 = vpack.c.b16 %v2071, %v2068
      %v2219 = vpack.c.b16 %v2072, %v2069
      %v2220 = vpack.c.b16 %v2076, %v2073
      %v2221 = vpack.c.b16 %v2077, %v2074
      %v2222 = vpack.c.b16 %v2078, %v2075
      %2367 = vmatprep.subr.bf16.mxu0 %v2101
      %2368 = vmatpush1.bf16.msra.mxu0 %v2100
      %2369 = vmatprep.subr.bf16.mxu0 %v2098
      %2370 = vmatpush1.bf16.msra.mxu0 %v2097
      %2371 = vmatprep.subr.bf16.mxu0 %v2095
      %2372 = vmatpush1.bf16.msra.mxu0 %v2094
      %2373 = vmatprep.subr.bf16.mxu0 %v2092
      %2374 = vmatpush1.bf16.msra.mxu0 %v2091
      %2375 = vmatprep.subr.bf16.mxu0 %v2089
      %2376 = vmatpush1.bf16.msra.mxu0 %v2088
      %2377 = vmatprep.subr.bf16.mxu0 %v2086
      %2378 = vmatpush1.bf16.msra.mxu0 %v2085
      %2379 = vmatprep.subr.bf16.mxu0 %v2083
      %2380 = vmatpush1.bf16.msra.mxu0 %v2082
      %2381 = vmatprep.subr.bf16.mxu0 %v2080
      %2382 = vmatpush1.bf16.msra.mxu0 %v2079
      %2383 = vmatprep.subr.bf16.mxu0 %v2125
      %2384 = vmatpush2.bf16.msra.mxu0 %v2124
      %2385 = vmatprep.subr.bf16.mxu0 %v2122
      %2386 = vmatpush2.bf16.msra.mxu0 %v2121
      %2387 = vmatprep.subr.bf16.mxu0 %v2119
      %2388 = vmatpush2.bf16.msra.mxu0 %v2118
      %2389 = vmatprep.subr.bf16.mxu0 %v2116
      %2390 = vmatpush2.bf16.msra.mxu0 %v2115
      %2391 = vmatprep.subr.bf16.mxu0 %v2113
      %2392 = vmatpush2.bf16.msra.mxu0 %v2112
      %2393 = vmatprep.subr.bf16.mxu0 %v2110
      %2394 = vmatpush2.bf16.msra.mxu0 %v2109
      %2395 = vmatprep.subr.bf16.mxu0 %v2107
      %2396 = vmatpush2.bf16.msra.mxu0 %v2106
      %2397 = vmatprep.subr.bf16.mxu0 %v2104
      %2398 = vmatpush2.bf16.msra.mxu0 %v2103
      %2399 = vmatprep.mubr.bf16.mxu0 %v1379
      %2400 = vmatmul.mubr.bf16.gmra.mxu0 %v1378
      %v2401 = vpop.f32.mrf.mxu0
      %v2402 = vadd.f32 %v1587, %v2401
      %v2403 = vpop.f32.mrf.mxu0
      %v2404 = vadd.f32 %v1591, %v2403
      %v2405 = vpop.f32.mrf.mxu0
      %v2406 = vadd.f32 %v1587, %v2405
      %v2407 = vpop.f32.mrf.mxu0
      %v2408 = vadd.f32 %v1591, %v2407
      %2409 = vmatprep.mubr.bf16.mxu0 %v1385
      %2410 = vmatmul.mubr.bf16.gmra.mxu0 %v1384
      %v2411 = vpop.f32.mrf.mxu0
      %v2412 = vadd.f32 %v1587, %v2411
      %v2413 = vpop.f32.mrf.mxu0
      %v2414 = vadd.f32 %v1591, %v2413
      %v2415 = vpop.f32.mrf.mxu0
      %v2416 = vadd.f32 %v1587, %v2415
      %v2417 = vpop.f32.mrf.mxu0
      %v2418 = vadd.f32 %v1591, %v2417
      %2419 = vdwg.mxu0
      %2420 = vmatprep.subr.bf16.mxu0 %v2149
      %2421 = vmatpush1.bf16.msra.mxu0 %v2148
      %2422 = vmatprep.subr.bf16.mxu0 %v2146
      %2423 = vmatpush1.bf16.msra.mxu0 %v2145
      %2424 = vmatprep.subr.bf16.mxu0 %v2143
      %2425 = vmatpush1.bf16.msra.mxu0 %v2142
      %2426 = vmatprep.subr.bf16.mxu0 %v2140
      %2427 = vmatpush1.bf16.msra.mxu0 %v2139
      %2428 = vmatprep.subr.bf16.mxu0 %v2137
      %2429 = vmatpush1.bf16.msra.mxu0 %v2136
      %2430 = vmatprep.subr.bf16.mxu0 %v2134
      %2431 = vmatpush1.bf16.msra.mxu0 %v2133
      %2432 = vmatprep.subr.bf16.mxu0 %v2131
      %2433 = vmatpush1.bf16.msra.mxu0 %v2130
      %2434 = vmatprep.subr.bf16.mxu0 %v2128
      %2435 = vmatpush1.bf16.msra.mxu0 %v2127
      %2436 = vmatprep.subr.bf16.mxu0 %v2173
      %2437 = vmatpush2.bf16.msra.mxu0 %v2172
      %2438 = vmatprep.subr.bf16.mxu0 %v2170
      %2439 = vmatpush2.bf16.msra.mxu0 %v2169
      %2440 = vmatprep.subr.bf16.mxu0 %v2167
      %2441 = vmatpush2.bf16.msra.mxu0 %v2166
      %2442 = vmatprep.subr.bf16.mxu0 %v2164
      %2443 = vmatpush2.bf16.msra.mxu0 %v2163
      %2444 = vmatprep.subr.bf16.mxu0 %v2161
      %2445 = vmatpush2.bf16.msra.mxu0 %v2160
      %2446 = vmatprep.subr.bf16.mxu0 %v2158
      %2447 = vmatpush2.bf16.msra.mxu0 %v2157
      %2448 = vmatprep.subr.bf16.mxu0 %v2155
      %2449 = vmatpush2.bf16.msra.mxu0 %v2154
      %2450 = vmatprep.subr.bf16.mxu0 %v2152
      %2451 = vmatpush2.bf16.msra.mxu0 %v2151
      %2452 = vmatprep.mubr.bf16.mxu0 %v1381
      %2453 = vmatmul.mubr.bf16.gmra.mxu0 %v1380
      %v2454 = vpop.f32.mrf.mxu0
      %v2455 = vadd.f32 %v2402, %v2454
      %v2456 = vpop.f32.mrf.mxu0
      %v2457 = vadd.f32 %v2404, %v2456
      %v2458 = vpop.f32.mrf.mxu0
      %v2459 = vadd.f32 %v2406, %v2458
      %v2460 = vpop.f32.mrf.mxu0
      %v2461 = vadd.f32 %v2408, %v2460
      %2462 = vmatprep.mubr.bf16.mxu0 %v1387
      %2463 = vmatmul.mubr.bf16.gmra.mxu0 %v1386
      %v2464 = vpop.f32.mrf.mxu0
      %v2465 = vadd.f32 %v2412, %v2464
      %v2466 = vpop.f32.mrf.mxu0
      %v2467 = vadd.f32 %v2414, %v2466
      %v2468 = vpop.f32.mrf.mxu0
      %v2469 = vadd.f32 %v2416, %v2468
      %v2470 = vpop.f32.mrf.mxu0
      %v2471 = vadd.f32 %v2418, %v2470
      %2472 = vdwg.mxu0
      %2473 = vmatprep.subr.bf16.mxu0 %v2197
      %2474 = vmatpush1.bf16.msra.mxu0 %v2196
      %2475 = vmatprep.subr.bf16.mxu0 %v2194
      %2476 = vmatpush1.bf16.msra.mxu0 %v2193
      %2477 = vmatprep.subr.bf16.mxu0 %v2191
      %2478 = vmatpush1.bf16.msra.mxu0 %v2190
      %2479 = vmatprep.subr.bf16.mxu0 %v2188
      %2480 = vmatpush1.bf16.msra.mxu0 %v2187
      %2481 = vmatprep.subr.bf16.mxu0 %v2185
      %2482 = vmatpush1.bf16.msra.mxu0 %v2184
      %2483 = vmatprep.subr.bf16.mxu0 %v2182
      %2484 = vmatpush1.bf16.msra.mxu0 %v2181
      %2485 = vmatprep.subr.bf16.mxu0 %v2179
      %2486 = vmatpush1.bf16.msra.mxu0 %v2178
      %2487 = vmatprep.subr.bf16.mxu0 %v2176
      %2488 = vmatpush1.bf16.msra.mxu0 %v2175
      %2489 = vmatprep.subr.bf16.mxu0 %v2221
      %2490 = vmatpush2.bf16.msra.mxu0 %v2220
      %2491 = vmatprep.subr.bf16.mxu0 %v2218
      %2492 = vmatpush2.bf16.msra.mxu0 %v2217
      %2493 = vmatprep.subr.bf16.mxu0 %v2215
      %2494 = vmatpush2.bf16.msra.mxu0 %v2214
      %2495 = vmatprep.subr.bf16.mxu0 %v2212
      %2496 = vmatpush2.bf16.msra.mxu0 %v2211
      %2497 = vmatprep.subr.bf16.mxu0 %v2209
      %2498 = vmatpush2.bf16.msra.mxu0 %v2208
      %2499 = vmatprep.subr.bf16.mxu0 %v2206
      %2500 = vmatpush2.bf16.msra.mxu0 %v2205
      %2501 = vmatprep.subr.bf16.mxu0 %v2203
      %2502 = vmatpush2.bf16.msra.mxu0 %v2202
      %2503 = vmatprep.subr.bf16.mxu0 %v2200
      %2504 = vmatpush2.bf16.msra.mxu0 %v2199
      %2505 = vmatprep.mubr.bf16.mxu0 %v1383
      %2506 = vmatmul.mubr.bf16.gmra.mxu0 %v1382
      %v2507 = vpop.f32.mrf.mxu0
      %v2508 = vadd.f32 %v2455, %v2507
      %v2509 = vpop.f32.mrf.mxu0
      %v2510 = vadd.f32 %v2457, %v2509
      %v2511 = vpop.f32.mrf.mxu0
      %v2512 = vadd.f32 %v2459, %v2511
      %v2513 = vpop.f32.mrf.mxu0
      %v2514 = vadd.f32 %v2461, %v2513
      %2515 = vmatprep.mubr.bf16.mxu0 %v1389
      %2516 = vmatmul.mubr.bf16.gmra.mxu0 %v1388
      %v2517 = vpop.f32.mrf.mxu0
      %v2518 = vadd.f32 %v2465, %v2517
      %v2519 = vpop.f32.mrf.mxu0
      %v2520 = vadd.f32 %v2467, %v2519
      %v2521 = vpop.f32.mrf.mxu0
      %v2522 = vadd.f32 %v2469, %v2521
      %v2523 = vpop.f32.mrf.mxu0
      %v2524 = vadd.f32 %v2471, %v2523
      %2525 = vdwg.mxu0
      %2526 = vmatprep.subr.bf16.mxu0 0
      %2527 = vmatpush1.bf16.msra.mxu0 %v2102
      %2528 = vmatprep.subr.bf16.mxu0 0
      %2529 = vmatpush1.bf16.msra.mxu0 %v2099
      %2530 = vmatprep.subr.bf16.mxu0 0
      %2531 = vmatpush1.bf16.msra.mxu0 %v2096
      %2532 = vmatprep.subr.bf16.mxu0 0
      %2533 = vmatpush1.bf16.msra.mxu0 %v2093
      %2534 = vmatprep.subr.bf16.mxu0 0
      %2535 = vmatpush1.bf16.msra.mxu0 %v2090
      %2536 = vmatprep.subr.bf16.mxu0 0
      %2537 = vmatpush1.bf16.msra.mxu0 %v2087
      %2538 = vmatprep.subr.bf16.mxu0 0
      %2539 = vmatpush1.bf16.msra.mxu0 %v2084
      %2540 = vmatprep.subr.bf16.mxu0 0
      %2541 = vmatpush1.bf16.msra.mxu0 %v2081
      %2542 = vmatprep.subr.bf16.mxu0 0
      %2543 = vmatpush2.bf16.msra.mxu0 %v2126
      %2544 = vmatprep.subr.bf16.mxu0 0
      %2545 = vmatpush2.bf16.msra.mxu0 %v2123
      %2546 = vmatprep.subr.bf16.mxu0 0
      %2547 = vmatpush2.bf16.msra.mxu0 %v2120
      %2548 = vmatprep.subr.bf16.mxu0 0
      %2549 = vmatpush2.bf16.msra.mxu0 %v2117
      %2550 = vmatprep.subr.bf16.mxu0 0
      %2551 = vmatpush2.bf16.msra.mxu0 %v2114
      %2552 = vmatprep.subr.bf16.mxu0 0
      %2553 = vmatpush2.bf16.msra.mxu0 %v2111
      %2554 = vmatprep.subr.bf16.mxu0 0
      %2555 = vmatpush2.bf16.msra.mxu0 %v2108
      %2556 = vmatprep.subr.bf16.mxu0 0
      %2557 = vmatpush2.bf16.msra.mxu0 %v2105
      %2558 = vmatprep.mubr.bf16.mxu0 %v1379
      %2559 = vmatmul.mubr.bf16.gmra.mxu0 %v1378
      %v2560 = vpop.f32.mrf.mxu0
      %v2561 = vadd.f32 %v1595, %v2560
      %v2562 = vpop.f32.mrf.mxu0
      %v2563 = vpop.f32.mrf.mxu0
      %v2564 = vadd.f32 %v1595, %v2563
      %v2565 = vpop.f32.mrf.mxu0
      %2566 = vmatprep.mubr.bf16.mxu0 %v1385
      %2567 = vmatmul.mubr.bf16.gmra.mxu0 %v1384
      %v2568 = vpop.f32.mrf.mxu0
      %v2569 = vadd.f32 %v1595, %v2568
      %v2570 = vpop.f32.mrf.mxu0
      %v2571 = vpop.f32.mrf.mxu0
      %v2572 = vadd.f32 %v1595, %v2571
      %v2573 = vpop.f32.mrf.mxu0
      %2574 = vdwg.mxu0
      %2575 = vmatprep.subr.bf16.mxu0 0
      %2576 = vmatpush1.bf16.msra.mxu0 %v2150
      %2577 = vmatprep.subr.bf16.mxu0 0
      %2578 = vmatpush1.bf16.msra.mxu0 %v2147
      %2579 = vmatprep.subr.bf16.mxu0 0
      %2580 = vmatpush1.bf16.msra.mxu0 %v2144
      %2581 = vmatprep.subr.bf16.mxu0 0
      %2582 = vmatpush1.bf16.msra.mxu0 %v2141
      %2583 = vmatprep.subr.bf16.mxu0 0
      %2584 = vmatpush1.bf16.msra.mxu0 %v2138
      %2585 = vmatprep.subr.bf16.mxu0 0
      %2586 = vmatpush1.bf16.msra.mxu0 %v2135
      %2587 = vmatprep.subr.bf16.mxu0 0
      %2588 = vmatpush1.bf16.msra.mxu0 %v2132
      %2589 = vmatprep.subr.bf16.mxu0 0
      %2590 = vmatpush1.bf16.msra.mxu0 %v2129
      %2591 = vmatprep.subr.bf16.mxu0 0
      %2592 = vmatpush2.bf16.msra.mxu0 %v2174
      %2593 = vmatprep.subr.bf16.mxu0 0
      %2594 = vmatpush2.bf16.msra.mxu0 %v2171
      %2595 = vmatprep.subr.bf16.mxu0 0
      %2596 = vmatpush2.bf16.msra.mxu0 %v2168
      %2597 = vmatprep.subr.bf16.mxu0 0
      %2598 = vmatpush2.bf16.msra.mxu0 %v2165
      %2599 = vmatprep.subr.bf16.mxu0 0
      %2600 = vmatpush2.bf16.msra.mxu0 %v2162
      %2601 = vmatprep.subr.bf16.mxu0 0
      %2602 = vmatpush2.bf16.msra.mxu0 %v2159
      %2603 = vmatprep.subr.bf16.mxu0 0
      %2604 = vmatpush2.bf16.msra.mxu0 %v2156
      %2605 = vmatprep.subr.bf16.mxu0 0
      %2606 = vmatpush2.bf16.msra.mxu0 %v2153
      %2607 = vmatprep.mubr.bf16.mxu0 %v1381
      %2608 = vmatmul.mubr.bf16.gmra.mxu0 %v1380
      %v2609 = vpop.f32.mrf.mxu0
      %v2610 = vadd.f32 %v2561, %v2609
      %v2611 = vpop.f32.mrf.mxu0
      %v2612 = vpop.f32.mrf.mxu0
      %v2613 = vadd.f32 %v2564, %v2612
      %v2614 = vpop.f32.mrf.mxu0
      %2615 = vmatprep.mubr.bf16.mxu0 %v1387
      %2616 = vmatmul.mubr.bf16.gmra.mxu0 %v1386
      %v2617 = vpop.f32.mrf.mxu0
      %v2618 = vadd.f32 %v2569, %v2617
      %v2619 = vpop.f32.mrf.mxu0
      %v2620 = vpop.f32.mrf.mxu0
      %v2621 = vadd.f32 %v2572, %v2620
      %v2622 = vpop.f32.mrf.mxu0
      %2623 = vdwg.mxu0
      %2624 = vmatprep.subr.bf16.mxu0 0
      %2625 = vmatpush1.bf16.msra.mxu0 %v2198
      %2626 = vmatprep.subr.bf16.mxu0 0
      %2627 = vmatpush1.bf16.msra.mxu0 %v2195
      %2628 = vmatprep.subr.bf16.mxu0 0
      %2629 = vmatpush1.bf16.msra.mxu0 %v2192
      %2630 = vmatprep.subr.bf16.mxu0 0
      %2631 = vmatpush1.bf16.msra.mxu0 %v2189
      %2632 = vmatprep.subr.bf16.mxu0 0
      %2633 = vmatpush1.bf16.msra.mxu0 %v2186
      %2634 = vmatprep.subr.bf16.mxu0 0
      %2635 = vmatpush1.bf16.msra.mxu0 %v2183
      %2636 = vmatprep.subr.bf16.mxu0 0
      %2637 = vmatpush1.bf16.msra.mxu0 %v2180
      %2638 = vmatprep.subr.bf16.mxu0 0
      %2639 = vmatpush1.bf16.msra.mxu0 %v2177
      %2640 = vmatprep.subr.bf16.mxu0 0
      %2641 = vmatpush2.bf16.msra.mxu0 %v2222
      %2642 = vmatprep.subr.bf16.mxu0 0
      %2643 = vmatpush2.bf16.msra.mxu0 %v2219
      %2644 = vmatprep.subr.bf16.mxu0 0
      %2645 = vmatpush2.bf16.msra.mxu0 %v2216
      %2646 = vmatprep.subr.bf16.mxu0 0
      %2647 = vmatpush2.bf16.msra.mxu0 %v2213
      %2648 = vmatprep.subr.bf16.mxu0 0
      %2649 = vmatpush2.bf16.msra.mxu0 %v2210
      %2650 = vmatprep.subr.bf16.mxu0 0
      %2651 = vmatpush2.bf16.msra.mxu0 %v2207
      %2652 = vmatprep.subr.bf16.mxu0 0
      %2653 = vmatpush2.bf16.msra.mxu0 %v2204
      %2654 = vmatprep.subr.bf16.mxu0 0
      %2655 = vmatpush2.bf16.msra.mxu0 %v2201
      %2656 = vmatprep.mubr.bf16.mxu0 %v1383
      %2657 = vmatmul.mubr.bf16.gmra.mxu0 %v1382
      %v2658 = vpop.f32.mrf.mxu0
      %v2659 = vadd.f32 %v2610, %v2658
      %v2660 = vpop.f32.mrf.mxu0
      %v2661 = vpop.f32.mrf.mxu0
      %v2662 = vadd.f32 %v2613, %v2661
      %v2663 = vpop.f32.mrf.mxu0
      %2664 = vmatprep.mubr.bf16.mxu0 %v1389
      %2665 = vmatmul.mubr.bf16.gmra.mxu0 %v1388
      %v2666 = vpop.f32.mrf.mxu0
      %v2667 = vadd.f32 %v2618, %v2666
      %v2668 = vpop.f32.mrf.mxu0
      %v2669 = vpop.f32.mrf.mxu0
      %v2670 = vadd.f32 %v2621, %v2669
      %v2671 = vpop.f32.mrf.mxu0
      %2672 = vdwg.mxu0
      %vm2673 = vcmp.ge.f32.partialorder %v2508, 0.0
      %vm2674 = vcmp.ge.f32.partialorder %v2510, 0.0
      %vm2675 = vcmp.ge.f32.partialorder %v2659, 0.0
      %vm2676 = vcmp.ge.f32.partialorder %v2512, 0.0
      %vm2677 = vcmp.ge.f32.partialorder %v2514, 0.0
      %vm2678 = vcmp.ge.f32.partialorder %v2662, 0.0
      %vm2679 = vcmp.ge.f32.partialorder %v2518, 0.0
      %vm2680 = vcmp.ge.f32.partialorder %v2520, 0.0
      %vm2681 = vcmp.ge.f32.partialorder %v2667, 0.0
      %vm2682 = vcmp.ge.f32.partialorder %v2522, 0.0
      %vm2683 = vcmp.ge.f32.partialorder %v2524, 0.0
      %vm2684 = vcmp.ge.f32.partialorder %v2670, 0.0
      %vm2685 = vmpackc.low %vm2676, %vm2673
      %vm2686 = vmpackc.low %vm2682, %vm2679
      %vm2687 = vmpackc.even %vm2686, %vm2685
      %vm2688 = vmpackc.low %vm2677, %vm2674
      %vm2689 = vmpackc.low %vm2683, %vm2680
      %vm2690 = vmpackc.even %vm2689, %vm2688
      %vm2691 = vmpackc.low %vm2678, %vm2675
      %vm2692 = vmpackc.low %vm2684, %vm2681
      %vm2693 = vmpackc.even %vm2692, %vm2691
      %v2694 = vsel %vm2687, 16843009, 0
      %v2695 = vsel %vm2690, 16843009, 0
      %v2696 = vsel %vm2693, 16843009, 0
      %v2697 = vunpack.c.0.s8 %v2694
      %v2698 = vunpack.c.0.s8 %v2695
      %v2699 = vunpack.c.0.s8 %v2696
      %v2700 = vunpack.c.1.s8 %v2694
      %v2701 = vunpack.c.1.s8 %v2695
      %v2702 = vunpack.c.1.s8 %v2696
      %v2703 = vunpack.c.2.s8 %v2694
      %v2704 = vunpack.c.2.s8 %v2695
      %v2705 = vunpack.c.2.s8 %v2696
      %v2706 = vunpack.c.3.s8 %v2694
      %v2707 = vunpack.c.3.s8 %v2695
      %v2708 = vunpack.c.3.s8 %v2696
      %v2709 = vpack.c.b16 %v2698, %v2697
      %v2710 = vpack.c.b16 %v2699, %v2699
      %v2711 = vpack.c.b8 %v2710, %v2709
      %v2712 = vpack.c.b16 %v2701, %v2700
      %v2713 = vpack.c.b16 %v2702, %v2702
      %v2714 = vpack.c.b8 %v2713, %v2712
      %v2715 = vpack.c.b16 %v2704, %v2703
      %v2716 = vpack.c.b16 %v2705, %v2705
      %v2717 = vpack.c.b8 %v2716, %v2715
      %v2718 = vpack.c.b16 %v2707, %v2706
      %v2719 = vpack.c.b16 %v2708, %v2708
      %v2720 = vpack.c.b8 %v2719, %v2718
      %2721 = vst [vmem:[%s849 + $0xc] sm:$0x3f] %v2711
      %2722 = vst [vmem:[%s849 + $0x40] sm:$0x3f] %v2714
      %2723 = vst [vmem:[%s849 + $0x74] sm:$0x3f] %v2717
      %2724 = vst [vmem:[%s849 + $0xa8] sm:$0x3f] %v2720
      %v2725 = vsel %vm2673, %v2508, 0.0
      %v2726 = vsel %vm2674, %v2510, 0.0
      %v2727 = vsel %vm2675, %v2659, 0.0
      %v2728 = vsel %vm2676, %v2512, 0.0
      %v2729 = vsel %vm2677, %v2514, 0.0
      %v2730 = vsel %vm2678, %v2662, 0.0
      %v2731 = vsel %vm2679, %v2518, 0.0
      %v2732 = vsel %vm2680, %v2520, 0.0
      %v2733 = vsel %vm2681, %v2667, 0.0
      %v2734 = vsel %vm2682, %v2522, 0.0
      %v2735 = vsel %vm2683, %v2524, 0.0
      %v2736 = vsel %vm2684, %v2670, 0.0
      %v2737 = vpack.c.bf16 %v2728, %v2725
      %v2738 = vpack.c.bf16 %v2729, %v2726
      %v2739 = vpack.c.bf16 %v2730, %v2727
      %v2740 = vpack.c.bf16 %v2734, %v2731
      %v2741 = vpack.c.bf16 %v2735, %v2732
      %v2742 = vpack.c.bf16 %v2736, %v2733
      %v2743 = vld [vmem:[%s5] sm:$0xff]
      %v2744 = vld [vmem:[%s5 + $0x8] sm:$0xff]
      %v2745 = vld [vmem:[%s5 + $0x10] sm:$0xff]
      %v2746 = vld [vmem:[%s5 + $0x18] sm:$0xff]
      %v2747 = vld [vmem:[%s5 + $0x20] sm:$0xff]
      %v2748 = vld [vmem:[%s5 + $0x28] sm:$0xff]
      %v2749 = vld [vmem:[%s5 + $0x30] sm:$0xff]
      %v2750 = vld [vmem:[%s5 + $0x38] sm:$0xff]
      %v2751 = vld [vmem:[%s5 + $0x40] sm:$0xff]
      %v2752 = vld [vmem:[%s5 + $0x48] sm:$0xff]
      %v2753 = vld [vmem:[%s5 + $0x50] sm:$0xff]
      %v2754 = vld [vmem:[%s5 + $0x58] sm:$0xff]
      %v2755 = vld [vmem:[%s5 + $0x60] sm:$0xff]
      %v2756 = vld [vmem:[%s5 + $0x68] sm:$0xff]
      %v2757 = vld [vmem:[%s5 + $0x70] sm:$0xff]
      %v2758 = vld [vmem:[%s5 + $0x78] sm:$0xff]
      %v2759 = vld [vmem:[%s5 + $0x80] sm:$0xff]
      %v2760 = vld [vmem:[%s5 + $0x88] sm:$0xff]
      %v2761 = vld [vmem:[%s5 + $0x90] sm:$0xff]
      %v2762 = vld [vmem:[%s5 + $0x98] sm:$0xff]
      %v2763 = vld [vmem:[%s5 + $0xa0] sm:$0xff]
      %v2764 = vld [vmem:[%s5 + $0xa8] sm:$0xff]
      %v2765 = vld [vmem:[%s5 + $0xb0] sm:$0xff]
      %v2766 = vld [vmem:[%s5 + $0xb8] sm:$0xff]
      %v2767 = vld [vmem:[%s5 + $0xc0] sm:$0xff]
      %v2768 = vld [vmem:[%s5 + $0xc8] sm:$0xff]
      %v2769 = vld [vmem:[%s5 + $0xd0] sm:$0xff]
      %v2770 = vld [vmem:[%s5 + $0xd8] sm:$0xff]
      %v2771 = vld [vmem:[%s5 + $0xe0] sm:$0xff]
      %v2772 = vld [vmem:[%s5 + $0xe8] sm:$0xff]
      %v2773 = vld [vmem:[%s5 + $0xf0] sm:$0xff]
      %v2774 = vld [vmem:[%s5 + $0xf8] sm:$0xff]
      %v2775 = vld [vmem:[%s5 + $0x100] sm:$0xff]
      %v2776 = vld [vmem:[%s5 + $0x108] sm:$0xff]
      %v2777 = vld [vmem:[%s5 + $0x110] sm:$0xff]
      %v2778 = vld [vmem:[%s5 + $0x118] sm:$0xff]
      %v2779 = vld [vmem:[%s5 + $0x120] sm:$0xff]
      %v2780 = vld [vmem:[%s5 + $0x128] sm:$0xff]
      %v2781 = vld [vmem:[%s5 + $0x130] sm:$0xff]
      %v2782 = vld [vmem:[%s5 + $0x138] sm:$0xff]
      %v2783 = vld [vmem:[%s5 + $0x140] sm:$0xff]
      %v2784 = vld [vmem:[%s5 + $0x148] sm:$0xff]
      %v2785 = vld [vmem:[%s5 + $0x150] sm:$0xff]
      %v2786 = vld [vmem:[%s5 + $0x158] sm:$0xff]
      %v2787 = vld [vmem:[%s5 + $0x160] sm:$0xff]
      %v2788 = vld [vmem:[%s5 + $0x168] sm:$0xff]
      %v2789 = vld [vmem:[%s5 + $0x170] sm:$0xff]
      %v2790 = vld [vmem:[%s5 + $0x178] sm:$0xff]
      %v2791 = vld [vmem:[%s6] sm:$0x3]
      %v2793 = vlaneseq
      %v2794 = vshrl.u32 %v2793, 7
      %v2795 = vsub.s32 0, %v2794
      %v2796 = vrot.slane %v2791, %v2795
      %v2797 = vlaneseq
      %v2798 = vshrl.u32 %v2797, 7
      %v2799 = vsub.s32 1, %v2798
      %v2800 = vrot.slane %v2791, %v2799
      %v2851 = vunpack.c.l.b16 %v2743
      %v2852 = vunpack.c.h.b16 %v2743
      %v2853 = vunpack.c.l.b16 %v2744
      %v2854 = vunpack.c.h.b16 %v2744
      %v2855 = vunpack.c.l.b16 %v2745
      %v2856 = vunpack.c.h.b16 %v2745
      %v2857 = vunpack.c.l.b16 %v2746
      %v2858 = vunpack.c.h.b16 %v2746
      %v2859 = vunpack.c.l.b16 %v2747
      %v2860 = vunpack.c.h.b16 %v2747
      %v2861 = vunpack.c.l.b16 %v2748
      %v2862 = vunpack.c.h.b16 %v2748
      %v2863 = vunpack.c.l.b16 %v2749
      %v2864 = vunpack.c.h.b16 %v2749
      %v2865 = vunpack.c.l.b16 %v2750
      %v2866 = vunpack.c.h.b16 %v2750
      %v2867 = vunpack.c.l.b16 %v2751
      %v2868 = vunpack.c.h.b16 %v2751
      %v2869 = vunpack.c.l.b16 %v2752
      %v2870 = vunpack.c.h.b16 %v2752
      %v2871 = vunpack.c.l.b16 %v2753
      %v2872 = vunpack.c.h.b16 %v2753
      %v2873 = vunpack.c.l.b16 %v2754
      %v2874 = vunpack.c.h.b16 %v2754
      %v2875 = vunpack.c.l.b16 %v2755
      %v2876 = vunpack.c.h.b16 %v2755
      %v2877 = vunpack.c.l.b16 %v2756
      %v2878 = vunpack.c.h.b16 %v2756
      %v2879 = vunpack.c.l.b16 %v2757
      %v2880 = vunpack.c.h.b16 %v2757
      %v2881 = vunpack.c.l.b16 %v2758
      %v2882 = vunpack.c.h.b16 %v2758
      %v2883 = vunpack.c.l.b16 %v2759
      %v2884 = vunpack.c.h.b16 %v2759
      %v2885 = vunpack.c.l.b16 %v2760
      %v2886 = vunpack.c.h.b16 %v2760
      %v2887 = vunpack.c.l.b16 %v2761
      %v2888 = vunpack.c.h.b16 %v2761
      %v2889 = vunpack.c.l.b16 %v2762
      %v2890 = vunpack.c.h.b16 %v2762
      %v2891 = vunpack.c.l.b16 %v2763
      %v2892 = vunpack.c.h.b16 %v2763
      %v2893 = vunpack.c.l.b16 %v2764
      %v2894 = vunpack.c.h.b16 %v2764
      %v2895 = vunpack.c.l.b16 %v2765
      %v2896 = vunpack.c.h.b16 %v2765
      %v2897 = vunpack.c.l.b16 %v2766
      %v2898 = vunpack.c.h.b16 %v2766
      %v2899 = vunpack.c.l.b16 %v2767
      %v2900 = vunpack.c.h.b16 %v2767
      %v2901 = vunpack.c.l.b16 %v2768
      %v2902 = vunpack.c.h.b16 %v2768
      %v2903 = vunpack.c.l.b16 %v2769
      %v2904 = vunpack.c.h.b16 %v2769
      %v2905 = vunpack.c.l.b16 %v2770
      %v2906 = vunpack.c.h.b16 %v2770
      %v2907 = vunpack.c.l.b16 %v2771
      %v2908 = vunpack.c.h.b16 %v2771
      %v2909 = vunpack.c.l.b16 %v2772
      %v2910 = vunpack.c.h.b16 %v2772
      %v2911 = vunpack.c.l.b16 %v2773
      %v2912 = vunpack.c.h.b16 %v2773
      %v2913 = vunpack.c.l.b16 %v2774
      %v2914 = vunpack.c.h.b16 %v2774
      %v2915 = vunpack.c.l.b16 %v2775
      %v2916 = vunpack.c.h.b16 %v2775
      %v2917 = vunpack.c.l.b16 %v2776
      %v2918 = vunpack.c.h.b16 %v2776
      %v2919 = vunpack.c.l.b16 %v2777
      %v2920 = vunpack.c.h.b16 %v2777
      %v2921 = vunpack.c.l.b16 %v2778
      %v2922 = vunpack.c.h.b16 %v2778
      %v2923 = vunpack.c.l.b16 %v2779
      %v2924 = vunpack.c.h.b16 %v2779
      %v2925 = vunpack.c.l.b16 %v2780
      %v2926 = vunpack.c.h.b16 %v2780
      %v2927 = vunpack.c.l.b16 %v2781
      %v2928 = vunpack.c.h.b16 %v2781
      %v2929 = vunpack.c.l.b16 %v2782
      %v2930 = vunpack.c.h.b16 %v2782
      %v2931 = vunpack.c.l.b16 %v2783
      %v2932 = vunpack.c.h.b16 %v2783
      %v2933 = vunpack.c.l.b16 %v2784
      %v2934 = vunpack.c.h.b16 %v2784
      %v2935 = vunpack.c.l.b16 %v2785
      %v2936 = vunpack.c.h.b16 %v2785
      %v2937 = vunpack.c.l.b16 %v2786
      %v2938 = vunpack.c.h.b16 %v2786
      %v2939 = vunpack.c.l.b16 %v2787
      %v2940 = vunpack.c.h.b16 %v2787
      %v2941 = vunpack.c.l.b16 %v2788
      %v2942 = vunpack.c.h.b16 %v2788
      %v2943 = vunpack.c.l.b16 %v2789
      %v2944 = vunpack.c.h.b16 %v2789
      %v2945 = vunpack.c.l.b16 %v2790
      %v2946 = vunpack.c.h.b16 %v2790
      %v2947 = vpack.c.b16 %v2853, %v2851
      %v2948 = vpack.c.b16 %v2854, %v2852
      %v2949 = vpack.c.b16 %v2857, %v2855
      %v2950 = vpack.c.b16 %v2858, %v2856
      %v2951 = vpack.c.b16 %v2861, %v2859
      %v2952 = vpack.c.b16 %v2862, %v2860
      %v2953 = vpack.c.b16 %v2865, %v2863
      %v2954 = vpack.c.b16 %v2866, %v2864
      %v2955 = vpack.c.b16 %v2869, %v2867
      %v2956 = vpack.c.b16 %v2870, %v2868
      %v2957 = vpack.c.b16 %v2873, %v2871
      %v2958 = vpack.c.b16 %v2874, %v2872
      %v2959 = vpack.c.b16 %v2877, %v2875
      %v2960 = vpack.c.b16 %v2878, %v2876
      %v2961 = vpack.c.b16 %v2881, %v2879
      %v2962 = vpack.c.b16 %v2882, %v2880
      %v2963 = vpack.c.b16 %v2885, %v2883
      %v2964 = vpack.c.b16 %v2886, %v2884
      %v2965 = vpack.c.b16 %v2889, %v2887
      %v2966 = vpack.c.b16 %v2890, %v2888
      %v2967 = vpack.c.b16 %v2893, %v2891
      %v2968 = vpack.c.b16 %v2894, %v2892
      %v2969 = vpack.c.b16 %v2897, %v2895
      %v2970 = vpack.c.b16 %v2898, %v2896
      %v2971 = vpack.c.b16 %v2901, %v2899
      %v2972 = vpack.c.b16 %v2902, %v2900
      %v2973 = vpack.c.b16 %v2905, %v2903
      %v2974 = vpack.c.b16 %v2906, %v2904
      %v2975 = vpack.c.b16 %v2909, %v2907
      %v2976 = vpack.c.b16 %v2910, %v2908
      %v2977 = vpack.c.b16 %v2913, %v2911
      %v2978 = vpack.c.b16 %v2914, %v2912
      %v2979 = vpack.c.b16 %v2917, %v2915
      %v2980 = vpack.c.b16 %v2918, %v2916
      %v2981 = vpack.c.b16 %v2921, %v2919
      %v2982 = vpack.c.b16 %v2922, %v2920
      %v2983 = vpack.c.b16 %v2925, %v2923
      %v2984 = vpack.c.b16 %v2926, %v2924
      %v2985 = vpack.c.b16 %v2929, %v2927
      %v2986 = vpack.c.b16 %v2930, %v2928
      %v2987 = vpack.c.b16 %v2933, %v2931
      %v2988 = vpack.c.b16 %v2934, %v2932
      %v2989 = vpack.c.b16 %v2937, %v2935
      %v2990 = vpack.c.b16 %v2938, %v2936
      %v2991 = vpack.c.b16 %v2941, %v2939
      %v2992 = vpack.c.b16 %v2942, %v2940
      %v2993 = vpack.c.b16 %v2945, %v2943
      %v2994 = vpack.c.b16 %v2946, %v2944
      %3043 = vmatprep.subr.bf16.mxu0 %v2962
      %3044 = vmatpush1.bf16.msra.mxu0 %v2961
      %3045 = vmatprep.subr.bf16.mxu0 %v2960
      %3046 = vmatpush1.bf16.msra.mxu0 %v2959
      %3047 = vmatprep.subr.bf16.mxu0 %v2958
      %3048 = vmatpush1.bf16.msra.mxu0 %v2957
      %3049 = vmatprep.subr.bf16.mxu0 %v2956
      %3050 = vmatpush1.bf16.msra.mxu0 %v2955
      %3051 = vmatprep.subr.bf16.mxu0 %v2954
      %3052 = vmatpush1.bf16.msra.mxu0 %v2953
      %3053 = vmatprep.subr.bf16.mxu0 %v2952
      %3054 = vmatpush1.bf16.msra.mxu0 %v2951
      %3055 = vmatprep.subr.bf16.mxu0 %v2950
      %3056 = vmatpush1.bf16.msra.mxu0 %v2949
      %3057 = vmatprep.subr.bf16.mxu0 %v2948
      %3058 = vmatpush1.bf16.msra.mxu0 %v2947
      %3059 = vmatprep.subr.bf16.mxu0 %v2978
      %3060 = vmatpush2.bf16.msra.mxu0 %v2977
      %3061 = vmatprep.subr.bf16.mxu0 %v2976
      %3062 = vmatpush2.bf16.msra.mxu0 %v2975
      %3063 = vmatprep.subr.bf16.mxu0 %v2974
      %3064 = vmatpush2.bf16.msra.mxu0 %v2973
      %3065 = vmatprep.subr.bf16.mxu0 %v2972
      %3066 = vmatpush2.bf16.msra.mxu0 %v2971
      %3067 = vmatprep.subr.bf16.mxu0 %v2970
      %3068 = vmatpush2.bf16.msra.mxu0 %v2969
      %3069 = vmatprep.subr.bf16.mxu0 %v2968
      %3070 = vmatpush2.bf16.msra.mxu0 %v2967
      %3071 = vmatprep.subr.bf16.mxu0 %v2966
      %3072 = vmatpush2.bf16.msra.mxu0 %v2965
      %3073 = vmatprep.subr.bf16.mxu0 %v2964
      %3074 = vmatpush2.bf16.msra.mxu0 %v2963
      %3075 = vmatprep.mubr.bf16.mxu0 %v2738
      %3076 = vmatmul.mubr.bf16.gmra.mxu0 %v2737
      %v3077 = vpop.f32.mrf.mxu0
      %v3078 = vadd.f32 %v2796, %v3077
      %v3079 = vpop.f32.mrf.mxu0
      %v3080 = vadd.f32 %v2800, %v3079
      %v3081 = vpop.f32.mrf.mxu0
      %v3082 = vadd.f32 %v2796, %v3081
      %v3083 = vpop.f32.mrf.mxu0
      %v3084 = vadd.f32 %v2800, %v3083
      %3085 = vmatprep.mubr.bf16.mxu0 %v2741
      %3086 = vmatmul.mubr.bf16.gmra.mxu0 %v2740
      %v3087 = vpop.f32.mrf.mxu0
      %v3088 = vadd.f32 %v2796, %v3087
      %v3089 = vpop.f32.mrf.mxu0
      %v3090 = vadd.f32 %v2800, %v3089
      %v3091 = vpop.f32.mrf.mxu0
      %v3092 = vadd.f32 %v2796, %v3091
      %v3093 = vpop.f32.mrf.mxu0
      %v3094 = vadd.f32 %v2800, %v3093
      %3095 = vdwg.mxu0
      %3096 = vmatprep.subr.bf16.mxu0 %v2994
      %3097 = vmatpush1.bf16.msra.mxu0 %v2993
      %3098 = vmatprep.subr.bf16.mxu0 %v2992
      %3099 = vmatpush1.bf16.msra.mxu0 %v2991
      %3100 = vmatprep.subr.bf16.mxu0 %v2990
      %3101 = vmatpush1.bf16.msra.mxu0 %v2989
      %3102 = vmatprep.subr.bf16.mxu0 %v2988
      %3103 = vmatpush1.bf16.msra.mxu0 %v2987
      %3104 = vmatprep.subr.bf16.mxu0 %v2986
      %3105 = vmatpush1.bf16.msra.mxu0 %v2985
      %3106 = vmatprep.subr.bf16.mxu0 %v2984
      %3107 = vmatpush1.bf16.msra.mxu0 %v2983
      %3108 = vmatprep.subr.bf16.mxu0 %v2982
      %3109 = vmatpush1.bf16.msra.mxu0 %v2981
      %3110 = vmatprep.subr.bf16.mxu0 %v2980
      %3111 = vmatpush1.bf16.msra.mxu0 %v2979
      %3112 = vmatprep.subr.bf16.mxu0 0
      %3113 = vmatpush2.bf16.msra.mxu0 0
      %3114 = vmatprep.subr.bf16.mxu0 0
      %3115 = vmatpush2.bf16.msra.mxu0 0
      %3116 = vmatprep.subr.bf16.mxu0 0
      %3117 = vmatpush2.bf16.msra.mxu0 0
      %3118 = vmatprep.subr.bf16.mxu0 0
      %3119 = vmatpush2.bf16.msra.mxu0 0
      %3120 = vmatprep.subr.bf16.mxu0 0
      %3121 = vmatpush2.bf16.msra.mxu0 0
      %3122 = vmatprep.subr.bf16.mxu0 0
      %3123 = vmatpush2.bf16.msra.mxu0 0
      %3124 = vmatprep.subr.bf16.mxu0 0
      %3125 = vmatpush2.bf16.msra.mxu0 0
      %3126 = vmatprep.subr.bf16.mxu0 0
      %3127 = vmatpush2.bf16.msra.mxu0 0
      %3128 = vmatprep.mubr.bf16.mxu0 0
      %3129 = vmatmul.mubr.bf16.gmra.mxu0 %v2739
      %v3130 = vpop.f32.mrf.mxu0
      %v3131 = vadd.f32 %v3078, %v3130
      %v3132 = vpop.f32.mrf.mxu0
      %v3133 = vadd.f32 %v3080, %v3132
      %v3134 = vpop.f32.mrf.mxu0
      %v3135 = vadd.f32 %v3082, %v3134
      %v3136 = vpop.f32.mrf.mxu0
      %v3137 = vadd.f32 %v3084, %v3136
      %3138 = vmatprep.mubr.bf16.mxu0 0
      %3139 = vmatmul.mubr.bf16.gmra.mxu0 %v2742
      %v3140 = vpop.f32.mrf.mxu0
      %v3141 = vadd.f32 %v3088, %v3140
      %v3142 = vpop.f32.mrf.mxu0
      %v3143 = vadd.f32 %v3090, %v3142
      %v3144 = vpop.f32.mrf.mxu0
      %v3145 = vadd.f32 %v3092, %v3144
      %v3146 = vpop.f32.mrf.mxu0
      %v3147 = vadd.f32 %v3094, %v3146
      %3148 = vdwg.mxu0
      %vm3149 = vcmp.ge.f32.partialorder %v3131, 0.0
      %vm3150 = vcmp.ge.f32.partialorder %v3133, 0.0
      %vm3151 = vcmp.ge.f32.partialorder %v3135, 0.0
      %vm3152 = vcmp.ge.f32.partialorder %v3137, 0.0
      %vm3153 = vcmp.ge.f32.partialorder %v3141, 0.0
      %vm3154 = vcmp.ge.f32.partialorder %v3143, 0.0
      %vm3155 = vcmp.ge.f32.partialorder %v3145, 0.0
      %vm3156 = vcmp.ge.f32.partialorder %v3147, 0.0
      %vm3157 = vmpackc.low %vm3151, %vm3149
      %vm3158 = vmpackc.low %vm3155, %vm3153
      %vm3159 = vmpackc.even %vm3158, %vm3157
      %vm3160 = vmpackc.low %vm3152, %vm3150
      %vm3161 = vmpackc.low %vm3156, %vm3154
      %vm3162 = vmpackc.even %vm3161, %vm3160
      %v3163 = vsel %vm3159, 16843009, 0
      %v3164 = vsel %vm3162, 16843009, 0
      %v3165 = vunpack.c.0.s8 %v3163
      %v3166 = vunpack.c.0.s8 %v3164
      %v3167 = vunpack.c.1.s8 %v3163
      %v3168 = vunpack.c.1.s8 %v3164
      %v3169 = vunpack.c.2.s8 %v3163
      %v3170 = vunpack.c.2.s8 %v3164
      %v3171 = vunpack.c.3.s8 %v3163
      %v3172 = vunpack.c.3.s8 %v3164
      %v3173 = vpack.c.b16 %v3166, %v3165
      %v3174 = vpack.c.b8 %v3173, %v3173
      %v3175 = vpack.c.b16 %v3168, %v3167
      %v3176 = vpack.c.b8 %v3175, %v3175
      %v3177 = vpack.c.b16 %v3170, %v3169
      %v3178 = vpack.c.b8 %v3177, %v3177
      %v3179 = vpack.c.b16 %v3172, %v3171
      %v3180 = vpack.c.b8 %v3179, %v3179
      %vm3181 = vcmask 1041408
      %vm3182 = vcmask 519170
      %vm3183 = vmor %vm3182, %vm3181
      %3184 = vst.msk [vmem:[%s849 + $0x12] sm:$0xf] %vm3183, %v3174
      %3185 = vst.msk [vmem:[%s849 + $0x46] sm:$0xf] %vm3183, %v3176
      %3186 = vst.msk [vmem:[%s849 + $0x7a] sm:$0xf] %vm3183, %v3178
      %3187 = vst.msk [vmem:[%s849 + $0xae] sm:$0xf] %vm3183, %v3180
      %v3188 = vsel %vm3149, %v3131, 0.0
      %v3189 = vsel %vm3150, %v3133, 0.0
      %v3190 = vsel %vm3151, %v3135, 0.0
      %v3191 = vsel %vm3152, %v3137, 0.0
      %v3192 = vsel %vm3153, %v3141, 0.0
      %v3193 = vsel %vm3154, %v3143, 0.0
      %v3194 = vsel %vm3155, %v3145, 0.0
      %v3195 = vsel %vm3156, %v3147, 0.0
      %v3196 = vpack.c.bf16 %v3190, %v3188
      %v3197 = vpack.c.bf16 %v3191, %v3189
      %v3198 = vpack.c.bf16 %v3194, %v3192
      %v3199 = vpack.c.bf16 %v3195, %v3193
      %v3200 = vld [vmem:[%s7] sm:$0xf]
      %v3201 = vld [vmem:[%s7 + $0x4] sm:$0xf]
      %v3202 = vld [vmem:[%s7 + $0x8] sm:$0xf]
      %v3203 = vld [vmem:[%s7 + $0xc] sm:$0xf]
      %v3204 = vld [vmem:[%s7 + $0x10] sm:$0xf]
      %v3205 = vld [vmem:[%s7 + $0x14] sm:$0xf]
      %v3206 = vld [vmem:[%s7 + $0x18] sm:$0xf]
      %v3207 = vld [vmem:[%s7 + $0x1c] sm:$0xf]
      %v3208 = vld [vmem:[%s7 + $0x20] sm:$0xf]
      %v3209 = vld [vmem:[%s7 + $0x24] sm:$0xf]
      %v3210 = vld [vmem:[%s7 + $0x28] sm:$0xf]
      %v3211 = vld [vmem:[%s7 + $0x2c] sm:$0xf]
      %v3212 = vld [vmem:[%s7 + $0x30] sm:$0xf]
      %v3213 = vld [vmem:[%s7 + $0x34] sm:$0xf]
      %v3214 = vld [vmem:[%s7 + $0x38] sm:$0xf]
      %v3215 = vld [vmem:[%s7 + $0x3c] sm:$0xf]
      %v3216 = vld [vmem:[%s7 + $0x40] sm:$0xf]
      %v3217 = vld [vmem:[%s7 + $0x44] sm:$0xf]
      %v3218 = vld [vmem:[%s7 + $0x48] sm:$0xf]
      %v3219 = vld [vmem:[%s7 + $0x4c] sm:$0xf]
      %v3220 = vld [vmem:[%s7 + $0x50] sm:$0xf]
      %v3221 = vld [vmem:[%s7 + $0x54] sm:$0xf]
      %v3222 = vld [vmem:[%s7 + $0x58] sm:$0xf]
      %v3223 = vld [vmem:[%s7 + $0x5c] sm:$0xf]
      %v3224 = vld [vmem:[%s8] sm:$0x1]
      %v3226 = vlaneseq
      %v3227 = vshrl.u32 %v3226, 7
      %v3228 = vsub.s32 0, %v3227
      %v3229 = vrot.slane %v3224, %v3228
      %v3255 = vunpack.c.l.b16 %v3200
      %v3256 = vunpack.c.l.b16 %v3201
      %v3257 = vunpack.c.l.b16 %v3202
      %v3258 = vunpack.c.l.b16 %v3203
      %v3259 = vunpack.c.l.b16 %v3204
      %v3260 = vunpack.c.l.b16 %v3205
      %v3261 = vunpack.c.l.b16 %v3206
      %v3262 = vunpack.c.l.b16 %v3207
      %v3263 = vunpack.c.l.b16 %v3208
      %v3264 = vunpack.c.l.b16 %v3209
      %v3265 = vunpack.c.l.b16 %v3210
      %v3266 = vunpack.c.l.b16 %v3211
      %v3267 = vunpack.c.l.b16 %v3212
      %v3268 = vunpack.c.l.b16 %v3213
      %v3269 = vunpack.c.l.b16 %v3214
      %v3270 = vunpack.c.l.b16 %v3215
      %v3271 = vunpack.c.l.b16 %v3216
      %v3272 = vunpack.c.l.b16 %v3217
      %v3273 = vunpack.c.l.b16 %v3218
      %v3274 = vunpack.c.l.b16 %v3219
      %v3275 = vunpack.c.l.b16 %v3220
      %v3276 = vunpack.c.l.b16 %v3221
      %v3277 = vunpack.c.l.b16 %v3222
      %v3278 = vunpack.c.l.b16 %v3223
      %v3279 = vpack.c.b16 %v3256, %v3255
      %v3280 = vpack.c.b16 %v3258, %v3257
      %v3281 = vpack.c.b16 %v3260, %v3259
      %v3282 = vpack.c.b16 %v3262, %v3261
      %v3283 = vpack.c.b16 %v3264, %v3263
      %v3284 = vpack.c.b16 %v3266, %v3265
      %v3285 = vpack.c.b16 %v3268, %v3267
      %v3286 = vpack.c.b16 %v3270, %v3269
      %v3287 = vpack.c.b16 %v3272, %v3271
      %v3288 = vpack.c.b16 %v3274, %v3273
      %v3289 = vpack.c.b16 %v3276, %v3275
      %v3290 = vpack.c.b16 %v3278, %v3277
      %vm3303 = vcmask 523264
      %v3305 = vsel %vm3303, %v3197, 0
      %v3308 = vsel %vm3303, %v3199, 0
      %3310 = vmatprep.subr.bf16.mxu0 0
      %3311 = vmatpush1.bf16.msra.mxu0 %v3286
      %3312 = vmatprep.subr.bf16.mxu0 0
      %3313 = vmatpush1.bf16.msra.mxu0 %v3285
      %3314 = vmatprep.subr.bf16.mxu0 0
      %3315 = vmatpush1.bf16.msra.mxu0 %v3284
      %3316 = vmatprep.subr.bf16.mxu0 0
      %3317 = vmatpush1.bf16.msra.mxu0 %v3283
      %3318 = vmatprep.subr.bf16.mxu0 0
      %3319 = vmatpush1.bf16.msra.mxu0 %v3282
      %3320 = vmatprep.subr.bf16.mxu0 0
      %3321 = vmatpush1.bf16.msra.mxu0 %v3281
      %3322 = vmatprep.subr.bf16.mxu0 0
      %3323 = vmatpush1.bf16.msra.mxu0 %v3280
      %3324 = vmatprep.subr.bf16.mxu0 0
      %3325 = vmatpush1.bf16.msra.mxu0 %v3279
      %3326 = vmatprep.subr.bf16.mxu0 0
      %3327 = vmatpush2.bf16.msra.mxu0 0
      %3328 = vmatprep.subr.bf16.mxu0 0
      %3329 = vmatpush2.bf16.msra.mxu0 0
      %3330 = vmatprep.subr.bf16.mxu0 0
      %3331 = vmatpush2.bf16.msra.mxu0 0
      %3332 = vmatprep.subr.bf16.mxu0 0
      %3333 = vmatpush2.bf16.msra.mxu0 0
      %3334 = vmatprep.subr.bf16.mxu0 0
      %3335 = vmatpush2.bf16.msra.mxu0 %v3290
      %3336 = vmatprep.subr.bf16.mxu0 0
      %3337 = vmatpush2.bf16.msra.mxu0 %v3289
      %3338 = vmatprep.subr.bf16.mxu0 0
      %3339 = vmatpush2.bf16.msra.mxu0 %v3288
      %3340 = vmatprep.subr.bf16.mxu0 0
      %3341 = vmatpush2.bf16.msra.mxu0 %v3287
      %3342 = vmatprep.mubr.bf16.mxu0 %v3305
      %3343 = vmatmul.mubr.bf16.gmra.mxu0 %v3196
      %v3344 = vpop.f32.mrf.mxu0
      %v3345 = vadd.f32 %v3229, %v3344
      %v3346 = vpop.f32.mrf.mxu0
      %v3347 = vpop.f32.mrf.mxu0
      %v3348 = vadd.f32 %v3229, %v3347
      %v3349 = vpop.f32.mrf.mxu0
      %3350 = vmatprep.mubr.bf16.mxu0 %v3308
      %3351 = vmatmul.mubr.bf16.gmra.mxu0 %v3198
      %v3352 = vpop.f32.mrf.mxu0
      %v3353 = vadd.f32 %v3229, %v3352
      %v3354 = vpop.f32.mrf.mxu0
      %v3355 = vpop.f32.mrf.mxu0
      %v3356 = vadd.f32 %v3229, %v3355
      %v3357 = vpop.f32.mrf.mxu0
      %3358 = vdwg.mxu0
      %vm3359 = vcmp.ge.f32.partialorder %v3345, 0.0
      %vm3360 = vcmp.ge.f32.partialorder %v3348, 0.0
      %vm3361 = vcmp.ge.f32.partialorder %v3353, 0.0
      %vm3362 = vcmp.ge.f32.partialorder %v3356, 0.0
      %vm3363 = vmpackc.low %vm3360, %vm3359
      %vm3364 = vmpackc.low %vm3362, %vm3361
      %vm3365 = vmpackc.even %vm3364, %vm3363
      %v3366 = vsel %vm3365, 16843009, 0
      %v3367 = vunpack.c.0.s8 %v3366
      %v3368 = vunpack.c.1.s8 %v3366
      %v3369 = vunpack.c.2.s8 %v3366
      %v3370 = vunpack.c.3.s8 %v3366
      %v3371 = vpack.c.b16 %v3367, %v3367
      %v3372 = vpack.c.b8 %v3371, %v3371
      %v3373 = vpack.c.b16 %v3368, %v3368
      %v3374 = vpack.c.b8 %v3373, %v3373
      %v3375 = vpack.c.b16 %v3369, %v3369
      %v3376 = vpack.c.b8 %v3375, %v3375
      %v3377 = vpack.c.b16 %v3370, %v3370
      %v3378 = vpack.c.b8 %v3377, %v3377
      %vm3379 = vcmask 779264
      %3380 = vst.msk [vmem:[%s849 + $0x16] sm:$0x3] %vm3379, %v3372
      %3381 = vst.msk [vmem:[%s849 + $0x4a] sm:$0x3] %vm3379, %v3374
      %3382 = vst.msk [vmem:[%s849 + $0x7e] sm:$0x3] %vm3379, %v3376
      %3383 = vst.msk [vmem:[%s849 + $0xb2] sm:$0x3] %vm3379, %v3378
      %v3384 = vsel %vm3359, %v3345, 0.0
      %v3385 = vsel %vm3360, %v3348, 0.0
      %v3386 = vsel %vm3361, %v3353, 0.0
      %v3387 = vsel %vm3362, %v3356, 0.0
      %v3388 = vpack.c.bf16 %v3385, %v3384
      %v3389 = vpack.c.bf16 %v3387, %v3386
      %v3390 = vld [vmem:[%s9] sm:$0xf]
      %v3391 = vld [vmem:[%s9 + $0x4] sm:$0xf]
      %v3392 = vld [vmem:[%s9 + $0x8] sm:$0xf]
      %v3393 = vld [vmem:[%s9 + $0xc] sm:$0xf]
      %v3394 = vld [vmem:[%s9 + $0x10] sm:$0xf]
      %v3395 = vld [vmem:[%s9 + $0x14] sm:$0xf]
      %v3396 = vld [vmem:[%s9 + $0x18] sm:$0xf]
      %v3397 = vld [vmem:[%s9 + $0x1c] sm:$0xf]
      %v3398 = vld [vmem:[%s9 + $0x20] sm:$0xf]
      %v3399 = vld [vmem:[%s9 + $0x24] sm:$0xf]
      %v3400 = vld [vmem:[%s9 + $0x28] sm:$0xf]
      %v3401 = vld [vmem:[%s9 + $0x2c] sm:$0xf]
      %v3402 = vld [vmem:[%s10] sm:$0x1]
      %v3404 = vlaneseq
      %v3405 = vshrl.u32 %v3404, 7
      %v3406 = vsub.s32 0, %v3405
      %v3407 = vrot.slane %v3402, %v3406
      %v3421 = vunpack.c.l.b16 %v3390
      %v3422 = vunpack.c.l.b16 %v3391
      %v3423 = vunpack.c.l.b16 %v3392
      %v3424 = vunpack.c.l.b16 %v3393
      %v3425 = vunpack.c.l.b16 %v3394
      %v3426 = vunpack.c.l.b16 %v3395
      %v3427 = vunpack.c.l.b16 %v3396
      %v3428 = vunpack.c.l.b16 %v3397
      %v3429 = vunpack.c.l.b16 %v3398
      %v3430 = vunpack.c.l.b16 %v3399
      %v3431 = vunpack.c.l.b16 %v3400
      %v3432 = vunpack.c.l.b16 %v3401
      %v3433 = vpack.c.b16 %v3422, %v3421
      %v3434 = vpack.c.b16 %v3424, %v3423
      %v3435 = vpack.c.b16 %v3426, %v3425
      %v3436 = vpack.c.b16 %v3428, %v3427
      %v3437 = vpack.c.b16 %v3430, %v3429
      %v3438 = vpack.c.b16 %v3432, %v3431
      %vm3445 = vcmask 785408
      %v3447 = vsel %vm3445, %v3388, 0
      %v3450 = vsel %vm3445, %v3389, 0
      %3452 = vmatprep.subr.bf16.mxu0 0
      %3453 = vmatpush1.bf16.msra.mxu0 0
      %3454 = vmatprep.subr.bf16.mxu0 0
      %3455 = vmatpush1.bf16.msra.mxu0 0
      %3456 = vmatprep.subr.bf16.mxu0 0
      %3457 = vmatpush1.bf16.msra.mxu0 %v3438
      %3458 = vmatprep.subr.bf16.mxu0 0
      %3459 = vmatpush1.bf16.msra.mxu0 %v3437
      %3460 = vmatprep.subr.bf16.mxu0 0
      %3461 = vmatpush1.bf16.msra.mxu0 %v3436
      %3462 = vmatprep.subr.bf16.mxu0 0
      %3463 = vmatpush1.bf16.msra.mxu0 %v3435
      %3464 = vmatprep.subr.bf16.mxu0 0
      %3465 = vmatpush1.bf16.msra.mxu0 %v3434
      %3466 = vmatprep.subr.bf16.mxu0 0
      %3467 = vmatpush1.bf16.msra.mxu0 %v3433
      %3468 = vmatprep.subr.bf16.mxu0 0
      %3469 = vmatpush2.bf16.msra.mxu0 0
      %3470 = vmatprep.subr.bf16.mxu0 0
      %3471 = vmatpush2.bf16.msra.mxu0 0
      %3472 = vmatprep.subr.bf16.mxu0 0
      %3473 = vmatpush2.bf16.msra.mxu0 0
      %3474 = vmatprep.subr.bf16.mxu0 0
      %3475 = vmatpush2.bf16.msra.mxu0 0
      %3476 = vmatprep.subr.bf16.mxu0 0
      %3477 = vmatpush2.bf16.msra.mxu0 0
      %3478 = vmatprep.subr.bf16.mxu0 0
      %3479 = vmatpush2.bf16.msra.mxu0 0
      %3480 = vmatprep.subr.bf16.mxu0 0
      %3481 = vmatpush2.bf16.msra.mxu0 0
      %3482 = vmatprep.subr.bf16.mxu0 0
      %3483 = vmatpush2.bf16.msra.mxu0 0
      %3484 = vmatprep.mubr.bf16.mxu0 0
      %3485 = vmatmul.mubr.bf16.gmra.mxu0 %v3447
      %v3486 = vpop.f32.mrf.mxu0
      %v3487 = vadd.f32 %v3407, %v3486
      %v3488 = vpop.f32.mrf.mxu0
      %v3489 = vpop.f32.mrf.mxu0
      %v3490 = vadd.f32 %v3407, %v3489
      %v3491 = vpop.f32.mrf.mxu0
      %3492 = vmatprep.mubr.bf16.mxu0 0
      %3493 = vmatmul.mubr.bf16.gmra.mxu0 %v3450
      %v3494 = vpop.f32.mrf.mxu0
      %v3495 = vadd.f32 %v3407, %v3494
      %v3496 = vpop.f32.mrf.mxu0
      %v3497 = vpop.f32.mrf.mxu0
      %v3498 = vadd.f32 %v3407, %v3497
      %v3499 = vpop.f32.mrf.mxu0
      %3500 = vdwg.mxu0
      %vm3501 = vcmp.ge.f32.partialorder %v3487, 0.0
      %vm3502 = vcmp.ge.f32.partialorder %v3490, 0.0
      %vm3503 = vcmp.ge.f32.partialorder %v3495, 0.0
      %vm3504 = vcmp.ge.f32.partialorder %v3498, 0.0
      %vm3505 = vmpackc.low %vm3502, %vm3501
      %vm3506 = vmpackc.low %vm3504, %vm3503
      %vm3507 = vmpackc.even %vm3506, %vm3505
      %v3508 = vsel %vm3507, 16843009, 0
      %v3509 = vunpack.c.0.s8 %v3508
      %v3510 = vunpack.c.1.s8 %v3508
      %v3511 = vunpack.c.2.s8 %v3508
      %v3512 = vunpack.c.3.s8 %v3508
      %v3513 = vpack.c.b16 %v3509, %v3509
      %v3514 = vpack.c.b8 %v3513, %v3513
      %v3515 = vpack.c.b16 %v3510, %v3510
      %v3516 = vpack.c.b8 %v3515, %v3515
      %v3517 = vpack.c.b16 %v3511, %v3511
      %v3518 = vpack.c.b8 %v3517, %v3517
      %v3519 = vpack.c.b16 %v3512, %v3512
      %v3520 = vpack.c.b8 %v3519, %v3519
      %vm3521 = vcmask 386048
      %3522 = vst.msk [vmem:[%s849 + $0x18] sm:$0x3] %vm3521, %v3514
      %3523 = vst.msk [vmem:[%s849 + $0x4c] sm:$0x3] %vm3521, %v3516
      %3524 = vst.msk [vmem:[%s849 + $0x80] sm:$0x3] %vm3521, %v3518
      %3525 = vst.msk [vmem:[%s849 + $0xb4] sm:$0x3] %vm3521, %v3520
      %v3526 = vsel %vm3501, %v3487, 0.0
      %v3527 = vsel %vm3502, %v3490, 0.0
      %v3528 = vsel %vm3503, %v3495, 0.0
      %v3529 = vsel %vm3504, %v3498, 0.0
      %v3530 = vpack.c.bf16 %v3527, %v3526
      %v3531 = vpack.c.bf16 %v3529, %v3528
      %v3532 = vld [vmem:[%s11] sm:$0xf]
      %v3533 = vld [vmem:[%s11 + $0x4] sm:$0xf]
      %v3534 = vld [vmem:[%s11 + $0x8] sm:$0xf]
      %v3535 = vld [vmem:[%s11 + $0xc] sm:$0xf]
      %v3536 = vld [vmem:[%s11 + $0x10] sm:$0xf]
      %v3537 = vld [vmem:[%s11 + $0x14] sm:$0xf]
      %v3538 = vld [vmem:[%s12] sm:$0x1]
      %v3540 = vlaneseq
      %v3541 = vshrl.u32 %v3540, 7
      %v3542 = vsub.s32 0, %v3541
      %v3543 = vrot.slane %v3538, %v3542
      %v3551 = vunpack.c.l.b16 %v3532
      %v3552 = vunpack.c.l.b16 %v3533
      %v3553 = vunpack.c.l.b16 %v3534
      %v3554 = vunpack.c.l.b16 %v3535
      %v3555 = vunpack.c.l.b16 %v3536
      %v3556 = vunpack.c.l.b16 %v3537
      %v3557 = vpack.c.b16 %v3552, %v3551
      %v3558 = vpack.c.b16 %v3554, %v3553
      %v3559 = vpack.c.b16 %v3556, %v3555
      %vm3563 = vcmask 392192
      %v3565 = vsel %vm3563, %v3530, 0
      %v3568 = vsel %vm3563, %v3531, 0
      %3570 = vmatprep.subr.bf16.mxu0 0
      %3571 = vmatpush1.bf16.msra.mxu0 0
      %3572 = vmatprep.subr.bf16.mxu0 0
      %3573 = vmatpush1.bf16.msra.mxu0 0
      %3574 = vmatprep.subr.bf16.mxu0 0
      %3575 = vmatpush1.bf16.msra.mxu0 0
      %3576 = vmatprep.subr.bf16.mxu0 0
      %3577 = vmatpush1.bf16.msra.mxu0 0
      %3578 = vmatprep.subr.bf16.mxu0 0
      %3579 = vmatpush1.bf16.msra.mxu0 0
      %3580 = vmatprep.subr.bf16.mxu0 0
      %3581 = vmatpush1.bf16.msra.mxu0 %v3559
      %3582 = vmatprep.subr.bf16.mxu0 0
      %3583 = vmatpush1.bf16.msra.mxu0 %v3558
      %3584 = vmatprep.subr.bf16.mxu0 0
      %3585 = vmatpush1.bf16.msra.mxu0 %v3557
      %3586 = vmatprep.subr.bf16.mxu0 0
      %3587 = vmatpush2.bf16.msra.mxu0 0
      %3588 = vmatprep.subr.bf16.mxu0 0
      %3589 = vmatpush2.bf16.msra.mxu0 0
      %3590 = vmatprep.subr.bf16.mxu0 0
      %3591 = vmatpush2.bf16.msra.mxu0 0
      %3592 = vmatprep.subr.bf16.mxu0 0
      %3593 = vmatpush2.bf16.msra.mxu0 0
      %3594 = vmatprep.subr.bf16.mxu0 0
      %3595 = vmatpush2.bf16.msra.mxu0 0
      %3596 = vmatprep.subr.bf16.mxu0 0
      %3597 = vmatpush2.bf16.msra.mxu0 0
      %3598 = vmatprep.subr.bf16.mxu0 0
      %3599 = vmatpush2.bf16.msra.mxu0 0
      %3600 = vmatprep.subr.bf16.mxu0 0
      %3601 = vmatpush2.bf16.msra.mxu0 0
      %3602 = vmatprep.mubr.bf16.mxu0 0
      %3603 = vmatmul.mubr.bf16.gmra.mxu0 %v3565
      %v3604 = vpop.f32.mrf.mxu0
      %v3605 = vadd.f32 %v3543, %v3604
      %v3606 = vpop.f32.mrf.mxu0
      %v3607 = vpop.f32.mrf.mxu0
      %v3608 = vadd.f32 %v3543, %v3607
      %v3609 = vpop.f32.mrf.mxu0
      %3610 = vmatprep.mubr.bf16.mxu0 0
      %3611 = vmatmul.mubr.bf16.gmra.mxu0 %v3568
      %v3612 = vpop.f32.mrf.mxu0
      %v3613 = vadd.f32 %v3543, %v3612
      %v3614 = vpop.f32.mrf.mxu0
      %v3615 = vpop.f32.mrf.mxu0
      %v3616 = vadd.f32 %v3543, %v3615
      %v3617 = vpop.f32.mrf.mxu0
      %3618 = vdwg.mxu0
      %vm3619 = vcmask 15360
      %3620 = vst.msk [vmem:[%s842] sm:$0xff] %vm3619, %v3605
      %3621 = vst.msk [vmem:[%s842 + $0x8] sm:$0xff] %vm3619, %v3608
      %3622 = vst.msk [vmem:[%s842 + $0x10] sm:$0xff] %vm3619, %v3613
      %3623 = vst.msk [vmem:[%s842 + $0x18] sm:$0xff] %vm3619, %v3616
      %v3624 = vld [vmem:[%s13] sm:$0x3]
      %v3625 = vld [vmem:[%s14] sm:$0x1]
      %3627 = vset.pattern.permute.xlu0 0
      %3628 = vperm.xlu0 %3627, %v3605
      %v3629 = vpop.permute.xlu0 %3628
      %3632 = vset.pattern.permute.xlu0 0
      %3633 = vperm.xlu0 %3632, %v3608
      %v3634 = vpop.permute.xlu0 %3633
      %3637 = vset.pattern.permute.xlu0 0
      %3638 = vperm.xlu0 %3637, %v3613
      %v3639 = vpop.permute.xlu0 %3638
      %3642 = vset.pattern.permute.xlu0 0
      %3643 = vperm.xlu0 %3642, %v3616
      %v3644 = vpop.permute.xlu0 %3643
      %v3646 = vlaneseq
      %v3647 = vshrl.u32 %v3646, 7
      %v3648 = vsub.s32 0, %v3647
      %v3649 = vrot.slane %v3624, %v3648
      %v3650 = vmul.f32 %v3629, %v3649
      %v3651 = vmul.f32 %v3634, %v3649
      %v3652 = vmul.f32 %v3639, %v3649
      %v3653 = vmul.f32 %v3644, %v3649
      %v3655 = vlaneseq
      %v3656 = vshrl.u32 %v3655, 7
      %v3657 = vsub.s32 0, %v3656
      %v3658 = vrot.slane %v3625, %v3657
      %v3660 = vadd.f32 %v3650, %v3658
      %v3661 = vadd.f32 %v3651, %v3658
      %v3662 = vadd.f32 %v3652, %v3658
      %v3663 = vadd.f32 %v3653, %v3658
      %3664 = vset.pattern.permute.xlu0 1
      %3665 = vperm.xlu0 %3664, %v3605
      %v3666 = vpop.permute.xlu0 %3665
      %3668 = vset.pattern.permute.xlu0 1
      %3669 = vperm.xlu0 %3668, %v3608
      %v3670 = vpop.permute.xlu0 %3669
      %3672 = vset.pattern.permute.xlu0 1
      %3673 = vperm.xlu0 %3672, %v3613
      %v3674 = vpop.permute.xlu0 %3673
      %3676 = vset.pattern.permute.xlu0 1
      %3677 = vperm.xlu0 %3676, %v3616
      %v3678 = vpop.permute.xlu0 %3677
      %v3680 = vlaneseq
      %v3681 = vshrl.u32 %v3680, 7
      %v3682 = vsub.s32 1, %v3681
      %v3683 = vrot.slane %v3624, %v3682
      %v3684 = vmul.f32 %v3666, %v3683
      %v3685 = vmul.f32 %v3670, %v3683
      %v3686 = vmul.f32 %v3674, %v3683
      %v3687 = vmul.f32 %v3678, %v3683
      %v3688 = vadd.f32 %v3660, %v3684
      %v3689 = vadd.f32 %v3661, %v3685
      %v3690 = vadd.f32 %v3662, %v3686
      %v3691 = vadd.f32 %v3663, %v3687
      %vm3692 = vcmp.ge.f32.partialorder %v3688, 0.0
      %vm3693 = vcmp.ge.f32.partialorder %v3689, 0.0
      %vm3694 = vcmp.ge.f32.partialorder %v3690, 0.0
      %vm3695 = vcmp.ge.f32.partialorder %v3691, 0.0
      %vm3696 = vmpackc.low %vm3693, %vm3692
      %vm3697 = vmpackc.low %vm3695, %vm3694
      %vm3698 = vmpackc.even %vm3697, %vm3696
      %v3699 = vsel %vm3698, 16843009, 0
      %v3700 = vunpack.c.0.s8 %v3699
      %v3701 = vunpack.c.1.s8 %v3699
      %v3702 = vunpack.c.2.s8 %v3699
      %v3703 = vunpack.c.3.s8 %v3699
      %v3704 = vpack.c.b16 %v3700, %v3700
      %v3705 = vpack.c.b8 %v3704, %v3704
      %v3706 = vpack.c.b16 %v3701, %v3701
      %v3707 = vpack.c.b8 %v3706, %v3706
      %v3708 = vpack.c.b16 %v3702, %v3702
      %v3709 = vpack.c.b8 %v3708, %v3708
      %v3710 = vpack.c.b16 %v3703, %v3703
      %v3711 = vpack.c.b8 %v3710, %v3710
      %3712 = vst.msk [vmem:[%s849 + $0x1a] sm:$0x3] %vm3521, %v3705
      %3713 = vst.msk [vmem:[%s849 + $0x4e] sm:$0x3] %vm3521, %v3707
      %3714 = vst.msk [vmem:[%s849 + $0x82] sm:$0x3] %vm3521, %v3709
      %3715 = vst.msk [vmem:[%s849 + $0xb6] sm:$0x3] %vm3521, %v3711
      %v3716 = vsel %vm3692, %v3688, 0.0
      %v3717 = vsel %vm3693, %v3689, 0.0
      %v3718 = vsel %vm3694, %v3690, 0.0
      %v3719 = vsel %vm3695, %v3691, 0.0
      %v3720 = vpack.c.bf16 %v3717, %v3716
      %v3721 = vpack.c.bf16 %v3719, %v3718
      %v3722 = vld [vmem:[%s15] sm:$0xf]
      %v3723 = vld [vmem:[%s15 + $0x4] sm:$0xf]
      %v3724 = vld [vmem:[%s15 + $0x8] sm:$0xf]
      %v3725 = vld [vmem:[%s15 + $0xc] sm:$0xf]
      %v3726 = vld [vmem:[%s15 + $0x10] sm:$0xf]
      %v3727 = vld [vmem:[%s15 + $0x14] sm:$0xf]
      %v3728 = vld [vmem:[%s16] sm:$0x1]
      %v3730 = vlaneseq
      %v3731 = vshrl.u32 %v3730, 7
      %v3732 = vsub.s32 0, %v3731
      %v3733 = vrot.slane %v3728, %v3732
      %v3741 = vunpack.c.l.b16 %v3722
      %v3742 = vunpack.c.l.b16 %v3723
      %v3743 = vunpack.c.l.b16 %v3724
      %v3744 = vunpack.c.l.b16 %v3725
      %v3745 = vunpack.c.l.b16 %v3726
      %v3746 = vunpack.c.l.b16 %v3727
      %v3747 = vpack.c.b16 %v3742, %v3741
      %v3748 = vpack.c.b16 %v3744, %v3743
      %v3749 = vpack.c.b16 %v3746, %v3745
      %v3754 = vsel %vm3563, %v3720, 0
      %v3757 = vsel %vm3563, %v3721, 0
      %3759 = vmatprep.subr.bf16.mxu0 0
      %3760 = vmatpush1.bf16.msra.mxu0 0
      %3761 = vmatprep.subr.bf16.mxu0 0
      %3762 = vmatpush1.bf16.msra.mxu0 0
      %3763 = vmatprep.subr.bf16.mxu0 0
      %3764 = vmatpush1.bf16.msra.mxu0 0
      %3765 = vmatprep.subr.bf16.mxu0 0
      %3766 = vmatpush1.bf16.msra.mxu0 0
      %3767 = vmatprep.subr.bf16.mxu0 0
      %3768 = vmatpush1.bf16.msra.mxu0 0
      %3769 = vmatprep.subr.bf16.mxu0 0
      %3770 = vmatpush1.bf16.msra.mxu0 %v3749
      %3771 = vmatprep.subr.bf16.mxu0 0
      %3772 = vmatpush1.bf16.msra.mxu0 %v3748
      %3773 = vmatprep.subr.bf16.mxu0 0
      %3774 = vmatpush1.bf16.msra.mxu0 %v3747
      %3775 = vmatprep.subr.bf16.mxu0 0
      %3776 = vmatpush2.bf16.msra.mxu0 0
      %3777 = vmatprep.subr.bf16.mxu0 0
      %3778 = vmatpush2.bf16.msra.mxu0 0
      %3779 = vmatprep.subr.bf16.mxu0 0
      %3780 = vmatpush2.bf16.msra.mxu0 0
      %3781 = vmatprep.subr.bf16.mxu0 0
      %3782 = vmatpush2.bf16.msra.mxu0 0
      %3783 = vmatprep.subr.bf16.mxu0 0
      %3784 = vmatpush2.bf16.msra.mxu0 0
      %3785 = vmatprep.subr.bf16.mxu0 0
      %3786 = vmatpush2.bf16.msra.mxu0 0
      %3787 = vmatprep.subr.bf16.mxu0 0
      %3788 = vmatpush2.bf16.msra.mxu0 0
      %3789 = vmatprep.subr.bf16.mxu0 0
      %3790 = vmatpush2.bf16.msra.mxu0 0
      %3791 = vmatprep.mubr.bf16.mxu0 0
      %3792 = vmatmul.mubr.bf16.gmra.mxu0 %v3754
      %v3793 = vpop.f32.mrf.mxu0
      %v3794 = vadd.f32 %v3733, %v3793
      %v3795 = vpop.f32.mrf.mxu0
      %v3796 = vpop.f32.mrf.mxu0
      %v3797 = vadd.f32 %v3733, %v3796
      %v3798 = vpop.f32.mrf.mxu0
      %3799 = vmatprep.mubr.bf16.mxu0 0
      %3800 = vmatmul.mubr.bf16.gmra.mxu0 %v3757
      %v3801 = vpop.f32.mrf.mxu0
      %v3802 = vadd.f32 %v3733, %v3801
      %v3803 = vpop.f32.mrf.mxu0
      %v3804 = vpop.f32.mrf.mxu0
      %v3805 = vadd.f32 %v3733, %v3804
      %v3806 = vpop.f32.mrf.mxu0
      %3807 = vdwg.mxu0
      %vm3808 = vcmp.ge.f32.partialorder %v3794, 0.0
      %vm3809 = vcmp.ge.f32.partialorder %v3797, 0.0
      %vm3810 = vcmp.ge.f32.partialorder %v3802, 0.0
      %vm3811 = vcmp.ge.f32.partialorder %v3805, 0.0
      %vm3812 = vmpackc.low %vm3809, %vm3808
      %vm3813 = vmpackc.low %vm3811, %vm3810
      %vm3814 = vmpackc.even %vm3813, %vm3812
      %v3815 = vsel %vm3814, 16843009, 0
      %v3816 = vunpack.c.0.s8 %v3815
      %v3817 = vunpack.c.1.s8 %v3815
      %v3818 = vunpack.c.2.s8 %v3815
      %v3819 = vunpack.c.3.s8 %v3815
      %v3820 = vpack.c.b16 %v3816, %v3816
      %v3821 = vpack.c.b8 %v3820, %v3820
      %v3822 = vpack.c.b16 %v3817, %v3817
      %v3823 = vpack.c.b8 %v3822, %v3822
      %v3824 = vpack.c.b16 %v3818, %v3818
      %v3825 = vpack.c.b8 %v3824, %v3824
      %v3826 = vpack.c.b16 %v3819, %v3819
      %v3827 = vpack.c.b8 %v3826, %v3826
      %3828 = vst.msk [vmem:[%s849 + $0x1c] sm:$0x3] %vm3379, %v3821
      %3829 = vst.msk [vmem:[%s849 + $0x50] sm:$0x3] %vm3379, %v3823
      %3830 = vst.msk [vmem:[%s849 + $0x84] sm:$0x3] %vm3379, %v3825
      %3831 = vst.msk [vmem:[%s849 + $0xb8] sm:$0x3] %vm3379, %v3827
      %v3832 = vsel %vm3808, %v3794, 0.0
      %v3833 = vsel %vm3809, %v3797, 0.0
      %v3834 = vsel %vm3810, %v3802, 0.0
      %v3835 = vsel %vm3811, %v3805, 0.0
      %v3836 = vpack.c.bf16 %v3833, %v3832
      %v3837 = vpack.c.bf16 %v3835, %v3834
      %v3838 = vld [vmem:[%s17] sm:$0xff]
      %v3839 = vld [vmem:[%s17 + $0x8] sm:$0xff]
      %v3840 = vld [vmem:[%s17 + $0x10] sm:$0xff]
      %v3841 = vld [vmem:[%s17 + $0x18] sm:$0xff]
      %v3842 = vld [vmem:[%s17 + $0x20] sm:$0xff]
      %v3843 = vld [vmem:[%s17 + $0x28] sm:$0xff]
      %v3844 = vld [vmem:[%s17 + $0x30] sm:$0xff]
      %v3845 = vld [vmem:[%s17 + $0x38] sm:$0xff]
      %v3846 = vld [vmem:[%s17 + $0x40] sm:$0xff]
      %v3847 = vld [vmem:[%s17 + $0x48] sm:$0xff]
      %v3848 = vld [vmem:[%s17 + $0x50] sm:$0xff]
      %v3849 = vld [vmem:[%s17 + $0x58] sm:$0xff]
      %v3850 = vld [vmem:[%s18] sm:$0x3]
      %v3852 = vlaneseq
      %v3853 = vshrl.u32 %v3852, 7
      %v3854 = vsub.s32 0, %v3853
      %v3855 = vrot.slane %v3850, %v3854
      %v3856 = vlaneseq
      %v3857 = vshrl.u32 %v3856, 7
      %v3858 = vsub.s32 1, %v3857
      %v3859 = vrot.slane %v3850, %v3858
      %v3874 = vunpack.c.l.b16 %v3838
      %v3875 = vunpack.c.h.b16 %v3838
      %v3876 = vunpack.c.l.b16 %v3839
      %v3877 = vunpack.c.h.b16 %v3839
      %v3878 = vunpack.c.l.b16 %v3840
      %v3879 = vunpack.c.h.b16 %v3840
      %v3880 = vunpack.c.l.b16 %v3841
      %v3881 = vunpack.c.h.b16 %v3841
      %v3882 = vunpack.c.l.b16 %v3842
      %v3883 = vunpack.c.h.b16 %v3842
      %v3884 = vunpack.c.l.b16 %v3843
      %v3885 = vunpack.c.h.b16 %v3843
      %v3886 = vunpack.c.l.b16 %v3844
      %v3887 = vunpack.c.h.b16 %v3844
      %v3888 = vunpack.c.l.b16 %v3845
      %v3889 = vunpack.c.h.b16 %v3845
      %v3890 = vunpack.c.l.b16 %v3846
      %v3891 = vunpack.c.h.b16 %v3846
      %v3892 = vunpack.c.l.b16 %v3847
      %v3893 = vunpack.c.h.b16 %v3847
      %v3894 = vunpack.c.l.b16 %v3848
      %v3895 = vunpack.c.h.b16 %v3848
      %v3896 = vunpack.c.l.b16 %v3849
      %v3897 = vunpack.c.h.b16 %v3849
      %v3898 = vpack.c.b16 %v3876, %v3874
      %v3899 = vpack.c.b16 %v3877, %v3875
      %v3900 = vpack.c.b16 %v3880, %v3878
      %v3901 = vpack.c.b16 %v3881, %v3879
      %v3902 = vpack.c.b16 %v3884, %v3882
      %v3903 = vpack.c.b16 %v3885, %v3883
      %v3904 = vpack.c.b16 %v3888, %v3886
      %v3905 = vpack.c.b16 %v3889, %v3887
      %v3906 = vpack.c.b16 %v3892, %v3890
      %v3907 = vpack.c.b16 %v3893, %v3891
      %v3908 = vpack.c.b16 %v3896, %v3894
      %v3909 = vpack.c.b16 %v3897, %v3895
      %v3923 = vsel %vm3445, %v3836, 0
      %v3926 = vsel %vm3445, %v3837, 0
      %3928 = vmatprep.subr.bf16.mxu0 0
      %3929 = vmatpush1.bf16.msra.mxu0 0
      %3930 = vmatprep.subr.bf16.mxu0 0
      %3931 = vmatpush1.bf16.msra.mxu0 0
      %3932 = vmatprep.subr.bf16.mxu0 %v3909
      %3933 = vmatpush1.bf16.msra.mxu0 %v3908
      %3934 = vmatprep.subr.bf16.mxu0 %v3907
      %3935 = vmatpush1.bf16.msra.mxu0 %v3906
      %3936 = vmatprep.subr.bf16.mxu0 %v3905
      %3937 = vmatpush1.bf16.msra.mxu0 %v3904
      %3938 = vmatprep.subr.bf16.mxu0 %v3903
      %3939 = vmatpush1.bf16.msra.mxu0 %v3902
      %3940 = vmatprep.subr.bf16.mxu0 %v3901
      %3941 = vmatpush1.bf16.msra.mxu0 %v3900
      %3942 = vmatprep.subr.bf16.mxu0 %v3899
      %3943 = vmatpush1.bf16.msra.mxu0 %v3898
      %3944 = vmatprep.subr.bf16.mxu0 0
      %3945 = vmatpush2.bf16.msra.mxu0 0
      %3946 = vmatprep.subr.bf16.mxu0 0
      %3947 = vmatpush2.bf16.msra.mxu0 0
      %3948 = vmatprep.subr.bf16.mxu0 0
      %3949 = vmatpush2.bf16.msra.mxu0 0
      %3950 = vmatprep.subr.bf16.mxu0 0
      %3951 = vmatpush2.bf16.msra.mxu0 0
      %3952 = vmatprep.subr.bf16.mxu0 0
      %3953 = vmatpush2.bf16.msra.mxu0 0
      %3954 = vmatprep.subr.bf16.mxu0 0
      %3955 = vmatpush2.bf16.msra.mxu0 0
      %3956 = vmatprep.subr.bf16.mxu0 0
      %3957 = vmatpush2.bf16.msra.mxu0 0
      %3958 = vmatprep.subr.bf16.mxu0 0
      %3959 = vmatpush2.bf16.msra.mxu0 0
      %3960 = vmatprep.mubr.bf16.mxu0 0
      %3961 = vmatmul.mubr.bf16.gmra.mxu0 %v3923
      %v3962 = vpop.f32.mrf.mxu0
      %v3963 = vadd.f32 %v3855, %v3962
      %v3964 = vpop.f32.mrf.mxu0
      %v3965 = vadd.f32 %v3859, %v3964
      %v3966 = vpop.f32.mrf.mxu0
      %v3967 = vadd.f32 %v3855, %v3966
      %v3968 = vpop.f32.mrf.mxu0
      %v3969 = vadd.f32 %v3859, %v3968
      %3970 = vmatprep.mubr.bf16.mxu0 0
      %3971 = vmatmul.mubr.bf16.gmra.mxu0 %v3926
      %v3972 = vpop.f32.mrf.mxu0
      %v3973 = vadd.f32 %v3855, %v3972
      %v3974 = vpop.f32.mrf.mxu0
      %v3975 = vadd.f32 %v3859, %v3974
      %v3976 = vpop.f32.mrf.mxu0
      %v3977 = vadd.f32 %v3855, %v3976
      %v3978 = vpop.f32.mrf.mxu0
      %v3979 = vadd.f32 %v3859, %v3978
      %3980 = vdwg.mxu0
      %vm3981 = vcmp.ge.f32.partialorder %v3963, 0.0
      %vm3982 = vcmp.ge.f32.partialorder %v3965, 0.0
      %vm3983 = vcmp.ge.f32.partialorder %v3967, 0.0
      %vm3984 = vcmp.ge.f32.partialorder %v3969, 0.0
      %vm3985 = vcmp.ge.f32.partialorder %v3973, 0.0
      %vm3986 = vcmp.ge.f32.partialorder %v3975, 0.0
      %vm3987 = vcmp.ge.f32.partialorder %v3977, 0.0
      %vm3988 = vcmp.ge.f32.partialorder %v3979, 0.0
      %vm3989 = vmpackc.low %vm3983, %vm3981
      %vm3990 = vmpackc.low %vm3987, %vm3985
      %vm3991 = vmpackc.even %vm3990, %vm3989
      %vm3992 = vmpackc.low %vm3984, %vm3982
      %vm3993 = vmpackc.low %vm3988, %vm3986
      %vm3994 = vmpackc.even %vm3993, %vm3992
      %v3995 = vsel %vm3991, 16843009, 0
      %v3996 = vsel %vm3994, 16843009, 0
      %v3997 = vunpack.c.0.s8 %v3995
      %v3998 = vunpack.c.0.s8 %v3996
      %v3999 = vunpack.c.1.s8 %v3995
      %v4000 = vunpack.c.1.s8 %v3996
      %v4001 = vunpack.c.2.s8 %v3995
      %v4002 = vunpack.c.2.s8 %v3996
      %v4003 = vunpack.c.3.s8 %v3995
      %v4004 = vunpack.c.3.s8 %v3996
      %v4005 = vpack.c.b16 %v3998, %v3997
      %v4006 = vpack.c.b8 %v4005, %v4005
      %v4007 = vpack.c.b16 %v4000, %v3999
      %v4008 = vpack.c.b8 %v4007, %v4007
      %v4009 = vpack.c.b16 %v4002, %v4001
      %v4010 = vpack.c.b8 %v4009, %v4009
      %v4011 = vpack.c.b16 %v4004, %v4003
      %v4012 = vpack.c.b8 %v4011, %v4011
      %4013 = vst.msk [vmem:[%s849 + $0x1e] sm:$0xf] %vm3183, %v4006
      %4014 = vst.msk [vmem:[%s849 + $0x52] sm:$0xf] %vm3183, %v4008
      %4015 = vst.msk [vmem:[%s849 + $0x86] sm:$0xf] %vm3183, %v4010
      %4016 = vst.msk [vmem:[%s849 + $0xba] sm:$0xf] %vm3183, %v4012
      %v4017 = vsel %vm3981, %v3963, 0.0
      %v4018 = vsel %vm3982, %v3965, 0.0
      %v4019 = vsel %vm3983, %v3967, 0.0
      %v4020 = vsel %vm3984, %v3969, 0.0
      %v4021 = vsel %vm3985, %v3973, 0.0
      %v4022 = vsel %vm3986, %v3975, 0.0
      %v4023 = vsel %vm3987, %v3977, 0.0
      %v4024 = vsel %vm3988, %v3979, 0.0
      %v4025 = vpack.c.bf16 %v4019, %v4017
      %v4026 = vpack.c.bf16 %v4020, %v4018
      %v4027 = vpack.c.bf16 %v4023, %v4021
      %v4028 = vpack.c.bf16 %v4024, %v4022
      %v4029 = vld [vmem:[%s19] sm:$0xff]
      %v4030 = vld [vmem:[%s19 + $0x8] sm:$0xf]
      %v4031 = vld [vmem:[%s19 + $0xc] sm:$0xff]
      %v4032 = vld [vmem:[%s19 + $0x14] sm:$0xf]
      %v4033 = vld [vmem:[%s19 + $0x18] sm:$0xff]
      %v4034 = vld [vmem:[%s19 + $0x20] sm:$0xf]
      %v4035 = vld [vmem:[%s19 + $0x24] sm:$0xff]
      %v4036 = vld [vmem:[%s19 + $0x2c] sm:$0xf]
      %v4037 = vld [vmem:[%s19 + $0x30] sm:$0xff]
      %v4038 = vld [vmem:[%s19 + $0x38] sm:$0xf]
      %v4039 = vld [vmem:[%s19 + $0x3c] sm:$0xff]
      %v4040 = vld [vmem:[%s19 + $0x44] sm:$0xf]
      %v4041 = vld [vmem:[%s19 + $0x48] sm:$0xff]
      %v4042 = vld [vmem:[%s19 + $0x50] sm:$0xf]
      %v4043 = vld [vmem:[%s19 + $0x54] sm:$0xff]
      %v4044 = vld [vmem:[%s19 + $0x5c] sm:$0xf]
      %v4045 = vld [vmem:[%s19 + $0x60] sm:$0xff]
      %v4046 = vld [vmem:[%s19 + $0x68] sm:$0xf]
      %v4047 = vld [vmem:[%s19 + $0x6c] sm:$0xff]
      %v4048 = vld [vmem:[%s19 + $0x74] sm:$0xf]
      %v4049 = vld [vmem:[%s19 + $0x78] sm:$0xff]
      %v4050 = vld [vmem:[%s19 + $0x80] sm:$0xf]
      %v4051 = vld [vmem:[%s19 + $0x84] sm:$0xff]
      %v4052 = vld [vmem:[%s19 + $0x8c] sm:$0xf]
      %v4053 = vld [vmem:[%s19 + $0x90] sm:$0xff]
      %v4054 = vld [vmem:[%s19 + $0x98] sm:$0xf]
      %v4055 = vld [vmem:[%s19 + $0x9c] sm:$0xff]
      %v4056 = vld [vmem:[%s19 + $0xa4] sm:$0xf]
      %v4057 = vld [vmem:[%s19 + $0xa8] sm:$0xff]
      %v4058 = vld [vmem:[%s19 + $0xb0] sm:$0xf]
      %v4059 = vld [vmem:[%s19 + $0xb4] sm:$0xff]
      %v4060 = vld [vmem:[%s19 + $0xbc] sm:$0xf]
      %v4061 = vld [vmem:[%s19 + $0xc0] sm:$0xff]
      %v4062 = vld [vmem:[%s19 + $0xc8] sm:$0xf]
      %v4063 = vld [vmem:[%s19 + $0xcc] sm:$0xff]
      %v4064 = vld [vmem:[%s19 + $0xd4] sm:$0xf]
      %v4065 = vld [vmem:[%s19 + $0xd8] sm:$0xff]
      %v4066 = vld [vmem:[%s19 + $0xe0] sm:$0xf]
      %v4067 = vld [vmem:[%s19 + $0xe4] sm:$0xff]
      %v4068 = vld [vmem:[%s19 + $0xec] sm:$0xf]
      %v4069 = vld [vmem:[%s19 + $0xf0] sm:$0xff]
      %v4070 = vld [vmem:[%s19 + $0xf8] sm:$0xf]
      %v4071 = vld [vmem:[%s19 + $0xfc] sm:$0xff]
      %v4072 = vld [vmem:[%s19 + $0x104] sm:$0xf]
      %v4073 = vld [vmem:[%s19 + $0x108] sm:$0xff]
      %v4074 = vld [vmem:[%s19 + $0x110] sm:$0xf]
      %v4075 = vld [vmem:[%s19 + $0x114] sm:$0xff]
      %v4076 = vld [vmem:[%s19 + $0x11c] sm:$0xf]
      %v4077 = vld [vmem:[%s20] sm:$0x7]
      %v4079 = vlaneseq
      %v4080 = vshrl.u32 %v4079, 7
      %v4081 = vsub.s32 0, %v4080
      %v4082 = vrot.slane %v4077, %v4081
      %v4083 = vlaneseq
      %v4084 = vshrl.u32 %v4083, 7
      %v4085 = vsub.s32 1, %v4084
      %v4086 = vrot.slane %v4077, %v4085
      %v4087 = vlaneseq
      %v4088 = vshrl.u32 %v4087, 7
      %v4089 = vsub.s32 2, %v4088
      %v4090 = vrot.slane %v4077, %v4089
      %v4142 = vunpack.c.l.b16 %v4029
      %v4143 = vunpack.c.h.b16 %v4029
      %v4144 = vunpack.c.l.b16 %v4030
      %v4145 = vunpack.c.l.b16 %v4031
      %v4146 = vunpack.c.h.b16 %v4031
      %v4147 = vunpack.c.l.b16 %v4032
      %v4148 = vunpack.c.l.b16 %v4033
      %v4149 = vunpack.c.h.b16 %v4033
      %v4150 = vunpack.c.l.b16 %v4034
      %v4151 = vunpack.c.l.b16 %v4035
      %v4152 = vunpack.c.h.b16 %v4035
      %v4153 = vunpack.c.l.b16 %v4036
      %v4154 = vunpack.c.l.b16 %v4037
      %v4155 = vunpack.c.h.b16 %v4037
      %v4156 = vunpack.c.l.b16 %v4038
      %v4157 = vunpack.c.l.b16 %v4039
      %v4158 = vunpack.c.h.b16 %v4039
      %v4159 = vunpack.c.l.b16 %v4040
      %v4160 = vunpack.c.l.b16 %v4041
      %v4161 = vunpack.c.h.b16 %v4041
      %v4162 = vunpack.c.l.b16 %v4042
      %v4163 = vunpack.c.l.b16 %v4043
      %v4164 = vunpack.c.h.b16 %v4043
      %v4165 = vunpack.c.l.b16 %v4044
      %v4166 = vunpack.c.l.b16 %v4045
      %v4167 = vunpack.c.h.b16 %v4045
      %v4168 = vunpack.c.l.b16 %v4046
      %v4169 = vunpack.c.l.b16 %v4047
      %v4170 = vunpack.c.h.b16 %v4047
      %v4171 = vunpack.c.l.b16 %v4048
      %v4172 = vunpack.c.l.b16 %v4049
      %v4173 = vunpack.c.h.b16 %v4049
      %v4174 = vunpack.c.l.b16 %v4050
      %v4175 = vunpack.c.l.b16 %v4051
      %v4176 = vunpack.c.h.b16 %v4051
      %v4177 = vunpack.c.l.b16 %v4052
      %v4178 = vunpack.c.l.b16 %v4053
      %v4179 = vunpack.c.h.b16 %v4053
      %v4180 = vunpack.c.l.b16 %v4054
      %v4181 = vunpack.c.l.b16 %v4055
      %v4182 = vunpack.c.h.b16 %v4055
      %v4183 = vunpack.c.l.b16 %v4056
      %v4184 = vunpack.c.l.b16 %v4057
      %v4185 = vunpack.c.h.b16 %v4057
      %v4186 = vunpack.c.l.b16 %v4058
      %v4187 = vunpack.c.l.b16 %v4059
      %v4188 = vunpack.c.h.b16 %v4059
      %v4189 = vunpack.c.l.b16 %v4060
      %v4190 = vunpack.c.l.b16 %v4061
      %v4191 = vunpack.c.h.b16 %v4061
      %v4192 = vunpack.c.l.b16 %v4062
      %v4193 = vunpack.c.l.b16 %v4063
      %v4194 = vunpack.c.h.b16 %v4063
      %v4195 = vunpack.c.l.b16 %v4064
      %v4196 = vunpack.c.l.b16 %v4065
      %v4197 = vunpack.c.h.b16 %v4065
      %v4198 = vunpack.c.l.b16 %v4066
      %v4199 = vunpack.c.l.b16 %v4067
      %v4200 = vunpack.c.h.b16 %v4067
      %v4201 = vunpack.c.l.b16 %v4068
      %v4202 = vunpack.c.l.b16 %v4069
      %v4203 = vunpack.c.h.b16 %v4069
      %v4204 = vunpack.c.l.b16 %v4070
      %v4205 = vunpack.c.l.b16 %v4071
      %v4206 = vunpack.c.h.b16 %v4071
      %v4207 = vunpack.c.l.b16 %v4072
      %v4208 = vunpack.c.l.b16 %v4073
      %v4209 = vunpack.c.h.b16 %v4073
      %v4210 = vunpack.c.l.b16 %v4074
      %v4211 = vunpack.c.l.b16 %v4075
      %v4212 = vunpack.c.h.b16 %v4075
      %v4213 = vunpack.c.l.b16 %v4076
      %v4214 = vpack.c.b16 %v4145, %v4142
      %v4215 = vpack.c.b16 %v4146, %v4143
      %v4216 = vpack.c.b16 %v4147, %v4144
      %v4217 = vpack.c.b16 %v4151, %v4148
      %v4218 = vpack.c.b16 %v4152, %v4149
      %v4219 = vpack.c.b16 %v4153, %v4150
      %v4220 = vpack.c.b16 %v4157, %v4154
      %v4221 = vpack.c.b16 %v4158, %v4155
      %v4222 = vpack.c.b16 %v4159, %v4156
      %v4223 = vpack.c.b16 %v4163, %v4160
      %v4224 = vpack.c.b16 %v4164, %v4161
      %v4225 = vpack.c.b16 %v4165, %v4162
      %v4226 = vpack.c.b16 %v4169, %v4166
      %v4227 = vpack.c.b16 %v4170, %v4167
      %v4228 = vpack.c.b16 %v4171, %v4168
      %v4229 = vpack.c.b16 %v4175, %v4172
      %v4230 = vpack.c.b16 %v4176, %v4173
      %v4231 = vpack.c.b16 %v4177, %v4174
      %v4232 = vpack.c.b16 %v4181, %v4178
      %v4233 = vpack.c.b16 %v4182, %v4179
      %v4234 = vpack.c.b16 %v4183, %v4180
      %v4235 = vpack.c.b16 %v4187, %v4184
      %v4236 = vpack.c.b16 %v4188, %v4185
      %v4237 = vpack.c.b16 %v4189, %v4186
      %v4238 = vpack.c.b16 %v4193, %v4190
      %v4239 = vpack.c.b16 %v4194, %v4191
      %v4240 = vpack.c.b16 %v4195, %v4192
      %v4241 = vpack.c.b16 %v4199, %v4196
      %v4242 = vpack.c.b16 %v4200, %v4197
      %v4243 = vpack.c.b16 %v4201, %v4198
      %v4244 = vpack.c.b16 %v4205, %v4202
      %v4245 = vpack.c.b16 %v4206, %v4203
      %v4246 = vpack.c.b16 %v4207, %v4204
      %v4247 = vpack.c.b16 %v4211, %v4208
      %v4248 = vpack.c.b16 %v4212, %v4209
      %v4249 = vpack.c.b16 %v4213, %v4210
      %v4287 = vsel %vm3303, %v4026, 0
      %v4290 = vsel %vm3303, %v4028, 0
      %4292 = vmatprep.subr.bf16.mxu0 %v4236
      %4293 = vmatpush1.bf16.msra.mxu0 %v4235
      %4294 = vmatprep.subr.bf16.mxu0 %v4233
      %4295 = vmatpush1.bf16.msra.mxu0 %v4232
      %4296 = vmatprep.subr.bf16.mxu0 %v4230
      %4297 = vmatpush1.bf16.msra.mxu0 %v4229
      %4298 = vmatprep.subr.bf16.mxu0 %v4227
      %4299 = vmatpush1.bf16.msra.mxu0 %v4226
      %4300 = vmatprep.subr.bf16.mxu0 %v4224
      %4301 = vmatpush1.bf16.msra.mxu0 %v4223
      %4302 = vmatprep.subr.bf16.mxu0 %v4221
      %4303 = vmatpush1.bf16.msra.mxu0 %v4220
      %4304 = vmatprep.subr.bf16.mxu0 %v4218
      %4305 = vmatpush1.bf16.msra.mxu0 %v4217
      %4306 = vmatprep.subr.bf16.mxu0 %v4215
      %4307 = vmatpush1.bf16.msra.mxu0 %v4214
      %4308 = vmatprep.subr.bf16.mxu0 0
      %4309 = vmatpush2.bf16.msra.mxu0 0
      %4310 = vmatprep.subr.bf16.mxu0 0
      %4311 = vmatpush2.bf16.msra.mxu0 0
      %4312 = vmatprep.subr.bf16.mxu0 0
      %4313 = vmatpush2.bf16.msra.mxu0 0
      %4314 = vmatprep.subr.bf16.mxu0 0
      %4315 = vmatpush2.bf16.msra.mxu0 0
      %4316 = vmatprep.subr.bf16.mxu0 %v4248
      %4317 = vmatpush2.bf16.msra.mxu0 %v4247
      %4318 = vmatprep.subr.bf16.mxu0 %v4245
      %4319 = vmatpush2.bf16.msra.mxu0 %v4244
      %4320 = vmatprep.subr.bf16.mxu0 %v4242
      %4321 = vmatpush2.bf16.msra.mxu0 %v4241
      %4322 = vmatprep.subr.bf16.mxu0 %v4239
      %4323 = vmatpush2.bf16.msra.mxu0 %v4238
      %4324 = vmatprep.mubr.bf16.mxu0 %v4287
      %4325 = vmatmul.mubr.bf16.gmra.mxu0 %v4025
      %v4326 = vpop.f32.mrf.mxu0
      %v4327 = vadd.f32 %v4082, %v4326
      %v4328 = vpop.f32.mrf.mxu0
      %v4329 = vadd.f32 %v4086, %v4328
      %v4330 = vpop.f32.mrf.mxu0
      %v4331 = vadd.f32 %v4082, %v4330
      %v4332 = vpop.f32.mrf.mxu0
      %v4333 = vadd.f32 %v4086, %v4332
      %4334 = vmatprep.mubr.bf16.mxu0 %v4290
      %4335 = vmatmul.mubr.bf16.gmra.mxu0 %v4027
      %v4336 = vpop.f32.mrf.mxu0
      %v4337 = vadd.f32 %v4082, %v4336
      %v4338 = vpop.f32.mrf.mxu0
      %v4339 = vadd.f32 %v4086, %v4338
      %v4340 = vpop.f32.mrf.mxu0
      %v4341 = vadd.f32 %v4082, %v4340
      %v4342 = vpop.f32.mrf.mxu0
      %v4343 = vadd.f32 %v4086, %v4342
      %4344 = vdwg.mxu0
      %4345 = vmatprep.subr.bf16.mxu0 0
      %4346 = vmatpush1.bf16.msra.mxu0 %v4237
      %4347 = vmatprep.subr.bf16.mxu0 0
      %4348 = vmatpush1.bf16.msra.mxu0 %v4234
      %4349 = vmatprep.subr.bf16.mxu0 0
      %4350 = vmatpush1.bf16.msra.mxu0 %v4231
      %4351 = vmatprep.subr.bf16.mxu0 0
      %4352 = vmatpush1.bf16.msra.mxu0 %v4228
      %4353 = vmatprep.subr.bf16.mxu0 0
      %4354 = vmatpush1.bf16.msra.mxu0 %v4225
      %4355 = vmatprep.subr.bf16.mxu0 0
      %4356 = vmatpush1.bf16.msra.mxu0 %v4222
      %4357 = vmatprep.subr.bf16.mxu0 0
      %4358 = vmatpush1.bf16.msra.mxu0 %v4219
      %4359 = vmatprep.subr.bf16.mxu0 0
      %4360 = vmatpush1.bf16.msra.mxu0 %v4216
      %4361 = vmatprep.subr.bf16.mxu0 0
      %4362 = vmatpush2.bf16.msra.mxu0 0
      %4363 = vmatprep.subr.bf16.mxu0 0
      %4364 = vmatpush2.bf16.msra.mxu0 0
      %4365 = vmatprep.subr.bf16.mxu0 0
      %4366 = vmatpush2.bf16.msra.mxu0 0
      %4367 = vmatprep.subr.bf16.mxu0 0
      %4368 = vmatpush2.bf16.msra.mxu0 0
      %4369 = vmatprep.subr.bf16.mxu0 0
      %4370 = vmatpush2.bf16.msra.mxu0 %v4249
      %4371 = vmatprep.subr.bf16.mxu0 0
      %4372 = vmatpush2.bf16.msra.mxu0 %v4246
      %4373 = vmatprep.subr.bf16.mxu0 0
      %4374 = vmatpush2.bf16.msra.mxu0 %v4243
      %4375 = vmatprep.subr.bf16.mxu0 0
      %4376 = vmatpush2.bf16.msra.mxu0 %v4240
      %4377 = vmatprep.mubr.bf16.mxu0 %v4287
      %4378 = vmatmul.mubr.bf16.gmra.mxu0 %v4025
      %v4379 = vpop.f32.mrf.mxu0
      %v4380 = vadd.f32 %v4090, %v4379
      %v4381 = vpop.f32.mrf.mxu0
      %v4382 = vpop.f32.mrf.mxu0
      %v4383 = vadd.f32 %v4090, %v4382
      %v4384 = vpop.f32.mrf.mxu0
      %4385 = vmatprep.mubr.bf16.mxu0 %v4290
      %4386 = vmatmul.mubr.bf16.gmra.mxu0 %v4027
      %v4387 = vpop.f32.mrf.mxu0
      %v4388 = vadd.f32 %v4090, %v4387
      %v4389 = vpop.f32.mrf.mxu0
      %v4390 = vpop.f32.mrf.mxu0
      %v4391 = vadd.f32 %v4090, %v4390
      %v4392 = vpop.f32.mrf.mxu0
      %4393 = vdwg.mxu0
      %vm4394 = vcmp.ge.f32.partialorder %v4327, 0.0
      %vm4395 = vcmp.ge.f32.partialorder %v4329, 0.0
      %vm4396 = vcmp.ge.f32.partialorder %v4380, 0.0
      %vm4397 = vcmp.ge.f32.partialorder %v4331, 0.0
      %vm4398 = vcmp.ge.f32.partialorder %v4333, 0.0
      %vm4399 = vcmp.ge.f32.partialorder %v4383, 0.0
      %vm4400 = vcmp.ge.f32.partialorder %v4337, 0.0
      %vm4401 = vcmp.ge.f32.partialorder %v4339, 0.0
      %vm4402 = vcmp.ge.f32.partialorder %v4388, 0.0
      %vm4403 = vcmp.ge.f32.partialorder %v4341, 0.0
      %vm4404 = vcmp.ge.f32.partialorder %v4343, 0.0
      %vm4405 = vcmp.ge.f32.partialorder %v4391, 0.0
      %vm4406 = vmpackc.low %vm4397, %vm4394
      %vm4407 = vmpackc.low %vm4403, %vm4400
      %vm4408 = vmpackc.even %vm4407, %vm4406
      %vm4409 = vmpackc.low %vm4398, %vm4395
      %vm4410 = vmpackc.low %vm4404, %vm4401
      %vm4411 = vmpackc.even %vm4410, %vm4409
      %vm4412 = vmpackc.low %vm4399, %vm4396
      %vm4413 = vmpackc.low %vm4405, %vm4402
      %vm4414 = vmpackc.even %vm4413, %vm4412
      %v4415 = vsel %vm4408, 16843009, 0
      %v4416 = vsel %vm4411, 16843009, 0
      %v4417 = vsel %vm4414, 16843009, 0
      %v4418 = vunpack.c.0.s8 %v4415
      %v4419 = vunpack.c.0.s8 %v4416
      %v4420 = vunpack.c.0.s8 %v4417
      %v4421 = vunpack.c.1.s8 %v4415
      %v4422 = vunpack.c.1.s8 %v4416
      %v4423 = vunpack.c.1.s8 %v4417
      %v4424 = vunpack.c.2.s8 %v4415
      %v4425 = vunpack.c.2.s8 %v4416
      %v4426 = vunpack.c.2.s8 %v4417
      %v4427 = vunpack.c.3.s8 %v4415
      %v4428 = vunpack.c.3.s8 %v4416
      %v4429 = vunpack.c.3.s8 %v4417
      %v4430 = vpack.c.b16 %v4419, %v4418
      %v4431 = vpack.c.b16 %v4420, %v4420
      %v4432 = vpack.c.b8 %v4431, %v4430
      %v4433 = vpack.c.b16 %v4422, %v4421
      %v4434 = vpack.c.b16 %v4423, %v4423
      %v4435 = vpack.c.b8 %v4434, %v4433
      %v4436 = vpack.c.b16 %v4425, %v4424
      %v4437 = vpack.c.b16 %v4426, %v4426
      %v4438 = vpack.c.b8 %v4437, %v4436
      %v4439 = vpack.c.b16 %v4428, %v4427
      %v4440 = vpack.c.b16 %v4429, %v4429
      %v4441 = vpack.c.b8 %v4440, %v4439
      %4442 = vst [vmem:[%s849 + $0x22] sm:$0x3f] %v4432
      %4443 = vst [vmem:[%s849 + $0x56] sm:$0x3f] %v4435
      %4444 = vst [vmem:[%s849 + $0x8a] sm:$0x3f] %v4438
      %4445 = vst [vmem:[%s849 + $0xbe] sm:$0x3f] %v4441
      %v4446 = vsel %vm4394, %v4327, 0.0
      %v4447 = vsel %vm4395, %v4329, 0.0
      %v4448 = vsel %vm4396, %v4380, 0.0
      %v4449 = vsel %vm4397, %v4331, 0.0
      %v4450 = vsel %vm4398, %v4333, 0.0
      %v4451 = vsel %vm4399, %v4383, 0.0
      %v4452 = vsel %vm4400, %v4337, 0.0
      %v4453 = vsel %vm4401, %v4339, 0.0
      %v4454 = vsel %vm4402, %v4388, 0.0
      %v4455 = vsel %vm4403, %v4341, 0.0
      %v4456 = vsel %vm4404, %v4343, 0.0
      %v4457 = vsel %vm4405, %v4391, 0.0
      %v4458 = vpack.c.bf16 %v4449, %v4446
      %v4459 = vpack.c.bf16 %v4450, %v4447
      %v4460 = vpack.c.bf16 %v4451, %v4448
      %v4461 = vpack.c.bf16 %v4455, %v4452
      %v4462 = vpack.c.bf16 %v4456, %v4453
      %v4463 = vpack.c.bf16 %v4457, %v4454
      %v4464 = vld [vmem:[%s21] sm:$0xff]
      %v4465 = vld [vmem:[%s21 + $0x8] sm:$0xff]
      %v4466 = vld [vmem:[%s21 + $0x10] sm:$0xff]
      %v4467 = vld [vmem:[%s21 + $0x18] sm:$0xff]
      %v4468 = vld [vmem:[%s21 + $0x20] sm:$0xff]
      %v4469 = vld [vmem:[%s21 + $0x28] sm:$0xff]
      %v4470 = vld [vmem:[%s21 + $0x30] sm:$0xff]
      %v4471 = vld [vmem:[%s21 + $0x38] sm:$0xff]
      %v4472 = vld [vmem:[%s21 + $0x40] sm:$0xff]
      %v4473 = vld [vmem:[%s21 + $0x48] sm:$0xff]
      %v4474 = vld [vmem:[%s21 + $0x50] sm:$0xff]
      %v4475 = vld [vmem:[%s21 + $0x58] sm:$0xff]
      %v4476 = vld [vmem:[%s21 + $0x60] sm:$0xff]
      %v4477 = vld [vmem:[%s21 + $0x68] sm:$0xff]
      %v4478 = vld [vmem:[%s21 + $0x70] sm:$0xff]
      %v4479 = vld [vmem:[%s21 + $0x78] sm:$0xff]
      %v4480 = vld [vmem:[%s21 + $0x80] sm:$0xff]
      %v4481 = vld [vmem:[%s21 + $0x88] sm:$0xff]
      %v4482 = vld [vmem:[%s21 + $0x90] sm:$0xff]
      %v4483 = vld [vmem:[%s21 + $0x98] sm:$0xff]
      %v4484 = vld [vmem:[%s21 + $0xa0] sm:$0xff]
      %v4485 = vld [vmem:[%s21 + $0xa8] sm:$0xff]
      %v4486 = vld [vmem:[%s21 + $0xb0] sm:$0xff]
      %v4487 = vld [vmem:[%s21 + $0xb8] sm:$0xff]
      %v4488 = vld [vmem:[%s21 + $0xc0] sm:$0xff]
      %v4489 = vld [vmem:[%s21 + $0xc8] sm:$0xff]
      %v4490 = vld [vmem:[%s21 + $0xd0] sm:$0xff]
      %v4491 = vld [vmem:[%s21 + $0xd8] sm:$0xff]
      %v4492 = vld [vmem:[%s21 + $0xe0] sm:$0xff]
      %v4493 = vld [vmem:[%s21 + $0xe8] sm:$0xff]
      %v4494 = vld [vmem:[%s21 + $0xf0] sm:$0xff]
      %v4495 = vld [vmem:[%s21 + $0xf8] sm:$0xff]
      %v4496 = vld [vmem:[%s21 + $0x100] sm:$0xff]
      %v4497 = vld [vmem:[%s21 + $0x108] sm:$0xff]
      %v4498 = vld [vmem:[%s21 + $0x110] sm:$0xff]
      %v4499 = vld [vmem:[%s21 + $0x118] sm:$0xff]
      %v4500 = vld [vmem:[%s21 + $0x120] sm:$0xff]
      %v4501 = vld [vmem:[%s21 + $0x128] sm:$0xff]
      %v4502 = vld [vmem:[%s21 + $0x130] sm:$0xff]
      %v4503 = vld [vmem:[%s21 + $0x138] sm:$0xff]
      %v4504 = vld [vmem:[%s21 + $0x140] sm:$0xff]
      %v4505 = vld [vmem:[%s21 + $0x148] sm:$0xff]
      %v4506 = vld [vmem:[%s21 + $0x150] sm:$0xff]
      %v4507 = vld [vmem:[%s21 + $0x158] sm:$0xff]
      %v4508 = vld [vmem:[%s21 + $0x160] sm:$0xff]
      %v4509 = vld [vmem:[%s21 + $0x168] sm:$0xff]
      %v4510 = vld [vmem:[%s21 + $0x170] sm:$0xff]
      %v4511 = vld [vmem:[%s21 + $0x178] sm:$0xff]
      %v4512 = vld [vmem:[%s21 + $0x180] sm:$0xff]
      %v4513 = vld [vmem:[%s21 + $0x188] sm:$0xff]
      %v4514 = vld [vmem:[%s21 + $0x190] sm:$0xff]
      %v4515 = vld [vmem:[%s21 + $0x198] sm:$0xff]
      %v4516 = vld [vmem:[%s21 + $0x1a0] sm:$0xff]
      %v4517 = vld [vmem:[%s21 + $0x1a8] sm:$0xff]
      %v4518 = vld [vmem:[%s21 + $0x1b0] sm:$0xff]
      %v4519 = vld [vmem:[%s21 + $0x1b8] sm:$0xff]
      %v4520 = vld [vmem:[%s21 + $0x1c0] sm:$0xff]
      %v4521 = vld [vmem:[%s21 + $0x1c8] sm:$0xff]
      %v4522 = vld [vmem:[%s21 + $0x1d0] sm:$0xff]
      %v4523 = vld [vmem:[%s21 + $0x1d8] sm:$0xff]
      %v4524 = vld [vmem:[%s21 + $0x1e0] sm:$0xff]
      %v4525 = vld [vmem:[%s21 + $0x1e8] sm:$0xff]
      %v4526 = vld [vmem:[%s21 + $0x1f0] sm:$0xff]
      %v4527 = vld [vmem:[%s21 + $0x1f8] sm:$0xff]
      %v4528 = vld [vmem:[%s21 + $0x200] sm:$0xff]
      %v4529 = vld [vmem:[%s21 + $0x208] sm:$0xff]
      %v4530 = vld [vmem:[%s21 + $0x210] sm:$0xff]
      %v4531 = vld [vmem:[%s21 + $0x218] sm:$0xff]
      %v4532 = vld [vmem:[%s21 + $0x220] sm:$0xff]
      %v4533 = vld [vmem:[%s21 + $0x228] sm:$0xff]
      %v4534 = vld [vmem:[%s21 + $0x230] sm:$0xff]
      %v4535 = vld [vmem:[%s21 + $0x238] sm:$0xff]
      %v4536 = vld [vmem:[%s21 + $0x240] sm:$0xff]
      %v4537 = vld [vmem:[%s21 + $0x248] sm:$0xff]
      %v4538 = vld [vmem:[%s21 + $0x250] sm:$0xff]
      %v4539 = vld [vmem:[%s21 + $0x258] sm:$0xff]
      %v4540 = vld [vmem:[%s21 + $0x260] sm:$0xff]
      %v4541 = vld [vmem:[%s21 + $0x268] sm:$0xff]
      %v4542 = vld [vmem:[%s21 + $0x270] sm:$0xff]
      %v4543 = vld [vmem:[%s21 + $0x278] sm:$0xff]
      %v4544 = vld [vmem:[%s21 + $0x280] sm:$0xff]
      %v4545 = vld [vmem:[%s21 + $0x288] sm:$0xff]
      %v4546 = vld [vmem:[%s21 + $0x290] sm:$0xff]
      %v4547 = vld [vmem:[%s21 + $0x298] sm:$0xff]
      %v4548 = vld [vmem:[%s21 + $0x2a0] sm:$0xff]
      %v4549 = vld [vmem:[%s21 + $0x2a8] sm:$0xff]
      %v4550 = vld [vmem:[%s21 + $0x2b0] sm:$0xff]
      %v4551 = vld [vmem:[%s21 + $0x2b8] sm:$0xff]
      %v4552 = vld [vmem:[%s21 + $0x2c0] sm:$0xff]
      %v4553 = vld [vmem:[%s21 + $0x2c8] sm:$0xff]
      %v4554 = vld [vmem:[%s21 + $0x2d0] sm:$0xff]
      %v4555 = vld [vmem:[%s21 + $0x2d8] sm:$0xff]
      %v4556 = vld [vmem:[%s21 + $0x2e0] sm:$0xff]
      %v4557 = vld [vmem:[%s21 + $0x2e8] sm:$0xff]
      %v4558 = vld [vmem:[%s21 + $0x2f0] sm:$0xff]
      %v4559 = vld [vmem:[%s21 + $0x2f8] sm:$0xff]
      %v4560 = vld [vmem:[%s21 + $0x300] sm:$0xff]
      %v4561 = vld [vmem:[%s21 + $0x308] sm:$0xff]
      %v4562 = vld [vmem:[%s21 + $0x310] sm:$0xff]
      %v4563 = vld [vmem:[%s21 + $0x318] sm:$0xff]
      %v4564 = vld [vmem:[%s21 + $0x320] sm:$0xff]
      %v4565 = vld [vmem:[%s21 + $0x328] sm:$0xff]
      %v4566 = vld [vmem:[%s21 + $0x330] sm:$0xff]
      %v4567 = vld [vmem:[%s21 + $0x338] sm:$0xff]
      %v4568 = vld [vmem:[%s21 + $0x340] sm:$0xff]
      %v4569 = vld [vmem:[%s21 + $0x348] sm:$0xff]
      %v4570 = vld [vmem:[%s21 + $0x350] sm:$0xff]
      %v4571 = vld [vmem:[%s21 + $0x358] sm:$0xff]
      %v4572 = vld [vmem:[%s21 + $0x360] sm:$0xff]
      %v4573 = vld [vmem:[%s21 + $0x368] sm:$0xff]
      %v4574 = vld [vmem:[%s21 + $0x370] sm:$0xff]
      %v4575 = vld [vmem:[%s21 + $0x378] sm:$0xff]
      %v4576 = vld [vmem:[%s21 + $0x380] sm:$0xff]
      %v4577 = vld [vmem:[%s21 + $0x388] sm:$0xff]
      %v4578 = vld [vmem:[%s21 + $0x390] sm:$0xff]
      %v4579 = vld [vmem:[%s21 + $0x398] sm:$0xff]
      %v4580 = vld [vmem:[%s21 + $0x3a0] sm:$0xff]
      %v4581 = vld [vmem:[%s21 + $0x3a8] sm:$0xff]
      %v4582 = vld [vmem:[%s21 + $0x3b0] sm:$0xff]
      %v4583 = vld [vmem:[%s21 + $0x3b8] sm:$0xff]
      %v4584 = vld [vmem:[%s21 + $0x3c0] sm:$0xff]
      %v4585 = vld [vmem:[%s21 + $0x3c8] sm:$0xff]
      %v4586 = vld [vmem:[%s21 + $0x3d0] sm:$0xff]
      %v4587 = vld [vmem:[%s21 + $0x3d8] sm:$0xff]
      %v4588 = vld [vmem:[%s21 + $0x3e0] sm:$0xff]
      %v4589 = vld [vmem:[%s21 + $0x3e8] sm:$0xff]
      %v4590 = vld [vmem:[%s21 + $0x3f0] sm:$0xff]
      %v4591 = vld [vmem:[%s21 + $0x3f8] sm:$0xff]
      %v4592 = vld [vmem:[%s21 + $0x400] sm:$0xff]
      %v4593 = vld [vmem:[%s21 + $0x408] sm:$0xff]
      %v4594 = vld [vmem:[%s21 + $0x410] sm:$0xff]
      %v4595 = vld [vmem:[%s21 + $0x418] sm:$0xff]
      %v4596 = vld [vmem:[%s21 + $0x420] sm:$0xff]
      %v4597 = vld [vmem:[%s21 + $0x428] sm:$0xff]
      %v4598 = vld [vmem:[%s21 + $0x430] sm:$0xff]
      %v4599 = vld [vmem:[%s21 + $0x438] sm:$0xff]
      %v4600 = vld [vmem:[%s21 + $0x440] sm:$0xff]
      %v4601 = vld [vmem:[%s21 + $0x448] sm:$0xff]
      %v4602 = vld [vmem:[%s21 + $0x450] sm:$0xff]
      %v4603 = vld [vmem:[%s21 + $0x458] sm:$0xff]
      %v4604 = vld [vmem:[%s21 + $0x460] sm:$0xff]
      %v4605 = vld [vmem:[%s21 + $0x468] sm:$0xff]
      %v4606 = vld [vmem:[%s21 + $0x470] sm:$0xff]
      %v4607 = vld [vmem:[%s21 + $0x478] sm:$0xff]
      %v4608 = vld [vmem:[%s22] sm:$0x3f]
      %v4610 = vlaneseq
      %v4611 = vshrl.u32 %v4610, 7
      %v4612 = vsub.s32 0, %v4611
      %v4613 = vrot.slane %v4608, %v4612
      %v4614 = vlaneseq
      %v4615 = vshrl.u32 %v4614, 7
      %v4616 = vsub.s32 1, %v4615
      %v4617 = vrot.slane %v4608, %v4616
      %v4618 = vlaneseq
      %v4619 = vshrl.u32 %v4618, 7
      %v4620 = vsub.s32 2, %v4619
      %v4621 = vrot.slane %v4608, %v4620
      %v4622 = vlaneseq
      %v4623 = vshrl.u32 %v4622, 7
      %v4624 = vsub.s32 3, %v4623
      %v4625 = vrot.slane %v4608, %v4624
      %v4626 = vlaneseq
      %v4627 = vshrl.u32 %v4626, 7
      %v4628 = vsub.s32 4, %v4627
      %v4629 = vrot.slane %v4608, %v4628
      %v4630 = vlaneseq
      %v4631 = vshrl.u32 %v4630, 7
      %v4632 = vsub.s32 5, %v4631
      %v4633 = vrot.slane %v4608, %v4632
      %v4784 = vunpack.c.l.b16 %v4464
      %v4785 = vunpack.c.h.b16 %v4464
      %v4786 = vunpack.c.l.b16 %v4465
      %v4787 = vunpack.c.h.b16 %v4465
      %v4788 = vunpack.c.l.b16 %v4466
      %v4789 = vunpack.c.h.b16 %v4466
      %v4790 = vunpack.c.l.b16 %v4467
      %v4791 = vunpack.c.h.b16 %v4467
      %v4792 = vunpack.c.l.b16 %v4468
      %v4793 = vunpack.c.h.b16 %v4468
      %v4794 = vunpack.c.l.b16 %v4469
      %v4795 = vunpack.c.h.b16 %v4469
      %v4796 = vunpack.c.l.b16 %v4470
      %v4797 = vunpack.c.h.b16 %v4470
      %v4798 = vunpack.c.l.b16 %v4471
      %v4799 = vunpack.c.h.b16 %v4471
      %v4800 = vunpack.c.l.b16 %v4472
      %v4801 = vunpack.c.h.b16 %v4472
      %v4802 = vunpack.c.l.b16 %v4473
      %v4803 = vunpack.c.h.b16 %v4473
      %v4804 = vunpack.c.l.b16 %v4474
      %v4805 = vunpack.c.h.b16 %v4474
      %v4806 = vunpack.c.l.b16 %v4475
      %v4807 = vunpack.c.h.b16 %v4475
      %v4808 = vunpack.c.l.b16 %v4476
      %v4809 = vunpack.c.h.b16 %v4476
      %v4810 = vunpack.c.l.b16 %v4477
      %v4811 = vunpack.c.h.b16 %v4477
      %v4812 = vunpack.c.l.b16 %v4478
      %v4813 = vunpack.c.h.b16 %v4478
      %v4814 = vunpack.c.l.b16 %v4479
      %v4815 = vunpack.c.h.b16 %v4479
      %v4816 = vunpack.c.l.b16 %v4480
      %v4817 = vunpack.c.h.b16 %v4480
      %v4818 = vunpack.c.l.b16 %v4481
      %v4819 = vunpack.c.h.b16 %v4481
      %v4820 = vunpack.c.l.b16 %v4482
      %v4821 = vunpack.c.h.b16 %v4482
      %v4822 = vunpack.c.l.b16 %v4483
      %v4823 = vunpack.c.h.b16 %v4483
      %v4824 = vunpack.c.l.b16 %v4484
      %v4825 = vunpack.c.h.b16 %v4484
      %v4826 = vunpack.c.l.b16 %v4485
      %v4827 = vunpack.c.h.b16 %v4485
      %v4828 = vunpack.c.l.b16 %v4486
      %v4829 = vunpack.c.h.b16 %v4486
      %v4830 = vunpack.c.l.b16 %v4487
      %v4831 = vunpack.c.h.b16 %v4487
      %v4832 = vunpack.c.l.b16 %v4488
      %v4833 = vunpack.c.h.b16 %v4488
      %v4834 = vunpack.c.l.b16 %v4489
      %v4835 = vunpack.c.h.b16 %v4489
      %v4836 = vunpack.c.l.b16 %v4490
      %v4837 = vunpack.c.h.b16 %v4490
      %v4838 = vunpack.c.l.b16 %v4491
      %v4839 = vunpack.c.h.b16 %v4491
      %v4840 = vunpack.c.l.b16 %v4492
      %v4841 = vunpack.c.h.b16 %v4492
      %v4842 = vunpack.c.l.b16 %v4493
      %v4843 = vunpack.c.h.b16 %v4493
      %v4844 = vunpack.c.l.b16 %v4494
      %v4845 = vunpack.c.h.b16 %v4494
      %v4846 = vunpack.c.l.b16 %v4495
      %v4847 = vunpack.c.h.b16 %v4495
      %v4848 = vunpack.c.l.b16 %v4496
      %v4849 = vunpack.c.h.b16 %v4496
      %v4850 = vunpack.c.l.b16 %v4497
      %v4851 = vunpack.c.h.b16 %v4497
      %v4852 = vunpack.c.l.b16 %v4498
      %v4853 = vunpack.c.h.b16 %v4498
      %v4854 = vunpack.c.l.b16 %v4499
      %v4855 = vunpack.c.h.b16 %v4499
      %v4856 = vunpack.c.l.b16 %v4500
      %v4857 = vunpack.c.h.b16 %v4500
      %v4858 = vunpack.c.l.b16 %v4501
      %v4859 = vunpack.c.h.b16 %v4501
      %v4860 = vunpack.c.l.b16 %v4502
      %v4861 = vunpack.c.h.b16 %v4502
      %v4862 = vunpack.c.l.b16 %v4503
      %v4863 = vunpack.c.h.b16 %v4503
      %v4864 = vunpack.c.l.b16 %v4504
      %v4865 = vunpack.c.h.b16 %v4504
      %v4866 = vunpack.c.l.b16 %v4505
      %v4867 = vunpack.c.h.b16 %v4505
      %v4868 = vunpack.c.l.b16 %v4506
      %v4869 = vunpack.c.h.b16 %v4506
      %v4870 = vunpack.c.l.b16 %v4507
      %v4871 = vunpack.c.h.b16 %v4507
      %v4872 = vunpack.c.l.b16 %v4508
      %v4873 = vunpack.c.h.b16 %v4508
      %v4874 = vunpack.c.l.b16 %v4509
      %v4875 = vunpack.c.h.b16 %v4509
      %v4876 = vunpack.c.l.b16 %v4510
      %v4877 = vunpack.c.h.b16 %v4510
      %v4878 = vunpack.c.l.b16 %v4511
      %v4879 = vunpack.c.h.b16 %v4511
      %v4880 = vunpack.c.l.b16 %v4512
      %v4881 = vunpack.c.h.b16 %v4512
      %v4882 = vunpack.c.l.b16 %v4513
      %v4883 = vunpack.c.h.b16 %v4513
      %v4884 = vunpack.c.l.b16 %v4514
      %v4885 = vunpack.c.h.b16 %v4514
      %v4886 = vunpack.c.l.b16 %v4515
      %v4887 = vunpack.c.h.b16 %v4515
      %v4888 = vunpack.c.l.b16 %v4516
      %v4889 = vunpack.c.h.b16 %v4516
      %v4890 = vunpack.c.l.b16 %v4517
      %v4891 = vunpack.c.h.b16 %v4517
      %v4892 = vunpack.c.l.b16 %v4518
      %v4893 = vunpack.c.h.b16 %v4518
      %v4894 = vunpack.c.l.b16 %v4519
      %v4895 = vunpack.c.h.b16 %v4519
      %v4896 = vunpack.c.l.b16 %v4520
      %v4897 = vunpack.c.h.b16 %v4520
      %v4898 = vunpack.c.l.b16 %v4521
      %v4899 = vunpack.c.h.b16 %v4521
      %v4900 = vunpack.c.l.b16 %v4522
      %v4901 = vunpack.c.h.b16 %v4522
      %v4902 = vunpack.c.l.b16 %v4523
      %v4903 = vunpack.c.h.b16 %v4523
      %v4904 = vunpack.c.l.b16 %v4524
      %v4905 = vunpack.c.h.b16 %v4524
      %v4906 = vunpack.c.l.b16 %v4525
      %v4907 = vunpack.c.h.b16 %v4525
      %v4908 = vunpack.c.l.b16 %v4526
      %v4909 = vunpack.c.h.b16 %v4526
      %v4910 = vunpack.c.l.b16 %v4527
      %v4911 = vunpack.c.h.b16 %v4527
      %v4912 = vunpack.c.l.b16 %v4528
      %v4913 = vunpack.c.h.b16 %v4528
      %v4914 = vunpack.c.l.b16 %v4529
      %v4915 = vunpack.c.h.b16 %v4529
      %v4916 = vunpack.c.l.b16 %v4530
      %v4917 = vunpack.c.h.b16 %v4530
      %v4918 = vunpack.c.l.b16 %v4531
      %v4919 = vunpack.c.h.b16 %v4531
      %v4920 = vunpack.c.l.b16 %v4532
      %v4921 = vunpack.c.h.b16 %v4532
      %v4922 = vunpack.c.l.b16 %v4533
      %v4923 = vunpack.c.h.b16 %v4533
      %v4924 = vunpack.c.l.b16 %v4534
      %v4925 = vunpack.c.h.b16 %v4534
      %v4926 = vunpack.c.l.b16 %v4535
      %v4927 = vunpack.c.h.b16 %v4535
      %v4928 = vunpack.c.l.b16 %v4536
      %v4929 = vunpack.c.h.b16 %v4536
      %v4930 = vunpack.c.l.b16 %v4537
      %v4931 = vunpack.c.h.b16 %v4537
      %v4932 = vunpack.c.l.b16 %v4538
      %v4933 = vunpack.c.h.b16 %v4538
      %v4934 = vunpack.c.l.b16 %v4539
      %v4935 = vunpack.c.h.b16 %v4539
      %v4936 = vunpack.c.l.b16 %v4540
      %v4937 = vunpack.c.h.b16 %v4540
      %v4938 = vunpack.c.l.b16 %v4541
      %v4939 = vunpack.c.h.b16 %v4541
      %v4940 = vunpack.c.l.b16 %v4542
      %v4941 = vunpack.c.h.b16 %v4542
      %v4942 = vunpack.c.l.b16 %v4543
      %v4943 = vunpack.c.h.b16 %v4543
      %v4944 = vunpack.c.l.b16 %v4544
      %v4945 = vunpack.c.h.b16 %v4544
      %v4946 = vunpack.c.l.b16 %v4545
      %v4947 = vunpack.c.h.b16 %v4545
      %v4948 = vunpack.c.l.b16 %v4546
      %v4949 = vunpack.c.h.b16 %v4546
      %v4950 = vunpack.c.l.b16 %v4547
      %v4951 = vunpack.c.h.b16 %v4547
      %v4952 = vunpack.c.l.b16 %v4548
      %v4953 = vunpack.c.h.b16 %v4548
      %v4954 = vunpack.c.l.b16 %v4549
      %v4955 = vunpack.c.h.b16 %v4549
      %v4956 = vunpack.c.l.b16 %v4550
      %v4957 = vunpack.c.h.b16 %v4550
      %v4958 = vunpack.c.l.b16 %v4551
      %v4959 = vunpack.c.h.b16 %v4551
      %v4960 = vunpack.c.l.b16 %v4552
      %v4961 = vunpack.c.h.b16 %v4552
      %v4962 = vunpack.c.l.b16 %v4553
      %v4963 = vunpack.c.h.b16 %v4553
      %v4964 = vunpack.c.l.b16 %v4554
      %v4965 = vunpack.c.h.b16 %v4554
      %v4966 = vunpack.c.l.b16 %v4555
      %v4967 = vunpack.c.h.b16 %v4555
      %v4968 = vunpack.c.l.b16 %v4556
      %v4969 = vunpack.c.h.b16 %v4556
      %v4970 = vunpack.c.l.b16 %v4557
      %v4971 = vunpack.c.h.b16 %v4557
      %v4972 = vunpack.c.l.b16 %v4558
      %v4973 = vunpack.c.h.b16 %v4558
      %v4974 = vunpack.c.l.b16 %v4559
      %v4975 = vunpack.c.h.b16 %v4559
      %v4976 = vunpack.c.l.b16 %v4560
      %v4977 = vunpack.c.h.b16 %v4560
      %v4978 = vunpack.c.l.b16 %v4561
      %v4979 = vunpack.c.h.b16 %v4561
      %v4980 = vunpack.c.l.b16 %v4562
      %v4981 = vunpack.c.h.b16 %v4562
      %v4982 = vunpack.c.l.b16 %v4563
      %v4983 = vunpack.c.h.b16 %v4563
      %v4984 = vunpack.c.l.b16 %v4564
      %v4985 = vunpack.c.h.b16 %v4564
      %v4986 = vunpack.c.l.b16 %v4565
      %v4987 = vunpack.c.h.b16 %v4565
      %v4988 = vunpack.c.l.b16 %v4566
      %v4989 = vunpack.c.h.b16 %v4566
      %v4990 = vunpack.c.l.b16 %v4567
      %v4991 = vunpack.c.h.b16 %v4567
      %v4992 = vunpack.c.l.b16 %v4568
      %v4993 = vunpack.c.h.b16 %v4568
      %v4994 = vunpack.c.l.b16 %v4569
      %v4995 = vunpack.c.h.b16 %v4569
      %v4996 = vunpack.c.l.b16 %v4570
      %v4997 = vunpack.c.h.b16 %v4570
      %v4998 = vunpack.c.l.b16 %v4571
      %v4999 = vunpack.c.h.b16 %v4571
      %v5000 = vunpack.c.l.b16 %v4572
      %v5001 = vunpack.c.h.b16 %v4572
      %v5002 = vunpack.c.l.b16 %v4573
      %v5003 = vunpack.c.h.b16 %v4573
      %v5004 = vunpack.c.l.b16 %v4574
      %v5005 = vunpack.c.h.b16 %v4574
      %v5006 = vunpack.c.l.b16 %v4575
      %v5007 = vunpack.c.h.b16 %v4575
      %v5008 = vunpack.c.l.b16 %v4576
      %v5009 = vunpack.c.h.b16 %v4576
      %v5010 = vunpack.c.l.b16 %v4577
      %v5011 = vunpack.c.h.b16 %v4577
      %v5012 = vunpack.c.l.b16 %v4578
      %v5013 = vunpack.c.h.b16 %v4578
      %v5014 = vunpack.c.l.b16 %v4579
      %v5015 = vunpack.c.h.b16 %v4579
      %v5016 = vunpack.c.l.b16 %v4580
      %v5017 = vunpack.c.h.b16 %v4580
      %v5018 = vunpack.c.l.b16 %v4581
      %v5019 = vunpack.c.h.b16 %v4581
      %v5020 = vunpack.c.l.b16 %v4582
      %v5021 = vunpack.c.h.b16 %v4582
      %v5022 = vunpack.c.l.b16 %v4583
      %v5023 = vunpack.c.h.b16 %v4583
      %v5024 = vunpack.c.l.b16 %v4584
      %v5025 = vunpack.c.h.b16 %v4584
      %v5026 = vunpack.c.l.b16 %v4585
      %v5027 = vunpack.c.h.b16 %v4585
      %v5028 = vunpack.c.l.b16 %v4586
      %v5029 = vunpack.c.h.b16 %v4586
      %v5030 = vunpack.c.l.b16 %v4587
      %v5031 = vunpack.c.h.b16 %v4587
      %v5032 = vunpack.c.l.b16 %v4588
      %v5033 = vunpack.c.h.b16 %v4588
      %v5034 = vunpack.c.l.b16 %v4589
      %v5035 = vunpack.c.h.b16 %v4589
      %v5036 = vunpack.c.l.b16 %v4590
      %v5037 = vunpack.c.h.b16 %v4590
      %v5038 = vunpack.c.l.b16 %v4591
      %v5039 = vunpack.c.h.b16 %v4591
      %v5040 = vunpack.c.l.b16 %v4592
      %v5041 = vunpack.c.h.b16 %v4592
      %v5042 = vunpack.c.l.b16 %v4593
      %v5043 = vunpack.c.h.b16 %v4593
      %v5044 = vunpack.c.l.b16 %v4594
      %v5045 = vunpack.c.h.b16 %v4594
      %v5046 = vunpack.c.l.b16 %v4595
      %v5047 = vunpack.c.h.b16 %v4595
      %v5048 = vunpack.c.l.b16 %v4596
      %v5049 = vunpack.c.h.b16 %v4596
      %v5050 = vunpack.c.l.b16 %v4597
      %v5051 = vunpack.c.h.b16 %v4597
      %v5052 = vunpack.c.l.b16 %v4598
      %v5053 = vunpack.c.h.b16 %v4598
      %v5054 = vunpack.c.l.b16 %v4599
      %v5055 = vunpack.c.h.b16 %v4599
      %v5056 = vunpack.c.l.b16 %v4600
      %v5057 = vunpack.c.h.b16 %v4600
      %v5058 = vunpack.c.l.b16 %v4601
      %v5059 = vunpack.c.h.b16 %v4601
      %v5060 = vunpack.c.l.b16 %v4602
      %v5061 = vunpack.c.h.b16 %v4602
      %v5062 = vunpack.c.l.b16 %v4603
      %v5063 = vunpack.c.h.b16 %v4603
      %v5064 = vunpack.c.l.b16 %v4604
      %v5065 = vunpack.c.h.b16 %v4604
      %v5066 = vunpack.c.l.b16 %v4605
      %v5067 = vunpack.c.h.b16 %v4605
      %v5068 = vunpack.c.l.b16 %v4606
      %v5069 = vunpack.c.h.b16 %v4606
      %v5070 = vunpack.c.l.b16 %v4607
      %v5071 = vunpack.c.h.b16 %v4607
      %v5072 = vpack.c.b16 %v4790, %v4784
      %v5073 = vpack.c.b16 %v4791, %v4785
      %v5074 = vpack.c.b16 %v4792, %v4786
      %v5075 = vpack.c.b16 %v4793, %v4787
      %v5076 = vpack.c.b16 %v4794, %v4788
      %v5077 = vpack.c.b16 %v4795, %v4789
      %v5078 = vpack.c.b16 %v4802, %v4796
      %v5079 = vpack.c.b16 %v4803, %v4797
      %v5080 = vpack.c.b16 %v4804, %v4798
      %v5081 = vpack.c.b16 %v4805, %v4799
      %v5082 = vpack.c.b16 %v4806, %v4800
      %v5083 = vpack.c.b16 %v4807, %v4801
      %v5084 = vpack.c.b16 %v4814, %v4808
      %v5085 = vpack.c.b16 %v4815, %v4809
      %v5086 = vpack.c.b16 %v4816, %v4810
      %v5087 = vpack.c.b16 %v4817, %v4811
      %v5088 = vpack.c.b16 %v4818, %v4812
      %v5089 = vpack.c.b16 %v4819, %v4813
      %v5090 = vpack.c.b16 %v4826, %v4820
      %v5091 = vpack.c.b16 %v4827, %v4821
      %v5092 = vpack.c.b16 %v4828, %v4822
      %v5093 = vpack.c.b16 %v4829, %v4823
      %v5094 = vpack.c.b16 %v4830, %v4824
      %v5095 = vpack.c.b16 %v4831, %v4825
      %v5096 = vpack.c.b16 %v4838, %v4832
      %v5097 = vpack.c.b16 %v4839, %v4833
      %v5098 = vpack.c.b16 %v4840, %v4834
      %v5099 = vpack.c.b16 %v4841, %v4835
      %v5100 = vpack.c.b16 %v4842, %v4836
      %v5101 = vpack.c.b16 %v4843, %v4837
      %v5102 = vpack.c.b16 %v4850, %v4844
      %v5103 = vpack.c.b16 %v4851, %v4845
      %v5104 = vpack.c.b16 %v4852, %v4846
      %v5105 = vpack.c.b16 %v4853, %v4847
      %v5106 = vpack.c.b16 %v4854, %v4848
      %v5107 = vpack.c.b16 %v4855, %v4849
      %v5108 = vpack.c.b16 %v4862, %v4856
      %v5109 = vpack.c.b16 %v4863, %v4857
      %v5110 = vpack.c.b16 %v4864, %v4858
      %v5111 = vpack.c.b16 %v4865, %v4859
      %v5112 = vpack.c.b16 %v4866, %v4860
      %v5113 = vpack.c.b16 %v4867, %v4861
      %v5114 = vpack.c.b16 %v4874, %v4868
      %v5115 = vpack.c.b16 %v4875, %v4869
      %v5116 = vpack.c.b16 %v4876, %v4870
      %v5117 = vpack.c.b16 %v4877, %v4871
      %v5118 = vpack.c.b16 %v4878, %v4872
      %v5119 = vpack.c.b16 %v4879, %v4873
      %v5120 = vpack.c.b16 %v4886, %v4880
      %v5121 = vpack.c.b16 %v4887, %v4881
      %v5122 = vpack.c.b16 %v4888, %v4882
      %v5123 = vpack.c.b16 %v4889, %v4883
      %v5124 = vpack.c.b16 %v4890, %v4884
      %v5125 = vpack.c.b16 %v4891, %v4885
      %v5126 = vpack.c.b16 %v4898, %v4892
      %v5127 = vpack.c.b16 %v4899, %v4893
      %v5128 = vpack.c.b16 %v4900, %v4894
      %v5129 = vpack.c.b16 %v4901, %v4895
      %v5130 = vpack.c.b16 %v4902, %v4896
      %v5131 = vpack.c.b16 %v4903, %v4897
      %v5132 = vpack.c.b16 %v4910, %v4904
      %v5133 = vpack.c.b16 %v4911, %v4905
      %v5134 = vpack.c.b16 %v4912, %v4906
      %v5135 = vpack.c.b16 %v4913, %v4907
      %v5136 = vpack.c.b16 %v4914, %v4908
      %v5137 = vpack.c.b16 %v4915, %v4909
      %v5138 = vpack.c.b16 %v4922, %v4916
      %v5139 = vpack.c.b16 %v4923, %v4917
      %v5140 = vpack.c.b16 %v4924, %v4918
      %v5141 = vpack.c.b16 %v4925, %v4919
      %v5142 = vpack.c.b16 %v4926, %v4920
      %v5143 = vpack.c.b16 %v4927, %v4921
      %v5144 = vpack.c.b16 %v4934, %v4928
      %v5145 = vpack.c.b16 %v4935, %v4929
      %v5146 = vpack.c.b16 %v4936, %v4930
      %v5147 = vpack.c.b16 %v4937, %v4931
      %v5148 = vpack.c.b16 %v4938, %v4932
      %v5149 = vpack.c.b16 %v4939, %v4933
      %v5150 = vpack.c.b16 %v4946, %v4940
      %v5151 = vpack.c.b16 %v4947, %v4941
      %v5152 = vpack.c.b16 %v4948, %v4942
      %v5153 = vpack.c.b16 %v4949, %v4943
      %v5154 = vpack.c.b16 %v4950, %v4944
      %v5155 = vpack.c.b16 %v4951, %v4945
      %v5156 = vpack.c.b16 %v4958, %v4952
      %v5157 = vpack.c.b16 %v4959, %v4953
      %v5158 = vpack.c.b16 %v4960, %v4954
      %v5159 = vpack.c.b16 %v4961, %v4955
      %v5160 = vpack.c.b16 %v4962, %v4956
      %v5161 = vpack.c.b16 %v4963, %v4957
      %v5162 = vpack.c.b16 %v4970, %v4964
      %v5163 = vpack.c.b16 %v4971, %v4965
      %v5164 = vpack.c.b16 %v4972, %v4966
      %v5165 = vpack.c.b16 %v4973, %v4967
      %v5166 = vpack.c.b16 %v4974, %v4968
      %v5167 = vpack.c.b16 %v4975, %v4969
      %v5168 = vpack.c.b16 %v4982, %v4976
      %v5169 = vpack.c.b16 %v4983, %v4977
      %v5170 = vpack.c.b16 %v4984, %v4978
      %v5171 = vpack.c.b16 %v4985, %v4979
      %v5172 = vpack.c.b16 %v4986, %v4980
      %v5173 = vpack.c.b16 %v4987, %v4981
      %v5174 = vpack.c.b16 %v4994, %v4988
      %v5175 = vpack.c.b16 %v4995, %v4989
      %v5176 = vpack.c.b16 %v4996, %v4990
      %v5177 = vpack.c.b16 %v4997, %v4991
      %v5178 = vpack.c.b16 %v4998, %v4992
      %v5179 = vpack.c.b16 %v4999, %v4993
      %v5180 = vpack.c.b16 %v5006, %v5000
      %v5181 = vpack.c.b16 %v5007, %v5001
      %v5182 = vpack.c.b16 %v5008, %v5002
      %v5183 = vpack.c.b16 %v5009, %v5003
      %v5184 = vpack.c.b16 %v5010, %v5004
      %v5185 = vpack.c.b16 %v5011, %v5005
      %v5186 = vpack.c.b16 %v5018, %v5012
      %v5187 = vpack.c.b16 %v5019, %v5013
      %v5188 = vpack.c.b16 %v5020, %v5014
      %v5189 = vpack.c.b16 %v5021, %v5015
      %v5190 = vpack.c.b16 %v5022, %v5016
      %v5191 = vpack.c.b16 %v5023, %v5017
      %v5192 = vpack.c.b16 %v5030, %v5024
      %v5193 = vpack.c.b16 %v5031, %v5025
      %v5194 = vpack.c.b16 %v5032, %v5026
      %v5195 = vpack.c.b16 %v5033, %v5027
      %v5196 = vpack.c.b16 %v5034, %v5028
      %v5197 = vpack.c.b16 %v5035, %v5029
      %v5198 = vpack.c.b16 %v5042, %v5036
      %v5199 = vpack.c.b16 %v5043, %v5037
      %v5200 = vpack.c.b16 %v5044, %v5038
      %v5201 = vpack.c.b16 %v5045, %v5039
      %v5202 = vpack.c.b16 %v5046, %v5040
      %v5203 = vpack.c.b16 %v5047, %v5041
      %v5204 = vpack.c.b16 %v5054, %v5048
      %v5205 = vpack.c.b16 %v5055, %v5049
      %v5206 = vpack.c.b16 %v5056, %v5050
      %v5207 = vpack.c.b16 %v5057, %v5051
      %v5208 = vpack.c.b16 %v5058, %v5052
      %v5209 = vpack.c.b16 %v5059, %v5053
      %v5210 = vpack.c.b16 %v5066, %v5060
      %v5211 = vpack.c.b16 %v5067, %v5061
      %v5212 = vpack.c.b16 %v5068, %v5062
      %v5213 = vpack.c.b16 %v5069, %v5063
      %v5214 = vpack.c.b16 %v5070, %v5064
      %v5215 = vpack.c.b16 %v5071, %v5065
      %5360 = vmatprep.subr.bf16.mxu0 %v5115
      %5361 = vmatpush1.bf16.msra.mxu0 %v5114
      %5362 = vmatprep.subr.bf16.mxu0 %v5109
      %5363 = vmatpush1.bf16.msra.mxu0 %v5108
      %5364 = vmatprep.subr.bf16.mxu0 %v5103
      %5365 = vmatpush1.bf16.msra.mxu0 %v5102
      %5366 = vmatprep.subr.bf16.mxu0 %v5097
      %5367 = vmatpush1.bf16.msra.mxu0 %v5096
      %5368 = vmatprep.subr.bf16.mxu0 %v5091
      %5369 = vmatpush1.bf16.msra.mxu0 %v5090
      %5370 = vmatprep.subr.bf16.mxu0 %v5085
      %5371 = vmatpush1.bf16.msra.mxu0 %v5084
      %5372 = vmatprep.subr.bf16.mxu0 %v5079
      %5373 = vmatpush1.bf16.msra.mxu0 %v5078
      %5374 = vmatprep.subr.bf16.mxu0 %v5073
      %5375 = vmatpush1.bf16.msra.mxu0 %v5072
      %5376 = vmatprep.subr.bf16.mxu0 %v5163
      %5377 = vmatpush2.bf16.msra.mxu0 %v5162
      %5378 = vmatprep.subr.bf16.mxu0 %v5157
      %5379 = vmatpush2.bf16.msra.mxu0 %v5156
      %5380 = vmatprep.subr.bf16.mxu0 %v5151
      %5381 = vmatpush2.bf16.msra.mxu0 %v5150
      %5382 = vmatprep.subr.bf16.mxu0 %v5145
      %5383 = vmatpush2.bf16.msra.mxu0 %v5144
      %5384 = vmatprep.subr.bf16.mxu0 %v5139
      %5385 = vmatpush2.bf16.msra.mxu0 %v5138
      %5386 = vmatprep.subr.bf16.mxu0 %v5133
      %5387 = vmatpush2.bf16.msra.mxu0 %v5132
      %5388 = vmatprep.subr.bf16.mxu0 %v5127
      %5389 = vmatpush2.bf16.msra.mxu0 %v5126
      %5390 = vmatprep.subr.bf16.mxu0 %v5121
      %5391 = vmatpush2.bf16.msra.mxu0 %v5120
      %5392 = vmatprep.mubr.bf16.mxu0 %v4459
      %5393 = vmatmul.mubr.bf16.gmra.mxu0 %v4458
      %v5394 = vpop.f32.mrf.mxu0
      %v5395 = vadd.f32 %v4613, %v5394
      %v5396 = vpop.f32.mrf.mxu0
      %v5397 = vadd.f32 %v4617, %v5396
      %v5398 = vpop.f32.mrf.mxu0
      %v5399 = vadd.f32 %v4613, %v5398
      %v5400 = vpop.f32.mrf.mxu0
      %v5401 = vadd.f32 %v4617, %v5400
      %5402 = vmatprep.mubr.bf16.mxu0 %v4462
      %5403 = vmatmul.mubr.bf16.gmra.mxu0 %v4461
      %v5404 = vpop.f32.mrf.mxu0
      %v5405 = vadd.f32 %v4613, %v5404
      %v5406 = vpop.f32.mrf.mxu0
      %v5407 = vadd.f32 %v4617, %v5406
      %v5408 = vpop.f32.mrf.mxu0
      %v5409 = vadd.f32 %v4613, %v5408
      %v5410 = vpop.f32.mrf.mxu0
      %v5411 = vadd.f32 %v4617, %v5410
      %5412 = vdwg.mxu0
      %5413 = vmatprep.subr.bf16.mxu0 %v5211
      %5414 = vmatpush1.bf16.msra.mxu0 %v5210
      %5415 = vmatprep.subr.bf16.mxu0 %v5205
      %5416 = vmatpush1.bf16.msra.mxu0 %v5204
      %5417 = vmatprep.subr.bf16.mxu0 %v5199
      %5418 = vmatpush1.bf16.msra.mxu0 %v5198
      %5419 = vmatprep.subr.bf16.mxu0 %v5193
      %5420 = vmatpush1.bf16.msra.mxu0 %v5192
      %5421 = vmatprep.subr.bf16.mxu0 %v5187
      %5422 = vmatpush1.bf16.msra.mxu0 %v5186
      %5423 = vmatprep.subr.bf16.mxu0 %v5181
      %5424 = vmatpush1.bf16.msra.mxu0 %v5180
      %5425 = vmatprep.subr.bf16.mxu0 %v5175
      %5426 = vmatpush1.bf16.msra.mxu0 %v5174
      %5427 = vmatprep.subr.bf16.mxu0 %v5169
      %5428 = vmatpush1.bf16.msra.mxu0 %v5168
      %5429 = vmatprep.subr.bf16.mxu0 0
      %5430 = vmatpush2.bf16.msra.mxu0 0
      %5431 = vmatprep.subr.bf16.mxu0 0
      %5432 = vmatpush2.bf16.msra.mxu0 0
      %5433 = vmatprep.subr.bf16.mxu0 0
      %5434 = vmatpush2.bf16.msra.mxu0 0
      %5435 = vmatprep.subr.bf16.mxu0 0
      %5436 = vmatpush2.bf16.msra.mxu0 0
      %5437 = vmatprep.subr.bf16.mxu0 0
      %5438 = vmatpush2.bf16.msra.mxu0 0
      %5439 = vmatprep.subr.bf16.mxu0 0
      %5440 = vmatpush2.bf16.msra.mxu0 0
      %5441 = vmatprep.subr.bf16.mxu0 0
      %5442 = vmatpush2.bf16.msra.mxu0 0
      %5443 = vmatprep.subr.bf16.mxu0 0
      %5444 = vmatpush2.bf16.msra.mxu0 0
      %5445 = vmatprep.mubr.bf16.mxu0 0
      %5446 = vmatmul.mubr.bf16.gmra.mxu0 %v4460
      %v5447 = vpop.f32.mrf.mxu0
      %v5448 = vadd.f32 %v5395, %v5447
      %v5449 = vpop.f32.mrf.mxu0
      %v5450 = vadd.f32 %v5397, %v5449
      %v5451 = vpop.f32.mrf.mxu0
      %v5452 = vadd.f32 %v5399, %v5451
      %v5453 = vpop.f32.mrf.mxu0
      %v5454 = vadd.f32 %v5401, %v5453
      %5455 = vmatprep.mubr.bf16.mxu0 0
      %5456 = vmatmul.mubr.bf16.gmra.mxu0 %v4463
      %v5457 = vpop.f32.mrf.mxu0
      %v5458 = vadd.f32 %v5405, %v5457
      %v5459 = vpop.f32.mrf.mxu0
      %v5460 = vadd.f32 %v5407, %v5459
      %v5461 = vpop.f32.mrf.mxu0
      %v5462 = vadd.f32 %v5409, %v5461
      %v5463 = vpop.f32.mrf.mxu0
      %v5464 = vadd.f32 %v5411, %v5463
      %5465 = vdwg.mxu0
      %5466 = vmatprep.subr.bf16.mxu0 %v5117
      %5467 = vmatpush1.bf16.msra.mxu0 %v5116
      %5468 = vmatprep.subr.bf16.mxu0 %v5111
      %5469 = vmatpush1.bf16.msra.mxu0 %v5110
      %5470 = vmatprep.subr.bf16.mxu0 %v5105
      %5471 = vmatpush1.bf16.msra.mxu0 %v5104
      %5472 = vmatprep.subr.bf16.mxu0 %v5099
      %5473 = vmatpush1.bf16.msra.mxu0 %v5098
      %5474 = vmatprep.subr.bf16.mxu0 %v5093
      %5475 = vmatpush1.bf16.msra.mxu0 %v5092
      %5476 = vmatprep.subr.bf16.mxu0 %v5087
      %5477 = vmatpush1.bf16.msra.mxu0 %v5086
      %5478 = vmatprep.subr.bf16.mxu0 %v5081
      %5479 = vmatpush1.bf16.msra.mxu0 %v5080
      %5480 = vmatprep.subr.bf16.mxu0 %v5075
      %5481 = vmatpush1.bf16.msra.mxu0 %v5074
      %5482 = vmatprep.subr.bf16.mxu0 %v5165
      %5483 = vmatpush2.bf16.msra.mxu0 %v5164
      %5484 = vmatprep.subr.bf16.mxu0 %v5159
      %5485 = vmatpush2.bf16.msra.mxu0 %v5158
      %5486 = vmatprep.subr.bf16.mxu0 %v5153
      %5487 = vmatpush2.bf16.msra.mxu0 %v5152
      %5488 = vmatprep.subr.bf16.mxu0 %v5147
      %5489 = vmatpush2.bf16.msra.mxu0 %v5146
      %5490 = vmatprep.subr.bf16.mxu0 %v5141
      %5491 = vmatpush2.bf16.msra.mxu0 %v5140
      %5492 = vmatprep.subr.bf16.mxu0 %v5135
      %5493 = vmatpush2.bf16.msra.mxu0 %v5134
      %5494 = vmatprep.subr.bf16.mxu0 %v5129
      %5495 = vmatpush2.bf16.msra.mxu0 %v5128
      %5496 = vmatprep.subr.bf16.mxu0 %v5123
      %5497 = vmatpush2.bf16.msra.mxu0 %v5122
      %5498 = vmatprep.mubr.bf16.mxu0 %v4459
      %5499 = vmatmul.mubr.bf16.gmra.mxu0 %v4458
      %v5500 = vpop.f32.mrf.mxu0
      %v5501 = vadd.f32 %v4621, %v5500
      %v5502 = vpop.f32.mrf.mxu0
      %v5503 = vadd.f32 %v4625, %v5502
      %v5504 = vpop.f32.mrf.mxu0
      %v5505 = vadd.f32 %v4621, %v5504
      %v5506 = vpop.f32.mrf.mxu0
      %v5507 = vadd.f32 %v4625, %v5506
      %5508 = vmatprep.mubr.bf16.mxu0 %v4462
      %5509 = vmatmul.mubr.bf16.gmra.mxu0 %v4461
      %v5510 = vpop.f32.mrf.mxu0
      %v5511 = vadd.f32 %v4621, %v5510
      %v5512 = vpop.f32.mrf.mxu0
      %v5513 = vadd.f32 %v4625, %v5512
      %v5514 = vpop.f32.mrf.mxu0
      %v5515 = vadd.f32 %v4621, %v5514
      %v5516 = vpop.f32.mrf.mxu0
      %v5517 = vadd.f32 %v4625, %v5516
      %5518 = vdwg.mxu0
      %5519 = vmatprep.subr.bf16.mxu0 %v5213
      %5520 = vmatpush1.bf16.msra.mxu0 %v5212
      %5521 = vmatprep.subr.bf16.mxu0 %v5207
      %5522 = vmatpush1.bf16.msra.mxu0 %v5206
      %5523 = vmatprep.subr.bf16.mxu0 %v5201
      %5524 = vmatpush1.bf16.msra.mxu0 %v5200
      %5525 = vmatprep.subr.bf16.mxu0 %v5195
      %5526 = vmatpush1.bf16.msra.mxu0 %v5194
      %5527 = vmatprep.subr.bf16.mxu0 %v5189
      %5528 = vmatpush1.bf16.msra.mxu0 %v5188
      %5529 = vmatprep.subr.bf16.mxu0 %v5183
      %5530 = vmatpush1.bf16.msra.mxu0 %v5182
      %5531 = vmatprep.subr.bf16.mxu0 %v5177
      %5532 = vmatpush1.bf16.msra.mxu0 %v5176
      %5533 = vmatprep.subr.bf16.mxu0 %v5171
      %5534 = vmatpush1.bf16.msra.mxu0 %v5170
      %5535 = vmatprep.subr.bf16.mxu0 0
      %5536 = vmatpush2.bf16.msra.mxu0 0
      %5537 = vmatprep.subr.bf16.mxu0 0
      %5538 = vmatpush2.bf16.msra.mxu0 0
      %5539 = vmatprep.subr.bf16.mxu0 0
      %5540 = vmatpush2.bf16.msra.mxu0 0
      %5541 = vmatprep.subr.bf16.mxu0 0
      %5542 = vmatpush2.bf16.msra.mxu0 0
      %5543 = vmatprep.subr.bf16.mxu0 0
      %5544 = vmatpush2.bf16.msra.mxu0 0
      %5545 = vmatprep.subr.bf16.mxu0 0
      %5546 = vmatpush2.bf16.msra.mxu0 0
      %5547 = vmatprep.subr.bf16.mxu0 0
      %5548 = vmatpush2.bf16.msra.mxu0 0
      %5549 = vmatprep.subr.bf16.mxu0 0
      %5550 = vmatpush2.bf16.msra.mxu0 0
      %5551 = vmatprep.mubr.bf16.mxu0 0
      %5552 = vmatmul.mubr.bf16.gmra.mxu0 %v4460
      %v5553 = vpop.f32.mrf.mxu0
      %v5554 = vadd.f32 %v5501, %v5553
      %v5555 = vpop.f32.mrf.mxu0
      %v5556 = vadd.f32 %v5503, %v5555
      %v5557 = vpop.f32.mrf.mxu0
      %v5558 = vadd.f32 %v5505, %v5557
      %v5559 = vpop.f32.mrf.mxu0
      %v5560 = vadd.f32 %v5507, %v5559
      %5561 = vmatprep.mubr.bf16.mxu0 0
      %5562 = vmatmul.mubr.bf16.gmra.mxu0 %v4463
      %v5563 = vpop.f32.mrf.mxu0
      %v5564 = vadd.f32 %v5511, %v5563
      %v5565 = vpop.f32.mrf.mxu0
      %v5566 = vadd.f32 %v5513, %v5565
      %v5567 = vpop.f32.mrf.mxu0
      %v5568 = vadd.f32 %v5515, %v5567
      %v5569 = vpop.f32.mrf.mxu0
      %v5570 = vadd.f32 %v5517, %v5569
      %5571 = vdwg.mxu0
      %5572 = vmatprep.subr.bf16.mxu0 %v5119
      %5573 = vmatpush1.bf16.msra.mxu0 %v5118
      %5574 = vmatprep.subr.bf16.mxu0 %v5113
      %5575 = vmatpush1.bf16.msra.mxu0 %v5112
      %5576 = vmatprep.subr.bf16.mxu0 %v5107
      %5577 = vmatpush1.bf16.msra.mxu0 %v5106
      %5578 = vmatprep.subr.bf16.mxu0 %v5101
      %5579 = vmatpush1.bf16.msra.mxu0 %v5100
      %5580 = vmatprep.subr.bf16.mxu0 %v5095
      %5581 = vmatpush1.bf16.msra.mxu0 %v5094
      %5582 = vmatprep.subr.bf16.mxu0 %v5089
      %5583 = vmatpush1.bf16.msra.mxu0 %v5088
      %5584 = vmatprep.subr.bf16.mxu0 %v5083
      %5585 = vmatpush1.bf16.msra.mxu0 %v5082
      %5586 = vmatprep.subr.bf16.mxu0 %v5077
      %5587 = vmatpush1.bf16.msra.mxu0 %v5076
      %5588 = vmatprep.subr.bf16.mxu0 %v5167
      %5589 = vmatpush2.bf16.msra.mxu0 %v5166
      %5590 = vmatprep.subr.bf16.mxu0 %v5161
      %5591 = vmatpush2.bf16.msra.mxu0 %v5160
      %5592 = vmatprep.subr.bf16.mxu0 %v5155
      %5593 = vmatpush2.bf16.msra.mxu0 %v5154
      %5594 = vmatprep.subr.bf16.mxu0 %v5149
      %5595 = vmatpush2.bf16.msra.mxu0 %v5148
      %5596 = vmatprep.subr.bf16.mxu0 %v5143
      %5597 = vmatpush2.bf16.msra.mxu0 %v5142
      %5598 = vmatprep.subr.bf16.mxu0 %v5137
      %5599 = vmatpush2.bf16.msra.mxu0 %v5136
      %5600 = vmatprep.subr.bf16.mxu0 %v5131
      %5601 = vmatpush2.bf16.msra.mxu0 %v5130
      %5602 = vmatprep.subr.bf16.mxu0 %v5125
      %5603 = vmatpush2.bf16.msra.mxu0 %v5124
      %5604 = vmatprep.mubr.bf16.mxu0 %v4459
      %5605 = vmatmul.mubr.bf16.gmra.mxu0 %v4458
      %v5606 = vpop.f32.mrf.mxu0
      %v5607 = vadd.f32 %v4629, %v5606
      %v5608 = vpop.f32.mrf.mxu0
      %v5609 = vadd.f32 %v4633, %v5608
      %v5610 = vpop.f32.mrf.mxu0
      %v5611 = vadd.f32 %v4629, %v5610
      %v5612 = vpop.f32.mrf.mxu0
      %v5613 = vadd.f32 %v4633, %v5612
      %5614 = vmatprep.mubr.bf16.mxu0 %v4462
      %5615 = vmatmul.mubr.bf16.gmra.mxu0 %v4461
      %v5616 = vpop.f32.mrf.mxu0
      %v5617 = vadd.f32 %v4629, %v5616
      %v5618 = vpop.f32.mrf.mxu0
      %v5619 = vadd.f32 %v4633, %v5618
      %v5620 = vpop.f32.mrf.mxu0
      %v5621 = vadd.f32 %v4629, %v5620
      %v5622 = vpop.f32.mrf.mxu0
      %v5623 = vadd.f32 %v4633, %v5622
      %5624 = vdwg.mxu0
      %5625 = vmatprep.subr.bf16.mxu0 %v5215
      %5626 = vmatpush1.bf16.msra.mxu0 %v5214
      %5627 = vmatprep.subr.bf16.mxu0 %v5209
      %5628 = vmatpush1.bf16.msra.mxu0 %v5208
      %5629 = vmatprep.subr.bf16.mxu0 %v5203
      %5630 = vmatpush1.bf16.msra.mxu0 %v5202
      %5631 = vmatprep.subr.bf16.mxu0 %v5197
      %5632 = vmatpush1.bf16.msra.mxu0 %v5196
      %5633 = vmatprep.subr.bf16.mxu0 %v5191
      %5634 = vmatpush1.bf16.msra.mxu0 %v5190
      %5635 = vmatprep.subr.bf16.mxu0 %v5185
      %5636 = vmatpush1.bf16.msra.mxu0 %v5184
      %5637 = vmatprep.subr.bf16.mxu0 %v5179
      %5638 = vmatpush1.bf16.msra.mxu0 %v5178
      %5639 = vmatprep.subr.bf16.mxu0 %v5173
      %5640 = vmatpush1.bf16.msra.mxu0 %v5172
      %5641 = vmatprep.subr.bf16.mxu0 0
      %5642 = vmatpush2.bf16.msra.mxu0 0
      %5643 = vmatprep.subr.bf16.mxu0 0
      %5644 = vmatpush2.bf16.msra.mxu0 0
      %5645 = vmatprep.subr.bf16.mxu0 0
      %5646 = vmatpush2.bf16.msra.mxu0 0
      %5647 = vmatprep.subr.bf16.mxu0 0
      %5648 = vmatpush2.bf16.msra.mxu0 0
      %5649 = vmatprep.subr.bf16.mxu0 0
      %5650 = vmatpush2.bf16.msra.mxu0 0
      %5651 = vmatprep.subr.bf16.mxu0 0
      %5652 = vmatpush2.bf16.msra.mxu0 0
      %5653 = vmatprep.subr.bf16.mxu0 0
      %5654 = vmatpush2.bf16.msra.mxu0 0
      %5655 = vmatprep.subr.bf16.mxu0 0
      %5656 = vmatpush2.bf16.msra.mxu0 0
      %5657 = vmatprep.mubr.bf16.mxu0 0
      %5658 = vmatmul.mubr.bf16.gmra.mxu0 %v4460
      %v5659 = vpop.f32.mrf.mxu0
      %v5660 = vadd.f32 %v5607, %v5659
      %v5661 = vpop.f32.mrf.mxu0
      %v5662 = vadd.f32 %v5609, %v5661
      %v5663 = vpop.f32.mrf.mxu0
      %v5664 = vadd.f32 %v5611, %v5663
      %v5665 = vpop.f32.mrf.mxu0
      %v5666 = vadd.f32 %v5613, %v5665
      %5667 = vmatprep.mubr.bf16.mxu0 0
      %5668 = vmatmul.mubr.bf16.gmra.mxu0 %v4463
      %v5669 = vpop.f32.mrf.mxu0
      %v5670 = vadd.f32 %v5617, %v5669
      %v5671 = vpop.f32.mrf.mxu0
      %v5672 = vadd.f32 %v5619, %v5671
      %v5673 = vpop.f32.mrf.mxu0
      %v5674 = vadd.f32 %v5621, %v5673
      %v5675 = vpop.f32.mrf.mxu0
      %v5676 = vadd.f32 %v5623, %v5675
      %5677 = vdwg.mxu0
      %vm5678 = vcmp.ge.f32.partialorder %v5448, 0.0
      %vm5679 = vcmp.ge.f32.partialorder %v5450, 0.0
      %vm5680 = vcmp.ge.f32.partialorder %v5554, 0.0
      %vm5681 = vcmp.ge.f32.partialorder %v5556, 0.0
      %vm5682 = vcmp.ge.f32.partialorder %v5660, 0.0
      %vm5683 = vcmp.ge.f32.partialorder %v5662, 0.0
      %vm5684 = vcmp.ge.f32.partialorder %v5452, 0.0
      %vm5685 = vcmp.ge.f32.partialorder %v5454, 0.0
      %vm5686 = vcmp.ge.f32.partialorder %v5558, 0.0
      %vm5687 = vcmp.ge.f32.partialorder %v5560, 0.0
      %vm5688 = vcmp.ge.f32.partialorder %v5664, 0.0
      %vm5689 = vcmp.ge.f32.partialorder %v5666, 0.0
      %vm5690 = vcmp.ge.f32.partialorder %v5458, 0.0
      %vm5691 = vcmp.ge.f32.partialorder %v5460, 0.0
      %vm5692 = vcmp.ge.f32.partialorder %v5564, 0.0
      %vm5693 = vcmp.ge.f32.partialorder %v5566, 0.0
      %vm5694 = vcmp.ge.f32.partialorder %v5670, 0.0
      %vm5695 = vcmp.ge.f32.partialorder %v5672, 0.0
      %vm5696 = vcmp.ge.f32.partialorder %v5462, 0.0
      %vm5697 = vcmp.ge.f32.partialorder %v5464, 0.0
      %vm5698 = vcmp.ge.f32.partialorder %v5568, 0.0
      %vm5699 = vcmp.ge.f32.partialorder %v5570, 0.0
      %vm5700 = vcmp.ge.f32.partialorder %v5674, 0.0
      %vm5701 = vcmp.ge.f32.partialorder %v5676, 0.0
      %vm5702 = vmpackc.low %vm5684, %vm5678
      %vm5703 = vmpackc.low %vm5696, %vm5690
      %vm5704 = vmpackc.even %vm5703, %vm5702
      %vm5705 = vmpackc.low %vm5685, %vm5679
      %vm5706 = vmpackc.low %vm5697, %vm5691
      %vm5707 = vmpackc.even %vm5706, %vm5705
      %vm5708 = vmpackc.low %vm5686, %vm5680
      %vm5709 = vmpackc.low %vm5698, %vm5692
      %vm5710 = vmpackc.even %vm5709, %vm5708
      %vm5711 = vmpackc.low %vm5687, %vm5681
      %vm5712 = vmpackc.low %vm5699, %vm5693
      %vm5713 = vmpackc.even %vm5712, %vm5711
      %vm5714 = vmpackc.low %vm5688, %vm5682
      %vm5715 = vmpackc.low %vm5700, %vm5694
      %vm5716 = vmpackc.even %vm5715, %vm5714
      %vm5717 = vmpackc.low %vm5689, %vm5683
      %vm5718 = vmpackc.low %vm5701, %vm5695
      %vm5719 = vmpackc.even %vm5718, %vm5717
      %v5720 = vsel %vm5704, 16843009, 0
      %v5721 = vsel %vm5707, 16843009, 0
      %v5722 = vsel %vm5710, 16843009, 0
      %v5723 = vsel %vm5713, 16843009, 0
      %v5724 = vsel %vm5716, 16843009, 0
      %v5725 = vsel %vm5719, 16843009, 0
      %v5726 = vunpack.c.0.s8 %v5720
      %v5727 = vunpack.c.0.s8 %v5721
      %v5728 = vunpack.c.0.s8 %v5722
      %v5729 = vunpack.c.0.s8 %v5723
      %v5730 = vunpack.c.0.s8 %v5724
      %v5731 = vunpack.c.0.s8 %v5725
      %v5732 = vunpack.c.1.s8 %v5720
      %v5733 = vunpack.c.1.s8 %v5721
      %v5734 = vunpack.c.1.s8 %v5722
      %v5735 = vunpack.c.1.s8 %v5723
      %v5736 = vunpack.c.1.s8 %v5724
      %v5737 = vunpack.c.1.s8 %v5725
      %v5738 = vunpack.c.2.s8 %v5720
      %v5739 = vunpack.c.2.s8 %v5721
      %v5740 = vunpack.c.2.s8 %v5722
      %v5741 = vunpack.c.2.s8 %v5723
      %v5742 = vunpack.c.2.s8 %v5724
      %v5743 = vunpack.c.2.s8 %v5725
      %v5744 = vunpack.c.3.s8 %v5720
      %v5745 = vunpack.c.3.s8 %v5721
      %v5746 = vunpack.c.3.s8 %v5722
      %v5747 = vunpack.c.3.s8 %v5723
      %v5748 = vunpack.c.3.s8 %v5724
      %v5749 = vunpack.c.3.s8 %v5725
      %v5750 = vpack.c.b16 %v5727, %v5726
      %v5751 = vpack.c.b16 %v5729, %v5728
      %v5752 = vpack.c.b8 %v5751, %v5750
      %v5753 = vpack.c.b16 %v5731, %v5730
      %v5754 = vpack.c.b8 %v5753, %v5753
      %v5755 = vpack.c.b16 %v5733, %v5732
      %v5756 = vpack.c.b16 %v5735, %v5734
      %v5757 = vpack.c.b8 %v5756, %v5755
      %v5758 = vpack.c.b16 %v5737, %v5736
      %v5759 = vpack.c.b8 %v5758, %v5758
      %v5760 = vpack.c.b16 %v5739, %v5738
      %v5761 = vpack.c.b16 %v5741, %v5740
      %v5762 = vpack.c.b8 %v5761, %v5760
      %v5763 = vpack.c.b16 %v5743, %v5742
      %v5764 = vpack.c.b8 %v5763, %v5763
      %v5765 = vpack.c.b16 %v5745, %v5744
      %v5766 = vpack.c.b16 %v5747, %v5746
      %v5767 = vpack.c.b8 %v5766, %v5765
      %v5768 = vpack.c.b16 %v5749, %v5748
      %v5769 = vpack.c.b8 %v5768, %v5768
      %5770 = vst [vmem:[%s849 + $0x28] sm:$0xff] %v5752
      %5771 = vst [vmem:[%s849 + $0x30] sm:$0xf] %v5754
      %5772 = vst [vmem:[%s849 + $0x5c] sm:$0xff] %v5757
      %5773 = vst [vmem:[%s849 + $0x64] sm:$0xf] %v5759
      %5774 = vst [vmem:[%s849 + $0x90] sm:$0xff] %v5762
      %5775 = vst [vmem:[%s849 + $0x98] sm:$0xf] %v5764
      %5776 = vst [vmem:[%s849 + $0xc4] sm:$0xff] %v5767
      %5777 = vst [vmem:[%s849 + $0xcc] sm:$0xf] %v5769
      %v5778 = vsel %vm5678, %v5448, 0.0
      %v5779 = vsel %vm5679, %v5450, 0.0
      %v5780 = vsel %vm5680, %v5554, 0.0
      %v5781 = vsel %vm5681, %v5556, 0.0
      %v5782 = vsel %vm5682, %v5660, 0.0
      %v5783 = vsel %vm5683, %v5662, 0.0
      %v5784 = vsel %vm5684, %v5452, 0.0
      %v5785 = vsel %vm5685, %v5454, 0.0
      %v5786 = vsel %vm5686, %v5558, 0.0
      %v5787 = vsel %vm5687, %v5560, 0.0
      %v5788 = vsel %vm5688, %v5664, 0.0
      %v5789 = vsel %vm5689, %v5666, 0.0
      %v5790 = vsel %vm5690, %v5458, 0.0
      %v5791 = vsel %vm5691, %v5460, 0.0
      %v5792 = vsel %vm5692, %v5564, 0.0
      %v5793 = vsel %vm5693, %v5566, 0.0
      %v5794 = vsel %vm5694, %v5670, 0.0
      %v5795 = vsel %vm5695, %v5672, 0.0
      %v5796 = vsel %vm5696, %v5462, 0.0
      %v5797 = vsel %vm5697, %v5464, 0.0
      %v5798 = vsel %vm5698, %v5568, 0.0
      %v5799 = vsel %vm5699, %v5570, 0.0
      %v5800 = vsel %vm5700, %v5674, 0.0
      %v5801 = vsel %vm5701, %v5676, 0.0
      %v5802 = vpack.c.bf16 %v5784, %v5778
      %v5803 = vpack.c.bf16 %v5785, %v5779
      %v5804 = vpack.c.bf16 %v5786, %v5780
      %v5805 = vpack.c.bf16 %v5787, %v5781
      %v5806 = vpack.c.bf16 %v5788, %v5782
      %v5807 = vpack.c.bf16 %v5789, %v5783
      %v5808 = vpack.c.bf16 %v5796, %v5790
      %v5809 = vpack.c.bf16 %v5797, %v5791
      %v5810 = vpack.c.bf16 %v5798, %v5792
      %v5811 = vpack.c.bf16 %v5799, %v5793
      %v5812 = vpack.c.bf16 %v5800, %v5794
      %v5813 = vpack.c.bf16 %v5801, %v5795
      %v5814 = vld [vmem:[%s23] sm:$0xf]
      %v5815 = vld [vmem:[%s23 + $0x4] sm:$0xf]
      %v5816 = vld [vmem:[%s23 + $0x8] sm:$0xf]
      %v5817 = vld [vmem:[%s23 + $0xc] sm:$0xf]
      %v5818 = vld [vmem:[%s23 + $0x10] sm:$0xf]
      %v5819 = vld [vmem:[%s23 + $0x14] sm:$0xf]
      %v5820 = vld [vmem:[%s23 + $0x18] sm:$0xf]
      %v5821 = vld [vmem:[%s23 + $0x1c] sm:$0xf]
      %v5822 = vld [vmem:[%s23 + $0x20] sm:$0xf]
      %v5823 = vld [vmem:[%s23 + $0x24] sm:$0xf]
      %v5824 = vld [vmem:[%s23 + $0x28] sm:$0xf]
      %v5825 = vld [vmem:[%s23 + $0x2c] sm:$0xf]
      %v5826 = vld [vmem:[%s23 + $0x30] sm:$0xf]
      %v5827 = vld [vmem:[%s23 + $0x34] sm:$0xf]
      %v5828 = vld [vmem:[%s23 + $0x38] sm:$0xf]
      %v5829 = vld [vmem:[%s23 + $0x3c] sm:$0xf]
      %v5830 = vld [vmem:[%s23 + $0x40] sm:$0xf]
      %v5831 = vld [vmem:[%s23 + $0x44] sm:$0xf]
      %v5832 = vld [vmem:[%s23 + $0x48] sm:$0xf]
      %v5833 = vld [vmem:[%s23 + $0x4c] sm:$0xf]
      %v5834 = vld [vmem:[%s23 + $0x50] sm:$0xf]
      %v5835 = vld [vmem:[%s23 + $0x54] sm:$0xf]
      %v5836 = vld [vmem:[%s23 + $0x58] sm:$0xf]
      %v5837 = vld [vmem:[%s23 + $0x5c] sm:$0xf]
      %v5838 = vld [vmem:[%s23 + $0x60] sm:$0xf]
      %v5839 = vld [vmem:[%s23 + $0x64] sm:$0xf]
      %v5840 = vld [vmem:[%s23 + $0x68] sm:$0xf]
      %v5841 = vld [vmem:[%s23 + $0x6c] sm:$0xf]
      %v5842 = vld [vmem:[%s23 + $0x70] sm:$0xf]
      %v5843 = vld [vmem:[%s23 + $0x74] sm:$0xf]
      %v5844 = vld [vmem:[%s23 + $0x78] sm:$0xf]
      %v5845 = vld [vmem:[%s23 + $0x7c] sm:$0xf]
      %v5846 = vld [vmem:[%s23 + $0x80] sm:$0xf]
      %v5847 = vld [vmem:[%s23 + $0x84] sm:$0xf]
      %v5848 = vld [vmem:[%s23 + $0x88] sm:$0xf]
      %v5849 = vld [vmem:[%s23 + $0x8c] sm:$0xf]
      %v5850 = vld [vmem:[%s23 + $0x90] sm:$0xf]
      %v5851 = vld [vmem:[%s23 + $0x94] sm:$0xf]
      %v5852 = vld [vmem:[%s23 + $0x98] sm:$0xf]
      %v5853 = vld [vmem:[%s23 + $0x9c] sm:$0xf]
      %v5854 = vld [vmem:[%s23 + $0xa0] sm:$0xf]
      %v5855 = vld [vmem:[%s23 + $0xa4] sm:$0xf]
      %v5856 = vld [vmem:[%s23 + $0xa8] sm:$0xf]
      %v5857 = vld [vmem:[%s23 + $0xac] sm:$0xf]
      %v5858 = vld [vmem:[%s23 + $0xb0] sm:$0xf]
      %v5859 = vld [vmem:[%s23 + $0xb4] sm:$0xf]
      %v5860 = vld [vmem:[%s23 + $0xb8] sm:$0xf]
      %v5861 = vld [vmem:[%s23 + $0xbc] sm:$0xf]
      %v5862 = vld [vmem:[%s23 + $0xc0] sm:$0xf]
      %v5863 = vld [vmem:[%s23 + $0xc4] sm:$0xf]
      %v5864 = vld [vmem:[%s23 + $0xc8] sm:$0xf]
      %v5865 = vld [vmem:[%s23 + $0xcc] sm:$0xf]
      %v5866 = vld [vmem:[%s23 + $0xd0] sm:$0xf]
      %v5867 = vld [vmem:[%s23 + $0xd4] sm:$0xf]
      %v5868 = vld [vmem:[%s23 + $0xd8] sm:$0xf]
      %v5869 = vld [vmem:[%s23 + $0xdc] sm:$0xf]
      %v5870 = vld [vmem:[%s23 + $0xe0] sm:$0xf]
      %v5871 = vld [vmem:[%s23 + $0xe4] sm:$0xf]
      %v5872 = vld [vmem:[%s23 + $0xe8] sm:$0xf]
      %v5873 = vld [vmem:[%s23 + $0xec] sm:$0xf]
      %v5874 = vld [vmem:[%s23 + $0xf0] sm:$0xf]
      %v5875 = vld [vmem:[%s23 + $0xf4] sm:$0xf]
      %v5876 = vld [vmem:[%s23 + $0xf8] sm:$0xf]
      %v5877 = vld [vmem:[%s23 + $0xfc] sm:$0xf]
      %v5878 = vld [vmem:[%s23 + $0x100] sm:$0xf]
      %v5879 = vld [vmem:[%s23 + $0x104] sm:$0xf]
      %v5880 = vld [vmem:[%s23 + $0x108] sm:$0xf]
      %v5881 = vld [vmem:[%s23 + $0x10c] sm:$0xf]
      %v5882 = vld [vmem:[%s23 + $0x110] sm:$0xf]
      %v5883 = vld [vmem:[%s23 + $0x114] sm:$0xf]
      %v5884 = vld [vmem:[%s23 + $0x118] sm:$0xf]
      %v5885 = vld [vmem:[%s23 + $0x11c] sm:$0xf]
      %v5886 = vld [vmem:[%s23 + $0x120] sm:$0xf]
      %v5887 = vld [vmem:[%s23 + $0x124] sm:$0xf]
      %v5888 = vld [vmem:[%s23 + $0x128] sm:$0xf]
      %v5889 = vld [vmem:[%s23 + $0x12c] sm:$0xf]
      %v5890 = vld [vmem:[%s23 + $0x130] sm:$0xf]
      %v5891 = vld [vmem:[%s23 + $0x134] sm:$0xf]
      %v5892 = vld [vmem:[%s23 + $0x138] sm:$0xf]
      %v5893 = vld [vmem:[%s23 + $0x13c] sm:$0xf]
      %v5894 = vld [vmem:[%s23 + $0x140] sm:$0xf]
      %v5895 = vld [vmem:[%s23 + $0x144] sm:$0xf]
      %v5896 = vld [vmem:[%s23 + $0x148] sm:$0xf]
      %v5897 = vld [vmem:[%s23 + $0x14c] sm:$0xf]
      %v5898 = vld [vmem:[%s23 + $0x150] sm:$0xf]
      %v5899 = vld [vmem:[%s23 + $0x154] sm:$0xf]
      %v5900 = vld [vmem:[%s23 + $0x158] sm:$0xf]
      %v5901 = vld [vmem:[%s23 + $0x15c] sm:$0xf]
      %v5902 = vld [vmem:[%s23 + $0x160] sm:$0xf]
      %v5903 = vld [vmem:[%s23 + $0x164] sm:$0xf]
      %v5904 = vld [vmem:[%s23 + $0x168] sm:$0xf]
      %v5905 = vld [vmem:[%s23 + $0x16c] sm:$0xf]
      %v5906 = vld [vmem:[%s23 + $0x170] sm:$0xf]
      %v5907 = vld [vmem:[%s23 + $0x174] sm:$0xf]
      %v5908 = vld [vmem:[%s23 + $0x178] sm:$0xf]
      %v5909 = vld [vmem:[%s23 + $0x17c] sm:$0xf]
      %v5910 = vld [vmem:[%s24] sm:$0x1]
      %v5912 = vlaneseq
      %v5913 = vshrl.u32 %v5912, 7
      %v5914 = vsub.s32 0, %v5913
      %v5915 = vrot.slane %v5910, %v5914
      %v6013 = vunpack.c.l.b16 %v5814
      %v6014 = vunpack.c.l.b16 %v5815
      %v6015 = vunpack.c.l.b16 %v5816
      %v6016 = vunpack.c.l.b16 %v5817
      %v6017 = vunpack.c.l.b16 %v5818
      %v6018 = vunpack.c.l.b16 %v5819
      %v6019 = vunpack.c.l.b16 %v5820
      %v6020 = vunpack.c.l.b16 %v5821
      %v6021 = vunpack.c.l.b16 %v5822
      %v6022 = vunpack.c.l.b16 %v5823
      %v6023 = vunpack.c.l.b16 %v5824
      %v6024 = vunpack.c.l.b16 %v5825
      %v6025 = vunpack.c.l.b16 %v5826
      %v6026 = vunpack.c.l.b16 %v5827
      %v6027 = vunpack.c.l.b16 %v5828
      %v6028 = vunpack.c.l.b16 %v5829
      %v6029 = vunpack.c.l.b16 %v5830
      %v6030 = vunpack.c.l.b16 %v5831
      %v6031 = vunpack.c.l.b16 %v5832
      %v6032 = vunpack.c.l.b16 %v5833
      %v6033 = vunpack.c.l.b16 %v5834
      %v6034 = vunpack.c.l.b16 %v5835
      %v6035 = vunpack.c.l.b16 %v5836
      %v6036 = vunpack.c.l.b16 %v5837
      %v6037 = vunpack.c.l.b16 %v5838
      %v6038 = vunpack.c.l.b16 %v5839
      %v6039 = vunpack.c.l.b16 %v5840
      %v6040 = vunpack.c.l.b16 %v5841
      %v6041 = vunpack.c.l.b16 %v5842
      %v6042 = vunpack.c.l.b16 %v5843
      %v6043 = vunpack.c.l.b16 %v5844
      %v6044 = vunpack.c.l.b16 %v5845
      %v6045 = vunpack.c.l.b16 %v5846
      %v6046 = vunpack.c.l.b16 %v5847
      %v6047 = vunpack.c.l.b16 %v5848
      %v6048 = vunpack.c.l.b16 %v5849
      %v6049 = vunpack.c.l.b16 %v5850
      %v6050 = vunpack.c.l.b16 %v5851
      %v6051 = vunpack.c.l.b16 %v5852
      %v6052 = vunpack.c.l.b16 %v5853
      %v6053 = vunpack.c.l.b16 %v5854
      %v6054 = vunpack.c.l.b16 %v5855
      %v6055 = vunpack.c.l.b16 %v5856
      %v6056 = vunpack.c.l.b16 %v5857
      %v6057 = vunpack.c.l.b16 %v5858
      %v6058 = vunpack.c.l.b16 %v5859
      %v6059 = vunpack.c.l.b16 %v5860
      %v6060 = vunpack.c.l.b16 %v5861
      %v6061 = vunpack.c.l.b16 %v5862
      %v6062 = vunpack.c.l.b16 %v5863
      %v6063 = vunpack.c.l.b16 %v5864
      %v6064 = vunpack.c.l.b16 %v5865
      %v6065 = vunpack.c.l.b16 %v5866
      %v6066 = vunpack.c.l.b16 %v5867
      %v6067 = vunpack.c.l.b16 %v5868
      %v6068 = vunpack.c.l.b16 %v5869
      %v6069 = vunpack.c.l.b16 %v5870
      %v6070 = vunpack.c.l.b16 %v5871
      %v6071 = vunpack.c.l.b16 %v5872
      %v6072 = vunpack.c.l.b16 %v5873
      %v6073 = vunpack.c.l.b16 %v5874
      %v6074 = vunpack.c.l.b16 %v5875
      %v6075 = vunpack.c.l.b16 %v5876
      %v6076 = vunpack.c.l.b16 %v5877
      %v6077 = vunpack.c.l.b16 %v5878
      %v6078 = vunpack.c.l.b16 %v5879
      %v6079 = vunpack.c.l.b16 %v5880
      %v6080 = vunpack.c.l.b16 %v5881
      %v6081 = vunpack.c.l.b16 %v5882
      %v6082 = vunpack.c.l.b16 %v5883
      %v6083 = vunpack.c.l.b16 %v5884
      %v6084 = vunpack.c.l.b16 %v5885
      %v6085 = vunpack.c.l.b16 %v5886
      %v6086 = vunpack.c.l.b16 %v5887
      %v6087 = vunpack.c.l.b16 %v5888
      %v6088 = vunpack.c.l.b16 %v5889
      %v6089 = vunpack.c.l.b16 %v5890
      %v6090 = vunpack.c.l.b16 %v5891
      %v6091 = vunpack.c.l.b16 %v5892
      %v6092 = vunpack.c.l.b16 %v5893
      %v6093 = vunpack.c.l.b16 %v5894
      %v6094 = vunpack.c.l.b16 %v5895
      %v6095 = vunpack.c.l.b16 %v5896
      %v6096 = vunpack.c.l.b16 %v5897
      %v6097 = vunpack.c.l.b16 %v5898
      %v6098 = vunpack.c.l.b16 %v5899
      %v6099 = vunpack.c.l.b16 %v5900
      %v6100 = vunpack.c.l.b16 %v5901
      %v6101 = vunpack.c.l.b16 %v5902
      %v6102 = vunpack.c.l.b16 %v5903
      %v6103 = vunpack.c.l.b16 %v5904
      %v6104 = vunpack.c.l.b16 %v5905
      %v6105 = vunpack.c.l.b16 %v5906
      %v6106 = vunpack.c.l.b16 %v5907
      %v6107 = vunpack.c.l.b16 %v5908
      %v6108 = vunpack.c.l.b16 %v5909
      %v6109 = vpack.c.b16 %v6014, %v6013
      %v6110 = vpack.c.b16 %v6016, %v6015
      %v6111 = vpack.c.b16 %v6018, %v6017
      %v6112 = vpack.c.b16 %v6020, %v6019
      %v6113 = vpack.c.b16 %v6022, %v6021
      %v6114 = vpack.c.b16 %v6024, %v6023
      %v6115 = vpack.c.b16 %v6026, %v6025
      %v6116 = vpack.c.b16 %v6028, %v6027
      %v6117 = vpack.c.b16 %v6030, %v6029
      %v6118 = vpack.c.b16 %v6032, %v6031
      %v6119 = vpack.c.b16 %v6034, %v6033
      %v6120 = vpack.c.b16 %v6036, %v6035
      %v6121 = vpack.c.b16 %v6038, %v6037
      %v6122 = vpack.c.b16 %v6040, %v6039
      %v6123 = vpack.c.b16 %v6042, %v6041
      %v6124 = vpack.c.b16 %v6044, %v6043
      %v6125 = vpack.c.b16 %v6046, %v6045
      %v6126 = vpack.c.b16 %v6048, %v6047
      %v6127 = vpack.c.b16 %v6050, %v6049
      %v6128 = vpack.c.b16 %v6052, %v6051
      %v6129 = vpack.c.b16 %v6054, %v6053
      %v6130 = vpack.c.b16 %v6056, %v6055
      %v6131 = vpack.c.b16 %v6058, %v6057
      %v6132 = vpack.c.b16 %v6060, %v6059
      %v6133 = vpack.c.b16 %v6062, %v6061
      %v6134 = vpack.c.b16 %v6064, %v6063
      %v6135 = vpack.c.b16 %v6066, %v6065
      %v6136 = vpack.c.b16 %v6068, %v6067
      %v6137 = vpack.c.b16 %v6070, %v6069
      %v6138 = vpack.c.b16 %v6072, %v6071
      %v6139 = vpack.c.b16 %v6074, %v6073
      %v6140 = vpack.c.b16 %v6076, %v6075
      %v6141 = vpack.c.b16 %v6078, %v6077
      %v6142 = vpack.c.b16 %v6080, %v6079
      %v6143 = vpack.c.b16 %v6082, %v6081
      %v6144 = vpack.c.b16 %v6084, %v6083
      %v6145 = vpack.c.b16 %v6086, %v6085
      %v6146 = vpack.c.b16 %v6088, %v6087
      %v6147 = vpack.c.b16 %v6090, %v6089
      %v6148 = vpack.c.b16 %v6092, %v6091
      %v6149 = vpack.c.b16 %v6094, %v6093
      %v6150 = vpack.c.b16 %v6096, %v6095
      %v6151 = vpack.c.b16 %v6098, %v6097
      %v6152 = vpack.c.b16 %v6100, %v6099
      %v6153 = vpack.c.b16 %v6102, %v6101
      %v6154 = vpack.c.b16 %v6104, %v6103
      %v6155 = vpack.c.b16 %v6106, %v6105
      %v6156 = vpack.c.b16 %v6108, %v6107
      %6205 = vmatprep.subr.bf16.mxu0 0
      %6206 = vmatpush1.bf16.msra.mxu0 %v6116
      %6207 = vmatprep.subr.bf16.mxu0 0
      %6208 = vmatpush1.bf16.msra.mxu0 %v6115
      %6209 = vmatprep.subr.bf16.mxu0 0
      %6210 = vmatpush1.bf16.msra.mxu0 %v6114
      %6211 = vmatprep.subr.bf16.mxu0 0
      %6212 = vmatpush1.bf16.msra.mxu0 %v6113
      %6213 = vmatprep.subr.bf16.mxu0 0
      %6214 = vmatpush1.bf16.msra.mxu0 %v6112
      %6215 = vmatprep.subr.bf16.mxu0 0
      %6216 = vmatpush1.bf16.msra.mxu0 %v6111
      %6217 = vmatprep.subr.bf16.mxu0 0
      %6218 = vmatpush1.bf16.msra.mxu0 %v6110
      %6219 = vmatprep.subr.bf16.mxu0 0
      %6220 = vmatpush1.bf16.msra.mxu0 %v6109
      %6221 = vmatprep.subr.bf16.mxu0 0
      %6222 = vmatpush2.bf16.msra.mxu0 %v6124
      %6223 = vmatprep.subr.bf16.mxu0 0
      %6224 = vmatpush2.bf16.msra.mxu0 %v6123
      %6225 = vmatprep.subr.bf16.mxu0 0
      %6226 = vmatpush2.bf16.msra.mxu0 %v6122
      %6227 = vmatprep.subr.bf16.mxu0 0
      %6228 = vmatpush2.bf16.msra.mxu0 %v6121
      %6229 = vmatprep.subr.bf16.mxu0 0
      %6230 = vmatpush2.bf16.msra.mxu0 %v6120
      %6231 = vmatprep.subr.bf16.mxu0 0
      %6232 = vmatpush2.bf16.msra.mxu0 %v6119
      %6233 = vmatprep.subr.bf16.mxu0 0
      %6234 = vmatpush2.bf16.msra.mxu0 %v6118
      %6235 = vmatprep.subr.bf16.mxu0 0
      %6236 = vmatpush2.bf16.msra.mxu0 %v6117
      %6237 = vmatprep.mubr.bf16.mxu0 %v5803
      %6238 = vmatmul.mubr.bf16.gmra.mxu0 %v5802
      %v6239 = vpop.f32.mrf.mxu0
      %v6240 = vadd.f32 %v5915, %v6239
      %v6241 = vpop.f32.mrf.mxu0
      %v6242 = vpop.f32.mrf.mxu0
      %v6243 = vadd.f32 %v5915, %v6242
      %v6244 = vpop.f32.mrf.mxu0
      %6245 = vmatprep.mubr.bf16.mxu0 %v5809
      %6246 = vmatmul.mubr.bf16.gmra.mxu0 %v5808
      %v6247 = vpop.f32.mrf.mxu0
      %v6248 = vadd.f32 %v5915, %v6247
      %v6249 = vpop.f32.mrf.mxu0
      %v6250 = vpop.f32.mrf.mxu0
      %v6251 = vadd.f32 %v5915, %v6250
      %v6252 = vpop.f32.mrf.mxu0
      %6253 = vdwg.mxu0
      %6254 = vmatprep.subr.bf16.mxu0 0
      %6255 = vmatpush1.bf16.msra.mxu0 %v6132
      %6256 = vmatprep.subr.bf16.mxu0 0
      %6257 = vmatpush1.bf16.msra.mxu0 %v6131
      %6258 = vmatprep.subr.bf16.mxu0 0
      %6259 = vmatpush1.bf16.msra.mxu0 %v6130
      %6260 = vmatprep.subr.bf16.mxu0 0
      %6261 = vmatpush1.bf16.msra.mxu0 %v6129
      %6262 = vmatprep.subr.bf16.mxu0 0
      %6263 = vmatpush1.bf16.msra.mxu0 %v6128
      %6264 = vmatprep.subr.bf16.mxu0 0
      %6265 = vmatpush1.bf16.msra.mxu0 %v6127
      %6266 = vmatprep.subr.bf16.mxu0 0
      %6267 = vmatpush1.bf16.msra.mxu0 %v6126
      %6268 = vmatprep.subr.bf16.mxu0 0
      %6269 = vmatpush1.bf16.msra.mxu0 %v6125
      %6270 = vmatprep.subr.bf16.mxu0 0
      %6271 = vmatpush2.bf16.msra.mxu0 %v6140
      %6272 = vmatprep.subr.bf16.mxu0 0
      %6273 = vmatpush2.bf16.msra.mxu0 %v6139
      %6274 = vmatprep.subr.bf16.mxu0 0
      %6275 = vmatpush2.bf16.msra.mxu0 %v6138
      %6276 = vmatprep.subr.bf16.mxu0 0
      %6277 = vmatpush2.bf16.msra.mxu0 %v6137
      %6278 = vmatprep.subr.bf16.mxu0 0
      %6279 = vmatpush2.bf16.msra.mxu0 %v6136
      %6280 = vmatprep.subr.bf16.mxu0 0
      %6281 = vmatpush2.bf16.msra.mxu0 %v6135
      %6282 = vmatprep.subr.bf16.mxu0 0
      %6283 = vmatpush2.bf16.msra.mxu0 %v6134
      %6284 = vmatprep.subr.bf16.mxu0 0
      %6285 = vmatpush2.bf16.msra.mxu0 %v6133
      %6286 = vmatprep.mubr.bf16.mxu0 %v5805
      %6287 = vmatmul.mubr.bf16.gmra.mxu0 %v5804
      %v6288 = vpop.f32.mrf.mxu0
      %v6289 = vadd.f32 %v6240, %v6288
      %v6290 = vpop.f32.mrf.mxu0
      %v6291 = vpop.f32.mrf.mxu0
      %v6292 = vadd.f32 %v6243, %v6291
      %v6293 = vpop.f32.mrf.mxu0
      %6294 = vmatprep.mubr.bf16.mxu0 %v5811
      %6295 = vmatmul.mubr.bf16.gmra.mxu0 %v5810
      %v6296 = vpop.f32.mrf.mxu0
      %v6297 = vadd.f32 %v6248, %v6296
      %v6298 = vpop.f32.mrf.mxu0
      %v6299 = vpop.f32.mrf.mxu0
      %v6300 = vadd.f32 %v6251, %v6299
      %v6301 = vpop.f32.mrf.mxu0
      %6302 = vdwg.mxu0
      %6303 = vmatprep.subr.bf16.mxu0 0
      %6304 = vmatpush1.bf16.msra.mxu0 %v6148
      %6305 = vmatprep.subr.bf16.mxu0 0
      %6306 = vmatpush1.bf16.msra.mxu0 %v6147
      %6307 = vmatprep.subr.bf16.mxu0 0
      %6308 = vmatpush1.bf16.msra.mxu0 %v6146
      %6309 = vmatprep.subr.bf16.mxu0 0
      %6310 = vmatpush1.bf16.msra.mxu0 %v6145
      %6311 = vmatprep.subr.bf16.mxu0 0
      %6312 = vmatpush1.bf16.msra.mxu0 %v6144
      %6313 = vmatprep.subr.bf16.mxu0 0
      %6314 = vmatpush1.bf16.msra.mxu0 %v6143
      %6315 = vmatprep.subr.bf16.mxu0 0
      %6316 = vmatpush1.bf16.msra.mxu0 %v6142
      %6317 = vmatprep.subr.bf16.mxu0 0
      %6318 = vmatpush1.bf16.msra.mxu0 %v6141
      %6319 = vmatprep.subr.bf16.mxu0 0
      %6320 = vmatpush2.bf16.msra.mxu0 %v6156
      %6321 = vmatprep.subr.bf16.mxu0 0
      %6322 = vmatpush2.bf16.msra.mxu0 %v6155
      %6323 = vmatprep.subr.bf16.mxu0 0
      %6324 = vmatpush2.bf16.msra.mxu0 %v6154
      %6325 = vmatprep.subr.bf16.mxu0 0
      %6326 = vmatpush2.bf16.msra.mxu0 %v6153
      %6327 = vmatprep.subr.bf16.mxu0 0
      %6328 = vmatpush2.bf16.msra.mxu0 %v6152
      %6329 = vmatprep.subr.bf16.mxu0 0
      %6330 = vmatpush2.bf16.msra.mxu0 %v6151
      %6331 = vmatprep.subr.bf16.mxu0 0
      %6332 = vmatpush2.bf16.msra.mxu0 %v6150
      %6333 = vmatprep.subr.bf16.mxu0 0
      %6334 = vmatpush2.bf16.msra.mxu0 %v6149
      %6335 = vmatprep.mubr.bf16.mxu0 %v5807
      %6336 = vmatmul.mubr.bf16.gmra.mxu0 %v5806
      %v6337 = vpop.f32.mrf.mxu0
      %v6338 = vadd.f32 %v6289, %v6337
      %v6339 = vpop.f32.mrf.mxu0
      %v6340 = vpop.f32.mrf.mxu0
      %v6341 = vadd.f32 %v6292, %v6340
      %v6342 = vpop.f32.mrf.mxu0
      %6343 = vmatprep.mubr.bf16.mxu0 %v5813
      %6344 = vmatmul.mubr.bf16.gmra.mxu0 %v5812
      %v6345 = vpop.f32.mrf.mxu0
      %v6346 = vadd.f32 %v6297, %v6345
      %v6347 = vpop.f32.mrf.mxu0
      %v6348 = vpop.f32.mrf.mxu0
      %v6349 = vadd.f32 %v6300, %v6348
      %v6350 = vpop.f32.mrf.mxu0
      %6351 = vdwg.mxu0
      %vm6352 = vcmask 23552
      %6353 = vst.msk [vmem:[%s836] sm:$0xff] %vm6352, %v6338
      %6354 = vst.msk [vmem:[%s836 + $0x8] sm:$0xff] %vm6352, %v6341
      %6355 = vst.msk [vmem:[%s836 + $0x10] sm:$0xff] %vm6352, %v6346
      %6356 = vst.msk [vmem:[%s836 + $0x18] sm:$0xff] %vm6352, %v6349
      %s6357 = smul.u32 4, %s39
      %p6358 = scmp.lt.s32.totalorder %s6357, 7
      %s6359 = scalar_select %p6358, %s6357, 7
      %s6360 = smul.addr %s6359, 8
      %s6361 = scalar_lea.vmem %s25, %s6360
      %s6362 = smul.u32 4, %s39
      %p6363 = scmp.lt.s32.totalorder %s6362, 7
      %s6364 = scalar_select %p6363, %s6362, 7
      %s6365 = smul.addr %s6364, 8
      %s6366 = scalar_lea.vmem %s26, %s6365
      %s6367 = smul.u32 4, %s39
      %p6368 = scmp.lt.s32.totalorder %s6367, 7
      %s6369 = scalar_select %p6368, %s6367, 7
      %s6370 = smul.addr %s6369, 26
      %s6371 = smul.addr %s6370, 2
      %s6372 = scalar_lea.vmem %s27, %s6371
      // Predicated region
      $region121: #{autoencoder_forward.1} parent=119 // pred_check
        %p6373 = pneg %p587
      $region122: #{autoencoder_forward.1} parent=119 // pred_check_branch
        %6375 = sbr.rel (%p6373) target = $region124
      $region123: #{autoencoder_forward.1} parent=119 // pred_region
        %s6376 = smul.u32 4, %s39
      $region124: #{autoencoder_forward.1} parent=119 // pred_fallthru
        _
      // Predicated region
      $region125: #{autoencoder_forward.1} parent=119 // pred_check
        %p6377 = pneg %p613
      $region126: #{autoencoder_forward.1} parent=119 // pred_check_branch
        %6379 = sbr.rel (%p6377) target = $region128
      $region127: #{autoencoder_forward.1} parent=119 // pred_region
        %s6380 = smul.u32 4, %s39
      $region128: #{autoencoder_forward.1} parent=119 // pred_fallthru
        _
      // Predicated region
      $region129: #{autoencoder_forward.1} parent=119 // pred_check
        %p6381 = pneg %p639
      $region130: #{autoencoder_forward.1} parent=119 // pred_check_branch
        %6383 = sbr.rel (%p6381) target = $region132
      $region131: #{autoencoder_forward.1} parent=119 // pred_region
        %s6384 = smul.u32 4, %s39
      $region132: #{autoencoder_forward.1} parent=119 // pred_fallthru
        _
    $region120: #{autoencoder_forward.1} parent=5 // pred_fallthru
      _
    %p6385 = scmp.le.s32.totalorder 2, %s34
    // Predicated region
    $region133: #{autoencoder_forward.1} parent=5 // pred_check
      %p6386 = pneg %p6385
    $region134: #{autoencoder_forward.1} parent=5 // pred_check_branch
      %6388 = sbr.rel (%p6386) target = $region136
    $region135: #{autoencoder_forward.1} parent=5 // pred_region
      %s6389 = ssub.s32 %s34, 2
      // Predicated region
      $region137: #{autoencoder_forward.1} parent=135 // pred_check
        %p6390 = pneg %p593
      $region138: #{autoencoder_forward.1} parent=135 // pred_check_branch
        %6392 = sbr.rel (%p6390) target = $region140
      $region139: #{autoencoder_forward.1} parent=135 // pred_region
        %s6393 = smul.u32 4, %s40
        %p6394 = scmp.lt.s32.totalorder %s6393, 7
        %s6395 = scalar_select %p6394, %s6393, 7
        %s6396 = smul.addr %s6395, 8
        %s6397 = scalar_lea.vmem %s25, %s6396
      $region140: #{autoencoder_forward.1} parent=135 // pred_fallthru
        _
      // Predicated region
      $region141: #{autoencoder_forward.1} parent=135 // pred_check
        %p6398 = pneg %p619
      $region142: #{autoencoder_forward.1} parent=135 // pred_check_branch
        %6400 = sbr.rel (%p6398) target = $region144
      $region143: #{autoencoder_forward.1} parent=135 // pred_region
        %s6401 = smul.u32 4, %s40
        %p6402 = scmp.lt.s32.totalorder %s6401, 7
        %s6403 = scalar_select %p6402, %s6401, 7
        %s6404 = smul.addr %s6403, 8
        %s6405 = scalar_lea.vmem %s26, %s6404
      $region144: #{autoencoder_forward.1} parent=135 // pred_fallthru
        _
      // Predicated region
      $region145: #{autoencoder_forward.1} parent=135 // pred_check
        %p6406 = pneg %p645
      $region146: #{autoencoder_forward.1} parent=135 // pred_check_branch
        %6408 = sbr.rel (%p6406) target = $region148
      $region147: #{autoencoder_forward.1} parent=135 // pred_region
        %s6409 = smul.u32 4, %s40
        %p6410 = scmp.lt.s32.totalorder %s6409, 7
        %s6411 = scalar_select %p6410, %s6409, 7
        %s6412 = smul.addr %s6411, 26
        %s6413 = smul.addr %s6412, 2
        %s6414 = scalar_lea.vmem %s27, %s6413
      $region148: #{autoencoder_forward.1} parent=135 // pred_fallthru
        _
    $region136: #{autoencoder_forward.1} parent=5 // pred_fallthru
      _
  $region6: #{autoencoder_forward.1} parent=0 // loop_footer
    %s38 = sadd.s32 1, %s34
  $region7: #{autoencoder_forward.1} parent=0 // loop_footer_branch
    %33 = sbr.rel target = $region3
  $region8: #{autoencoder_forward.1} parent=0 // loop_exit
    _

</llo_original>
